<compile_context>
chip_gen: v7x
topology: tpu7x:2x2x1
jax: 0.10.0
libtpu: 0.0.40
codegen_flags: <defaults>
</compile_context>

<pallas_src>
import functools

import jax
import jax.numpy as jnp
from jax.experimental import pallas as pl
from jax.experimental.pallas import tpu as pltpu

_VMEM_INPUT_BUDGET = 24 * 1024 * 1024   # rough per-tile working-set budget
_VMEM_LIMIT_BYTES = 48 * 1024 * 1024    # scoped VMEM limit (ok on v5e/v6e/v7x)


def _round_up(x, m):
    return ((x + m - 1) // m) * m


def _make_kernel(n_rows, tn, d, use_mxu):
    """Build the per-tile kernel. `n_rows` is the true batch size (static)."""

    def kernel(y_ref, y1_ref, y2_ref, x_ref, loss_ref):
        # Upcast to f32 in-kernel (no wrapper-side cast / extra HBM copy).
        x = x_ref[...].astype(jnp.float32)
        y = y_ref[...].astype(jnp.float32)
        y1 = y1_ref[...].astype(jnp.float32)
        y2 = y2_ref[...].astype(jnp.float32)

        if use_mxu:
            # Route the 7 row reductions through the idle MXU: contract each
            # product against a one-hot (d, 8) column so the sums land
            # lane-packed in a single (tn, 8) tensor:
            #   lane 0: x.y   1: x.y1   2: x.y2   3: x.x
            #   lane 4: y.y   5: y1.y1  6: y2.y2  7: unused
            col = jax.lax.broadcasted_iota(jnp.int32, (d, 8), 1)

            def rdot(u, v, k):
                sel = (col == k).astype(jnp.float32)
                return jax.lax.dot_general(
                    u * v, sel, (((1,), (0,)), ((), ())),
                    preferred_element_type=jnp.float32,
                    precision=jax.lax.Precision.HIGHEST)

            sums = (rdot(x, y, 0) + rdot(x, y1, 1) + rdot(x, y2, 2)
                    + rdot(x, x, 3) + rdot(y, y, 4) + rdot(y1, y1, 5)
                    + rdot(y2, y2, 6))
            nums = sums[:, 0:3]          # x.y, x.y1, x.y2
            xx = sums[:, 3:4]            # ||x||^2
            sq = sums[:, 4:7]            # ||y||^2, ||y1||^2, ||y2||^2
        else:
            # Fallback: XLU lane reductions (always supported, f32 exact).
            def rsum(u, v):
                return jnp.sum(u * v, axis=1, keepdims=True)

            nums = jnp.concatenate(
                [rsum(x, y), rsum(x, y1), rsum(x, y2)], axis=1)
            xx = rsum(x, x)
            sq = jnp.concatenate(
                [rsum(y, y), rsum(y1, y1), rsum(y2, y2)], axis=1)

        # Packed epilogue on (tn, 3): one sqrt/exp pass instead of three.
        # torch.cosine_similarity: num / max(||a||_2 * ||b||_2, 1e-8).
        norms = jnp.sqrt(xx) * jnp.sqrt(sq)               # (tn, 3)
        cos = nums / jnp.maximum(norms, 1e-8)             # pos, neg1, neg2
        e = jnp.exp(cos)                                  # (tn, 3)
        denom = e[:, 0:1] + e[:, 1:2] + e[:, 2:3] + 1e-8
        # E_x_y == x.y == nums[:, 0:1];  log(exp(pos)/denom) == pos - log(denom)
        loss = -nums[:, 0:1] * (cos[:, 0:1] - jnp.log(denom))

        # Ragged tail: rows >= n_rows come from an out-of-bounds (garbage)
        # block read -- zero them (their writeback is discarded anyway).
        rows = pl.program_id(0) * tn + jax.lax.broadcasted_iota(
            jnp.int32, (tn, 1), 0)
        loss_ref[...] = jnp.where(rows < n_rows, loss, jnp.zeros_like(loss))

    return kernel


def _tile_rows(n, d, itemsize, block_rows):
    """Row tile sized from D / dtype / VMEM budget; >= 2 tiles when possible."""
    if n <= 8:
        return max(int(n), 1)
    max_tile = (n // 8) * 8                  # never exceed n; multiple of 8
    # per-row VMEM: 4 inputs * (2 pipeline copies + f32 copy + ~2 f32 temps)
    per_row = 4 * d * (2 * itemsize + 12)
    budget_rows = max(8, (_VMEM_INPUT_BUDGET // per_row) // 8 * 8)
    tn = min(block_rows, budget_rows, max_tile)
    tn = max(8, (tn // 8) * 8)
    if pl.cdiv(n, tn) < 2:                   # give both v7x TensorCores a tile
        tn = max(8, _round_up(pl.cdiv(n, 2), 8))
    return int(tn)


@functools.partial(jax.jit, static_argnames=("reduction", "block_rows", "use_mxu"))
def _infonce_impl(adj_y, adj_y1, adj_y2, adj_x, *, reduction, block_rows, use_mxu):
    n, d = adj_x.shape
    itemsize = max(
        jnp.dtype(a.dtype).itemsize for a in (adj_y, adj_y1, adj_y2, adj_x))
    tn = _tile_rows(n, d, itemsize, block_rows)
    num_tiles = int(pl.cdiv(n, tn))

    in_spec = pl.BlockSpec((tn, d), lambda i: (i, 0))
    out_spec = pl.BlockSpec((tn, 1), lambda i: (i, 0))

    cost = pl.CostEstimate(
        flops=14 * n * d,            # 7 dot-style reductions per row
        transcendentals=9 * n,       # 2 sqrt + 3 exp + 1 log + 1 div per row
        bytes_accessed=4 * n * d * itemsize + n * 4,
    )

    per_row = pl.pallas_call(
        _make_kernel(n, tn, d, use_mxu),
        out_shape=jax.ShapeDtypeStruct((n, 1), jnp.float32),
        grid=(num_tiles,),
        in_specs=[in_spec, in_spec, in_spec, in_spec],
        out_specs=out_spec,
        compiler_params=pltpu.CompilerParams(
            dimension_semantics=("parallel",),
            vmem_limit_bytes=_VMEM_LIMIT_BYTES,
        ),
        cost_estimate=cost,
    )(adj_y, adj_y1, adj_y2, adj_x)

    if reduction:
        return jnp.mean(per_row)
    return per_row[:, 0]


def _reference(adj_y, adj_y1, adj_y2, adj_x, reduction=True):
    """Pure-JAX reference mirroring the PyTorch module (computed in f32)."""
    y, y1, y2, x = (a.astype(jnp.float32) for a in (adj_y, adj_y1, adj_y2, adj_x))
    eps = 1e-8

    def cos(a, b):
        num = jnp.sum(a * b, axis=1)
        den = jnp.maximum(
            jnp.linalg.norm(a, axis=1) * jnp.linalg.norm(b, axis=1), eps)
        return num / den

    pos = cos(x, y)
    n1 = cos(x, y1)
    n2 = cos(x, y2)
    e_xy = jnp.sum(y * x, axis=1)
    info = -e_xy * jnp.log(
        jnp.exp(pos) / (jnp.exp(pos) + jnp.exp(n1) + jnp.exp(n2) + eps))
    return jnp.mean(info) if reduction else info


_MXU_REDUCTIONS_OK = None


def _mxu_reductions_ok():
    """One-time probe: use MXU reductions only if they lower and are f32-exact."""
    global _MXU_REDUCTIONS_OK
    if _MXU_REDUCTIONS_OK is None:
        try:
            keys = jax.random.split(jax.random.PRNGKey(42), 4)
            probe = [jax.random.normal(k, (16, 128), dtype=jnp.float32)
                     for k in keys]
            got = _infonce_impl(*probe, reduction=False, block_rows=8,
                                use_mxu=True)
            want = _reference(*probe, reduction=False)
            _MXU_REDUCTIONS_OK = bool(
                jnp.allclose(got, want, rtol=1e-5, atol=1e-5))
        except Exception:  # lowering / runtime failure -> safe XLU fallback
            _MXU_REDUCTIONS_OK = False
    return _MXU_REDUCTIONS_OK


def infonce_loss(adj_y, adj_y1, adj_y2, adj_x, reduction=True, block_rows=4096):
    """Pallas TPU implementation of InfoNCELoss.forward.

    Inputs are (N, D) arrays of any float dtype (streamed natively, upcast to
    f32 in-kernel).  Returns the scalar mean loss if `reduction`, else the
    (N,) per-row losses.
    """
    return _infonce_impl(
        adj_y, adj_y1, adj_y2, adj_x,
        reduction=reduction, block_rows=block_rows,
        use_mxu=_mxu_reductions_ok(),
    )


if __name__ == "__main__":
    key = jax.random.PRNGKey(0)

    # Case 1: f32, N=64, D=128 -> two 32-row tiles (exercises >=2-tile split).
    N, D = 64, 128
    ky, ky1, ky2, kx = jax.random.split(key, 4)
    adj_y = jax.random.normal(ky, (N, D), dtype=jnp.float32)
    adj_y1 = jax.random.normal(ky1, (N, D), dtype=jnp.float32)
    adj_y2 = jax.random.normal(ky2, (N, D), dtype=jnp.float32)
    adj_x = jax.random.normal(kx, (N, D), dtype=jnp.float32)

    loss = jax.block_until_ready(infonce_loss(adj_y, adj_y1, adj_y2, adj_x))
    ref = _reference(adj_y, adj_y1, adj_y2, adj_x)
    assert jnp.allclose(loss, ref, rtol=1e-5, atol=1e-5), (loss, ref)

    per = jax.block_until_ready(
        infonce_loss(adj_y, adj_y1, adj_y2, adj_x, reduction=False))
    per_ref = _reference(adj_y, adj_y1, adj_y2, adj_x, reduction=False)
    assert per.shape == (N,)
    assert jnp.allclose(per, per_ref, rtol=1e-5, atol=1e-5)

    # Case 2: ragged N (not a multiple of the tile) -> in-kernel tail masking.
    N2 = 200
    ky, ky1, ky2, kx = jax.random.split(jax.random.PRNGKey(1), 4)
    b = [jax.random.normal(k, (N2, D), dtype=jnp.float32)
         for k in (ky, ky1, ky2, kx)]
    loss2 = jax.block_until_ready(
        infonce_loss(*b, reduction=True, block_rows=64))
    ref2 = _reference(*b, reduction=True)
    assert jnp.allclose(loss2, ref2, rtol=1e-5, atol=1e-5), (loss2, ref2)

    # Case 3: bf16 inputs pass straight through the pipeline (no wrapper cast).
    c = [a.astype(jnp.bfloat16) for a in b]
    per3 = jax.block_until_ready(
        infonce_loss(*c, reduction=False, block_rows=64))
    per3_ref = _reference(*c, reduction=False)
    assert per3.shape == (N2,)
    assert jnp.allclose(per3, per3_ref, rtol=1e-4, atol=1e-4), float(
        jnp.max(jnp.abs(per3 - per3_ref)))

    print("KERNEL_OK")
</pallas_src>

<mosaic_0001>
module attributes {stable_mosaic.version = 11 : i64} {
  func.func @kernel(%arg0: i32, %arg1: memref<8x128xf32, #tpu.memory_space<vmem>>, %arg2: memref<8x128xf32, #tpu.memory_space<vmem>>, %arg3: memref<8x128xf32, #tpu.memory_space<vmem>>, %arg4: memref<8x128xf32, #tpu.memory_space<vmem>>, %arg5: memref<8x1xf32, #tpu.memory_space<vmem>>) attributes {dimension_semantics = [#tpu.dimension_semantics<parallel>], iteration_bounds = array<i64: 2>, scalar_prefetch = 0 : i64, scratch_operands = 0 : i64, tpu.core_type = #tpu.core_type<tc>, window_params = [{transform_indices = @transform_0, window_bounds = array<i64: 8, 128>}, {transform_indices = @transform_1, window_bounds = array<i64: 8, 128>}, {transform_indices = @transform_2, window_bounds = array<i64: 8, 128>}, {transform_indices = @transform_3, window_bounds = array<i64: 8, 128>}, {transform_indices = @transform_4, window_bounds = array<i64: 8, 1>}]} {
    %c0 = arith.constant 0 : index
    %c0_0 = arith.constant 0 : index
    %0 = vector.load %arg4[%c0, %c0_0] : memref<8x128xf32, #tpu.memory_space<vmem>>, vector<8x128xf32>
    %c0_1 = arith.constant 0 : index
    %c0_2 = arith.constant 0 : index
    %1 = vector.load %arg1[%c0_1, %c0_2] : memref<8x128xf32, #tpu.memory_space<vmem>>, vector<8x128xf32>
    %c0_3 = arith.constant 0 : index
    %c0_4 = arith.constant 0 : index
    %2 = vector.load %arg2[%c0_3, %c0_4] : memref<8x128xf32, #tpu.memory_space<vmem>>, vector<8x128xf32>
    %c0_5 = arith.constant 0 : index
    %c0_6 = arith.constant 0 : index
    %3 = vector.load %arg3[%c0_5, %c0_6] : memref<8x128xf32, #tpu.memory_space<vmem>>, vector<8x128xf32>
    %4 = tpu.iota {dimensions = array<i32: 1>} : vector<128x8xi32>
    %c0_i32 = arith.constant 0 : i32
    %5 = vector.broadcast %c0_i32 : i32 to vector<128x8xi32>
    %6 = arith.cmpi eq, %4, %5 : vector<128x8xi32>
    %7 = arith.extui %6 : vector<128x8xi1> to vector<128x8xi32>
    %8 = arith.sitofp %7 : vector<128x8xi32> to vector<128x8xf32>
    %9 = arith.mulf %0, %1 : vector<8x128xf32>
    %cst = arith.constant dense<0.000000e+00> : vector<8x8xf32>
    %10 = tpu.matmul %9, %8, %cst {dimension_numbers = #tpu.dot_dimension_numbers<[1], [0], [0], [1], [0, 0, 1, 1], [], []>, precision = #tpu.contract_precision<fp32>} : vector<8x128xf32>, vector<128x8xf32>, vector<8x8xf32> -> vector<8x8xf32>
    %c1_i32 = arith.constant 1 : i32
    %11 = vector.broadcast %c1_i32 : i32 to vector<128x8xi32>
    %12 = arith.cmpi eq, %4, %11 : vector<128x8xi32>
    %13 = arith.extui %12 : vector<128x8xi1> to vector<128x8xi32>
    %14 = arith.sitofp %13 : vector<128x8xi32> to vector<128x8xf32>
    %15 = arith.mulf %0, %2 : vector<8x128xf32>
    %cst_7 = arith.constant dense<0.000000e+00> : vector<8x8xf32>
    %16 = tpu.matmul %15, %14, %cst_7 {dimension_numbers = #tpu.dot_dimension_numbers<[1], [0], [0], [1], [0, 0, 1, 1], [], []>, precision = #tpu.contract_precision<fp32>} : vector<8x128xf32>, vector<128x8xf32>, vector<8x8xf32> -> vector<8x8xf32>
    %17 = arith.addf %10, %16 : vector<8x8xf32>
    %c2_i32 = arith.constant 2 : i32
    %18 = vector.broadcast %c2_i32 : i32 to vector<128x8xi32>
    %19 = arith.cmpi eq, %4, %18 : vector<128x8xi32>
    %20 = arith.extui %19 : vector<128x8xi1> to vector<128x8xi32>
    %21 = arith.sitofp %20 : vector<128x8xi32> to vector<128x8xf32>
    %22 = arith.mulf %0, %3 : vector<8x128xf32>
    %cst_8 = arith.constant dense<0.000000e+00> : vector<8x8xf32>
    %23 = tpu.matmul %22, %21, %cst_8 {dimension_numbers = #tpu.dot_dimension_numbers<[1], [0], [0], [1], [0, 0, 1, 1], [], []>, precision = #tpu.contract_precision<fp32>} : vector<8x128xf32>, vector<128x8xf32>, vector<8x8xf32> -> vector<8x8xf32>
    %24 = arith.addf %17, %23 : vector<8x8xf32>
    %c3_i32 = arith.constant 3 : i32
    %25 = vector.broadcast %c3_i32 : i32 to vector<128x8xi32>
    %26 = arith.cmpi eq, %4, %25 : vector<128x8xi32>
    %27 = arith.extui %26 : vector<128x8xi1> to vector<128x8xi32>
    %28 = arith.sitofp %27 : vector<128x8xi32> to vector<128x8xf32>
    %29 = arith.mulf %0, %0 : vector<8x128xf32>
    %cst_9 = arith.constant dense<0.000000e+00> : vector<8x8xf32>
    %30 = tpu.matmul %29, %28, %cst_9 {dimension_numbers = #tpu.dot_dimension_numbers<[1], [0], [0], [1], [0, 0, 1, 1], [], []>, precision = #tpu.contract_precision<fp32>} : vector<8x128xf32>, vector<128x8xf32>, vector<8x8xf32> -> vector<8x8xf32>
    %31 = arith.addf %24, %30 : vector<8x8xf32>
    %c4_i32 = arith.constant 4 : i32
    %32 = vector.broadcast %c4_i32 : i32 to vector<128x8xi32>
    %33 = arith.cmpi eq, %4, %32 : vector<128x8xi32>
    %34 = arith.extui %33 : vector<128x8xi1> to vector<128x8xi32>
    %35 = arith.sitofp %34 : vector<128x8xi32> to vector<128x8xf32>
    %36 = arith.mulf %1, %1 : vector<8x128xf32>
    %cst_10 = arith.constant dense<0.000000e+00> : vector<8x8xf32>
    %37 = tpu.matmul %36, %35, %cst_10 {dimension_numbers = #tpu.dot_dimension_numbers<[1], [0], [0], [1], [0, 0, 1, 1], [], []>, precision = #tpu.contract_precision<fp32>} : vector<8x128xf32>, vector<128x8xf32>, vector<8x8xf32> -> vector<8x8xf32>
    %38 = arith.addf %31, %37 : vector<8x8xf32>
    %c5_i32 = arith.constant 5 : i32
    %39 = vector.broadcast %c5_i32 : i32 to vector<128x8xi32>
    %40 = arith.cmpi eq, %4, %39 : vector<128x8xi32>
    %41 = arith.extui %40 : vector<128x8xi1> to vector<128x8xi32>
    %42 = arith.sitofp %41 : vector<128x8xi32> to vector<128x8xf32>
    %43 = arith.mulf %2, %2 : vector<8x128xf32>
    %cst_11 = arith.constant dense<0.000000e+00> : vector<8x8xf32>
    %44 = tpu.matmul %43, %42, %cst_11 {dimension_numbers = #tpu.dot_dimension_numbers<[1], [0], [0], [1], [0, 0, 1, 1], [], []>, precision = #tpu.contract_precision<fp32>} : vector<8x128xf32>, vector<128x8xf32>, vector<8x8xf32> -> vector<8x8xf32>
    %45 = arith.addf %38, %44 : vector<8x8xf32>
    %c6_i32 = arith.constant 6 : i32
    %46 = vector.broadcast %c6_i32 : i32 to vector<128x8xi32>
    %47 = arith.cmpi eq, %4, %46 : vector<128x8xi32>
    %48 = arith.extui %47 : vector<128x8xi1> to vector<128x8xi32>
    %49 = arith.sitofp %48 : vector<128x8xi32> to vector<128x8xf32>
    %50 = arith.mulf %3, %3 : vector<8x128xf32>
    %cst_12 = arith.constant dense<0.000000e+00> : vector<8x8xf32>
    %51 = tpu.matmul %50, %49, %cst_12 {dimension_numbers = #tpu.dot_dimension_numbers<[1], [0], [0], [1], [0, 0, 1, 1], [], []>, precision = #tpu.contract_precision<fp32>} : vector<8x128xf32>, vector<128x8xf32>, vector<8x8xf32> -> vector<8x8xf32>
    %52 = arith.addf %45, %51 : vector<8x8xf32>
    %53 = vector.extract_strided_slice %52 {offsets = [0, 0], sizes = [8, 3], strides = [1, 1]} : vector<8x8xf32> to vector<8x3xf32>
    %54 = vector.extract_strided_slice %52 {offsets = [0, 3], sizes = [8, 1], strides = [1, 1]} : vector<8x8xf32> to vector<8x1xf32>
    %55 = vector.extract_strided_slice %52 {offsets = [0, 4], sizes = [8, 3], strides = [1, 1]} : vector<8x8xf32> to vector<8x3xf32>
    %56 = math.sqrt %54 : vector<8x1xf32>
    %57 = math.sqrt %55 : vector<8x3xf32>
    %58 = vector.broadcast %56 : vector<8x1xf32> to vector<8x3xf32>
    %59 = arith.mulf %58, %57 : vector<8x3xf32>
    %cst_13 = arith.constant 9.99999993E-9 : f32
    %60 = vector.broadcast %cst_13 : f32 to vector<8x3xf32>
    %61 = arith.maximumf %59, %60 : vector<8x3xf32>
    %62 = arith.divf %53, %61 : vector<8x3xf32>
    %63 = math.exp %62 : vector<8x3xf32>
    %64 = vector.extract_strided_slice %63 {offsets = [0, 0], sizes = [8, 1], strides = [1, 1]} : vector<8x3xf32> to vector<8x1xf32>
    %65 = vector.extract_strided_slice %63 {offsets = [0, 1], sizes = [8, 1], strides = [1, 1]} : vector<8x3xf32> to vector<8x1xf32>
    %66 = arith.addf %64, %65 : vector<8x1xf32>
    %67 = vector.extract_strided_slice %63 {offsets = [0, 2], sizes = [8, 1], strides = [1, 1]} : vector<8x3xf32> to vector<8x1xf32>
    %68 = arith.addf %66, %67 : vector<8x1xf32>
    %cst_14 = arith.constant 9.99999993E-9 : f32
    %69 = vector.broadcast %cst_14 : f32 to vector<8x1xf32>
    %70 = arith.addf %68, %69 : vector<8x1xf32>
    %71 = vector.extract_strided_slice %53 {offsets = [0, 0], sizes = [8, 1], strides = [1, 1]} : vector<8x3xf32> to vector<8x1xf32>
    %cst_15 = arith.constant 0.000000e+00 : f32
    %72 = vector.broadcast %cst_15 : f32 to vector<8x1xf32>
    %73 = arith.subf %72, %71 : vector<8x1xf32>
    %74 = vector.extract_strided_slice %62 {offsets = [0, 0], sizes = [8, 1], strides = [1, 1]} : vector<8x3xf32> to vector<8x1xf32>
    %75 = math.log %70 : vector<8x1xf32>
    %76 = arith.subf %74, %75 : vector<8x1xf32>
    %77 = arith.mulf %73, %76 : vector<8x1xf32>
    %c8_i32 = arith.constant 8 : i32
    %78 = arith.muli %arg0, %c8_i32 : i32
    %79 = tpu.iota {dimensions = array<i32: 0>} : vector<8x1xi32>
    %80 = vector.broadcast %78 : i32 to vector<8x1xi32>
    %81 = arith.addi %80, %79 : vector<8x1xi32>
    %c16_i32 = arith.constant 16 : i32
    %82 = vector.broadcast %c16_i32 : i32 to vector<8x1xi32>
    %83 = arith.cmpi slt, %81, %82 : vector<8x1xi32>
    %cst_16 = arith.constant 0.000000e+00 : f32
    %84 = vector.broadcast %cst_16 : f32 to vector<8x1xf32>
    %85 = arith.select %83, %77, %84 : vector<8x1xi1>, vector<8x1xf32>
    %c0_17 = arith.constant 0 : index
    %c0_18 = arith.constant 0 : index
    %86 = vector.load %arg5[%c0_17, %c0_18] : memref<8x1xf32, #tpu.memory_space<vmem>>, vector<8x1xf32>
    tpu.vector_store %arg5[%c0_17, %c0_18], %85 {strides = array<i32>} : memref<8x1xf32, #tpu.memory_space<vmem>>, vector<8x1xf32>,
    return
  }
  func.func @transform_0(%arg0: i32) -> (i32, i32) {
    %c0_i32 = arith.constant 0 : i32
    %c0_i32_0 = arith.constant 0 : i32
    return %arg0, %c0_i32 : i32, i32
  }
  func.func @transform_1(%arg0: i32) -> (i32, i32) {
    %c0_i32 = arith.constant 0 : i32
    %c0_i32_0 = arith.constant 0 : i32
    return %arg0, %c0_i32 : i32, i32
  }
  func.func @transform_2(%arg0: i32) -> (i32, i32) {
    %c0_i32 = arith.constant 0 : i32
    %c0_i32_0 = arith.constant 0 : i32
    return %arg0, %c0_i32 : i32, i32
  }
  func.func @transform_3(%arg0: i32) -> (i32, i32) {
    %c0_i32 = arith.constant 0 : i32
    %c0_i32_0 = arith.constant 0 : i32
    return %arg0, %c0_i32 : i32, i32
  }
  func.func @transform_4(%arg0: i32) -> (i32, i32) {
    %c0_i32 = arith.constant 0 : i32
    %c0_i32_0 = arith.constant 0 : i32
    return %arg0, %c0_i32 : i32, i32
  }
}

module attributes {stable_mosaic.version = 11 : i64} {
  func.func @kernel(%arg0: i32, %arg1: memref<32x128xf32, #tpu.memory_space<vmem>>, %arg2: memref<32x128xf32, #tpu.memory_space<vmem>>, %arg3: memref<32x128xf32, #tpu.memory_space<vmem>>, %arg4: memref<32x128xf32, #tpu.memory_space<vmem>>, %arg5: memref<32x1xf32, #tpu.memory_space<vmem>>) attributes {dimension_semantics = [#tpu.dimension_semantics<parallel>], iteration_bounds = array<i64: 2>, scalar_prefetch = 0 : i64, scratch_operands = 0 : i64, tpu.core_type = #tpu.core_type<tc>, window_params = [{transform_indices = @transform_0, window_bounds = array<i64: 32, 128>}, {transform_indices = @transform_1, window_bounds = array<i64: 32, 128>}, {transform_indices = @transform_2, window_bounds = array<i64: 32, 128>}, {transform_indices = @transform_3, window_bounds = array<i64: 32, 128>}, {transform_indices = @transform_4, window_bounds = array<i64: 32, 1>}]} {
    %c0 = arith.constant 0 : index
    %c0_0 = arith.constant 0 : index
    %0 = vector.load %arg4[%c0, %c0_0] : memref<32x128xf32, #tpu.memory_space<vmem>>, vector<32x128xf32>
    %c0_1 = arith.constant 0 : index
    %c0_2 = arith.constant 0 : index
    %1 = vector.load %arg1[%c0_1, %c0_2] : memref<32x128xf32, #tpu.memory_space<vmem>>, vector<32x128xf32>
    %c0_3 = arith.constant 0 : index
    %c0_4 = arith.constant 0 : index
    %2 = vector.load %arg2[%c0_3, %c0_4] : memref<32x128xf32, #tpu.memory_space<vmem>>, vector<32x128xf32>
    %c0_5 = arith.constant 0 : index
    %c0_6 = arith.constant 0 : index
    %3 = vector.load %arg3[%c0_5, %c0_6] : memref<32x128xf32, #tpu.memory_space<vmem>>, vector<32x128xf32>
    %4 = arith.mulf %0, %1 : vector<32x128xf32>
    %cst = arith.constant dense<0.000000e+00> : vector<32xf32>
    %5 = vector.multi_reduction <add>, %4, %cst [1] : vector<32x128xf32> to vector<32xf32>
    %6 = vector.shape_cast %5 : vector<32xf32> to vector<32x1xf32>
    %7 = arith.mulf %0, %2 : vector<32x128xf32>
    %cst_7 = arith.constant dense<0.000000e+00> : vector<32xf32>
    %8 = vector.multi_reduction <add>, %7, %cst_7 [1] : vector<32x128xf32> to vector<32xf32>
    %9 = vector.shape_cast %8 : vector<32xf32> to vector<32x1xf32>
    %10 = arith.mulf %0, %3 : vector<32x128xf32>
    %cst_8 = arith.constant dense<0.000000e+00> : vector<32xf32>
    %11 = vector.multi_reduction <add>, %10, %cst_8 [1] : vector<32x128xf32> to vector<32xf32>
    %12 = vector.shape_cast %11 : vector<32xf32> to vector<32x1xf32>
    %13 = tpu.concatenate %6, %9, %12 in 1 : vector<32x1xf32>, vector<32x1xf32>, vector<32x1xf32> -> vector<32x3xf32>
    %14 = arith.mulf %0, %0 : vector<32x128xf32>
    %cst_9 = arith.constant dense<0.000000e+00> : vector<32xf32>
    %15 = vector.multi_reduction <add>, %14, %cst_9 [1] : vector<32x128xf32> to vector<32xf32>
    %16 = vector.shape_cast %15 : vector<32xf32> to vector<32x1xf32>
    %17 = arith.mulf %1, %1 : vector<32x128xf32>
    %cst_10 = arith.constant dense<0.000000e+00> : vector<32xf32>
    %18 = vector.multi_reduction <add>, %17, %cst_10 [1] : vector<32x128xf32> to vector<32xf32>
    %19 = vector.shape_cast %18 : vector<32xf32> to vector<32x1xf32>
    %20 = arith.mulf %2, %2 : vector<32x128xf32>
    %cst_11 = arith.constant dense<0.000000e+00> : vector<32xf32>
    %21 = vector.multi_reduction <add>, %20, %cst_11 [1] : vector<32x128xf32> to vector<32xf32>
    %22 = vector.shape_cast %21 : vector<32xf32> to vector<32x1xf32>
    %23 = arith.mulf %3, %3 : vector<32x128xf32>
    %cst_12 = arith.constant dense<0.000000e+00> : vector<32xf32>
    %24 = vector.multi_reduction <add>, %23, %cst_12 [1] : vector<32x128xf32> to vector<32xf32>
    %25 = vector.shape_cast %24 : vector<32xf32> to vector<32x1xf32>
    %26 = tpu.concatenate %19, %22, %25 in 1 : vector<32x1xf32>, vector<32x1xf32>, vector<32x1xf32> -> vector<32x3xf32>
    %27 = math.sqrt %16 : vector<32x1xf32>
    %28 = math.sqrt %26 : vector<32x3xf32>
    %29 = vector.broadcast %27 : vector<32x1xf32> to vector<32x3xf32>
    %30 = arith.mulf %29, %28 : vector<32x3xf32>
    %cst_13 = arith.constant 9.99999993E-9 : f32
    %31 = vector.broadcast %cst_13 : f32 to vector<32x3xf32>
    %32 = arith.maximumf %30, %31 : vector<32x3xf32>
    %33 = arith.divf %13, %32 : vector<32x3xf32>
    %34 = math.exp %33 : vector<32x3xf32>
    %35 = vector.extract_strided_slice %34 {offsets = [0, 0], sizes = [32, 1], strides = [1, 1]} : vector<32x3xf32> to vector<32x1xf32>
    %36 = vector.extract_strided_slice %34 {offsets = [0, 1], sizes = [32, 1], strides = [1, 1]} : vector<32x3xf32> to vector<32x1xf32>
    %37 = arith.addf %35, %36 : vector<32x1xf32>
    %38 = vector.extract_strided_slice %34 {offsets = [0, 2], sizes = [32, 1], strides = [1, 1]} : vector<32x3xf32> to vector<32x1xf32>
    %39 = arith.addf %37, %38 : vector<32x1xf32>
    %cst_14 = arith.constant 9.99999993E-9 : f32
    %40 = vector.broadcast %cst_14 : f32 to vector<32x1xf32>
    %41 = arith.addf %39, %40 : vector<32x1xf32>
    %42 = vector.extract_strided_slice %13 {offsets = [0, 0], sizes = [32, 1], strides = [1, 1]} : vector<32x3xf32> to vector<32x1xf32>
    %cst_15 = arith.constant 0.000000e+00 : f32
    %43 = vector.broadcast %cst_15 : f32 to vector<32x1xf32>
    %44 = arith.subf %43, %42 : vector<32x1xf32>
    %45 = vector.extract_strided_slice %33 {offsets = [0, 0], sizes = [32, 1], strides = [1, 1]} : vector<32x3xf32> to vector<32x1xf32>
    %46 = math.log %41 : vector<32x1xf32>
    %47 = arith.subf %45, %46 : vector<32x1xf32>
    %48 = arith.mulf %44, %47 : vector<32x1xf32>
    %c32_i32 = arith.constant 32 : i32
    %49 = arith.muli %arg0, %c32_i32 : i32
    %50 = tpu.iota {dimensions = array<i32: 0>} : vector<32x1xi32>
    %51 = vector.broadcast %49 : i32 to vector<32x1xi32>
    %52 = arith.addi %51, %50 : vector<32x1xi32>
    %c64_i32 = arith.constant 64 : i32
    %53 = vector.broadcast %c64_i32 : i32 to vector<32x1xi32>
    %54 = arith.cmpi slt, %52, %53 : vector<32x1xi32>
    %cst_16 = arith.constant 0.000000e+00 : f32
    %55 = vector.broadcast %cst_16 : f32 to vector<32x1xf32>
    %56 = arith.select %54, %48, %55 : vector<32x1xi1>, vector<32x1xf32>
    %c0_17 = arith.constant 0 : index
    %c0_18 = arith.constant 0 : index
    %57 = vector.load %arg5[%c0_17, %c0_18] : memref<32x1xf32, #tpu.memory_space<vmem>>, vector<32x1xf32>
    tpu.vector_store %arg5[%c0_17, %c0_18], %56 {strides = array<i32>} : memref<32x1xf32, #tpu.memory_space<vmem>>, vector<32x1xf32>,
    return
  }
  func.func @transform_0(%arg0: i32) -> (i32, i32) {
    %c0_i32 = arith.constant 0 : i32
    %c0_i32_0 = arith.constant 0 : i32
    return %arg0, %c0_i32 : i32, i32
  }
  func.func @transform_1(%arg0: i32) -> (i32, i32) {
    %c0_i32 = arith.constant 0 : i32
    %c0_i32_0 = arith.constant 0 : i32
    return %arg0, %c0_i32 : i32, i32
  }
  func.func @transform_2(%arg0: i32) -> (i32, i32) {
    %c0_i32 = arith.constant 0 : i32
    %c0_i32_0 = arith.constant 0 : i32
    return %arg0, %c0_i32 : i32, i32
  }
  func.func @transform_3(%arg0: i32) -> (i32, i32) {
    %c0_i32 = arith.constant 0 : i32
    %c0_i32_0 = arith.constant 0 : i32
    return %arg0, %c0_i32 : i32, i32
  }
  func.func @transform_4(%arg0: i32) -> (i32, i32) {
    %c0_i32 = arith.constant 0 : i32
    %c0_i32_0 = arith.constant 0 : i32
    return %arg0, %c0_i32 : i32, i32
  }
}

</mosaic_0001>

<llo_original>
// kernel: _infonce_impl.1
$region0: #{_infonce_impl.1}
  #allocation0 [shape = 'u32[]', space=smem, size = 0x4, offset = 0x4, fixed_abs, tag = 'smem constant byte address 0x4 - core index']
  #allocation1 [shape = 'u32[144,128]{1,0:T(1,128)}', space=vmem, size = 0x12000, scoped, tag = 'internal scratch']
  %s0 = inlined_call_operand.hbm [shape: f32[16,128], index: 0, kind: input, shape index: {}]
  %s1 = inlined_call_operand.hbm [shape: f32[16,128], index: 1, kind: input, shape index: {}]
  %s2 = inlined_call_operand.hbm [shape: f32[16,128], index: 2, kind: input, shape index: {}]
  %s3 = inlined_call_operand.hbm [shape: f32[16,128], index: 3, kind: input, shape index: {}]
  %s4 = inlined_call_operand.vmem [shape: f32[16,1], index: 4, kind: output, shape index: {}]
  %s5 = sld [smem:[#allocation0]]
  $region65: #{_infonce_impl.1} parent=0
    _
  %s7 = ssub.s32 1, %s5
  %s8 = scalar_select 0, %s7, %s5
  $region1: #{_infonce_impl.1} parent=0
    #allocation2 [shape = 'u8[8192]{0}', space=vmem, size = 0x2000, scoped, tag = 'input window, operand 0']
    #allocation3 [shape = 's32[2]{0}', space=sflag, size = 0x8, scoped, tag = 'scoped memory for _infonce_impl.1']
    #allocation4 [shape = 'u8[8192]{0}', space=vmem, size = 0x2000, scoped, tag = 'input window, operand 1']
    #allocation5 [shape = 's32[2]{0}', space=sflag, size = 0x8, scoped, tag = 'scoped memory for _infonce_impl.1']
    #allocation6 [shape = 'u8[8192]{0}', space=vmem, size = 0x2000, scoped, tag = 'input window, operand 2']
    #allocation7 [shape = 'u8[8192]{0}', space=vmem, size = 0x2000, scoped, tag = 'input window, operand 3']
    #allocation8 [shape = 's32[2]{0}', space=sflag, size = 0x8, scoped, tag = 'scoped memory for _infonce_impl.1']
    %9 = vsyncpa [#allocation3], 0
    %s10 = scalar_lea.sflag [#allocation3], 1
    %11 = vsyncpa %s10, 0
    %12 = vsyncpa [#allocation5], 0
    %s13 = scalar_lea.sflag [#allocation5], 1
    %14 = vsyncpa %s13, 0
    %15 = vsyncpa [#allocation8], 0
    %s16 = scalar_lea.sflag [#allocation8], 1
    %17 = vsyncpa %s16, 0
    loop: start=0, step=1, limit=4
    $region2: #{_infonce_impl.1} parent=1 // loop_pre_header
      _
    $region3: #{_infonce_impl.1} parent=1 // loop_header
      %s19 = sphi 0, %s23
      %p20 = scmp.ge.s32.totalorder %s19, 4
      %s29 = sphi 0, %s31
      %s32 = sphi 0, %s29
      %s33 = sphi 0, %s32
      %s49 = sphi 0, %s33
      %s55 = sphi 0, %s57
      %s58 = sphi 0, %s55
      %s59 = sphi 0, %s58
      %s75 = sphi 0, %s59
      %s81 = sphi 0, %s83
      %s84 = sphi 0, %s81
      %s85 = sphi 0, %s84
      %s101 = sphi 0, %s85
      %s107 = sphi 0, %s109
      %s110 = sphi 0, %s107
      %s111 = sphi 0, %s110
      %s127 = sphi 0, %s111
      %s133 = sphi 0, %s135
      %s136 = sphi 0, %s133
      %s137 = sphi 0, %s136
      %s153 = sphi 0, %s137
    $region4: #{_infonce_impl.1} parent=1 // loop_header_branch
      %22 = sbr.rel (%p20) target = $region8
    $region5: #{_infonce_impl.1} parent=1 // loop_body
      %s24 = ssub.s32 %s19, 1
      %s25 = ssub.s32 %s19, 2
      %s26 = sadd.s32 %s19, 1
      %s27 = ssub.s32 %s19, %s26
      %p28 = scmp.eq.s32.totalorder %s27, 0
      %s30 = sadd.s32 %s29, 1
      %s31 = scalar_select %p28, %s29, %s30
      %p34 = pneg %p28
      %p35 = scmp.eq.s32.totalorder %s19, 1
      %p36 = por %p34, %p35
      %p37 = scmp.ne.s32.totalorder %s29, %s32
      %p38 = scmp.eq.s32.totalorder %s19, 0
      %p39 = por %p37, %p38
      %p40 = scmp.ne.s32.totalorder %s29, %s32
      %p41 = scmp.eq.s32.totalorder %s24, 1
      %p42 = por %p40, %p41
      %p43 = scmp.ne.s32.totalorder %s32, %s33
      %p44 = scmp.eq.s32.totalorder %s24, 0
      %p45 = por %p43, %p44
      %p46 = scmp.ne.s32.totalorder %s32, %s33
      %p47 = scmp.eq.s32.totalorder %s25, 1
      %p48 = por %p46, %p47
      %p50 = scmp.ne.s32.totalorder %s33, %s49
      %p51 = scmp.eq.s32.totalorder %s25, 0
      %p52 = por %p50, %p51
      %s53 = ssub.s32 %s19, %s26
      %p54 = scmp.eq.s32.totalorder %s53, 0
      %s56 = sadd.s32 %s55, 1
      %s57 = scalar_select %p54, %s55, %s56
      %p60 = pneg %p54
      %p61 = scmp.eq.s32.totalorder %s19, 1
      %p62 = por %p60, %p61
      %p63 = scmp.ne.s32.totalorder %s55, %s58
      %p64 = scmp.eq.s32.totalorder %s19, 0
      %p65 = por %p63, %p64
      %p66 = scmp.ne.s32.totalorder %s55, %s58
      %p67 = scmp.eq.s32.totalorder %s24, 1
      %p68 = por %p66, %p67
      %p69 = scmp.ne.s32.totalorder %s58, %s59
      %p70 = scmp.eq.s32.totalorder %s24, 0
      %p71 = por %p69, %p70
      %p72 = scmp.ne.s32.totalorder %s58, %s59
      %p73 = scmp.eq.s32.totalorder %s25, 1
      %p74 = por %p72, %p73
      %p76 = scmp.ne.s32.totalorder %s59, %s75
      %p77 = scmp.eq.s32.totalorder %s25, 0
      %p78 = por %p76, %p77
      %s79 = ssub.s32 %s19, %s26
      %p80 = scmp.eq.s32.totalorder %s79, 0
      %s82 = sadd.s32 %s81, 1
      %s83 = scalar_select %p80, %s81, %s82
      %p86 = pneg %p80
      %p87 = scmp.eq.s32.totalorder %s19, 1
      %p88 = por %p86, %p87
      %p89 = scmp.ne.s32.totalorder %s81, %s84
      %p90 = scmp.eq.s32.totalorder %s19, 0
      %p91 = por %p89, %p90
      %p92 = scmp.ne.s32.totalorder %s81, %s84
      %p93 = scmp.eq.s32.totalorder %s24, 1
      %p94 = por %p92, %p93
      %p95 = scmp.ne.s32.totalorder %s84, %s85
      %p96 = scmp.eq.s32.totalorder %s24, 0
      %p97 = por %p95, %p96
      %p98 = scmp.ne.s32.totalorder %s84, %s85
      %p99 = scmp.eq.s32.totalorder %s25, 1
      %p100 = por %p98, %p99
      %p102 = scmp.ne.s32.totalorder %s85, %s101
      %p103 = scmp.eq.s32.totalorder %s25, 0
      %p104 = por %p102, %p103
      %s105 = ssub.s32 %s19, %s26
      %p106 = scmp.eq.s32.totalorder %s105, 0
      %s108 = sadd.s32 %s107, 1
      %s109 = scalar_select %p106, %s107, %s108
      %p112 = pneg %p106
      %p113 = scmp.eq.s32.totalorder %s19, 1
      %p114 = por %p112, %p113
      %p115 = scmp.ne.s32.totalorder %s107, %s110
      %p116 = scmp.eq.s32.totalorder %s19, 0
      %p117 = por %p115, %p116
      %p118 = scmp.ne.s32.totalorder %s107, %s110
      %p119 = scmp.eq.s32.totalorder %s24, 1
      %p120 = por %p118, %p119
      %p121 = scmp.ne.s32.totalorder %s110, %s111
      %p122 = scmp.eq.s32.totalorder %s24, 0
      %p123 = por %p121, %p122
      %p124 = scmp.ne.s32.totalorder %s110, %s111
      %p125 = scmp.eq.s32.totalorder %s25, 1
      %p126 = por %p124, %p125
      %p128 = scmp.ne.s32.totalorder %s111, %s127
      %p129 = scmp.eq.s32.totalorder %s25, 0
      %p130 = por %p128, %p129
      %s131 = ssub.s32 %s19, %s26
      %p132 = scmp.eq.s32.totalorder %s131, 0
      %s134 = sadd.s32 %s133, 1
      %s135 = scalar_select %p132, %s133, %s134
      %p138 = pneg %p132
      %p139 = scmp.eq.s32.totalorder %s19, 1
      %p140 = por %p138, %p139
      %p141 = scmp.ne.s32.totalorder %s133, %s136
      %p142 = scmp.eq.s32.totalorder %s19, 0
      %p143 = por %p141, %p142
      %p144 = scmp.ne.s32.totalorder %s133, %s136
      %p145 = scmp.eq.s32.totalorder %s24, 1
      %p146 = por %p144, %p145
      %p147 = scmp.ne.s32.totalorder %s136, %s137
      %p148 = scmp.eq.s32.totalorder %s24, 0
      %p149 = por %p147, %p148
      %p150 = scmp.ne.s32.totalorder %s136, %s137
      %p151 = scmp.eq.s32.totalorder %s25, 1
      %p152 = por %p150, %p151
      %p154 = scmp.ne.s32.totalorder %s137, %s153
      %p155 = scmp.eq.s32.totalorder %s25, 0
      %p156 = por %p154, %p155
      %p157 = scmp.le.s32.totalorder 1, %s19
      %p158 = scmp.lt.s32.totalorder %s19, 3
      %p159 = pnand %p157, %p158
      %p160 = pneg %p159
      // Predicated region
      $region9: #{_infonce_impl.1} parent=5 // pred_check
        _
      $region10: #{_infonce_impl.1} parent=5 // pred_check_branch
        %162 = sbr.rel (%p159) target = $region12
      $region11: #{_infonce_impl.1} parent=5 // pred_region
        %s163 = ssub.s32 %s19, 1
      $region12: #{_infonce_impl.1} parent=5 // pred_fallthru
        _
      %p164 = scmp.lt.s32.totalorder %s19, 2
      // Predicated region
      $region13: #{_infonce_impl.1} parent=5 // pred_check
        %p165 = pneg %p164
      $region14: #{_infonce_impl.1} parent=5 // pred_check_branch
        %167 = sbr.rel (%p165) target = $region16
      $region15: #{_infonce_impl.1} parent=5 // pred_region
        // Predicated region
        $region17: #{_infonce_impl.1} parent=15 // pred_check
          %p168 = pneg %p39
        $region18: #{_infonce_impl.1} parent=15 // pred_check_branch
          %170 = sbr.rel (%p168) target = $region20
        $region19: #{_infonce_impl.1} parent=15 // pred_region
          %s171 = sand.u32 %s29, 1
          %s172 = scalar_lea.sflag [#allocation3], %s171
          %s173 = sand.u32 %s29, 1
          %s174 = smul.addr %s173, 8
          %s175 = scalar_lea.vmem [#allocation2], %s174
          %s177 = ssub.s32 128, 128
          %178 = vsyncadd %s172, %s177
          %s179 = smul.addr %s19, 128
          %s180 = scalar_lea.hbm %s0, %s179
          %s182 = sshll.u32 %s175, 4
          %s183 = int_to_ptr.vmem [resolvable:$true] %s182
          %185 = dma.hbm_to_vmem [thread:$0]  %s180, 128, %s183, %s172
        $region20: #{_infonce_impl.1} parent=15 // pred_fallthru
          _
        // Predicated region
        $region21: #{_infonce_impl.1} parent=15 // pred_check
          %p186 = pneg %p65
        $region22: #{_infonce_impl.1} parent=15 // pred_check_branch
          %188 = sbr.rel (%p186) target = $region24
        $region23: #{_infonce_impl.1} parent=15 // pred_region
          %s189 = sand.u32 %s19, 1
          %s190 = scalar_lea.sflag [#allocation5], %s189
          %s191 = sand.u32 %s55, 1
          %s192 = smul.addr %s191, 8
          %s193 = scalar_lea.vmem [#allocation4], %s192
          %s195 = ssub.s32 128, 128
          %196 = vsyncadd %s190, %s195
          %s197 = smul.addr %s19, 128
          %s198 = scalar_lea.hbm %s1, %s197
          %s200 = sshll.u32 %s193, 4
          %s201 = int_to_ptr.vmem [resolvable:$true] %s200
          %203 = dma.hbm_to_vmem [thread:$0]  %s198, 128, %s201, %s190
        $region24: #{_infonce_impl.1} parent=15 // pred_fallthru
          _
        // Predicated region
        $region25: #{_infonce_impl.1} parent=15 // pred_check
          %p204 = pneg %p91
        $region26: #{_infonce_impl.1} parent=15 // pred_check_branch
          %206 = sbr.rel (%p204) target = $region28
        $region27: #{_infonce_impl.1} parent=15 // pred_region
          %s207 = sand.u32 %s19, 1
          %s208 = scalar_lea.sflag [#allocation5], %s207
          %s209 = sand.u32 %s81, 1
          %s210 = smul.addr %s209, 8
          %s211 = scalar_lea.vmem [#allocation6], %s210
          %s213 = ssub.s32 128, 128
          %214 = vsyncadd %s208, %s213
          %s215 = smul.addr %s19, 128
          %s216 = scalar_lea.hbm %s2, %s215
          %s218 = sshll.u32 %s211, 4
          %s219 = int_to_ptr.vmem [resolvable:$true] %s218
          %221 = dma.hbm_to_vmem [thread:$0]  %s216, 128, %s219, %s208
        $region28: #{_infonce_impl.1} parent=15 // pred_fallthru
          _
        // Predicated region
        $region29: #{_infonce_impl.1} parent=15 // pred_check
          %p222 = pneg %p117
        $region30: #{_infonce_impl.1} parent=15 // pred_check_branch
          %224 = sbr.rel (%p222) target = $region32
        $region31: #{_infonce_impl.1} parent=15 // pred_region
          %s225 = sand.u32 %s107, 1
          %s226 = scalar_lea.sflag [#allocation8], %s225
          %s227 = sand.u32 %s107, 1
          %s228 = smul.addr %s227, 8
          %s229 = scalar_lea.vmem [#allocation7], %s228
          %s231 = ssub.s32 128, 128
          %232 = vsyncadd %s226, %s231
          %s233 = smul.addr %s19, 128
          %s234 = scalar_lea.hbm %s3, %s233
          %s236 = sshll.u32 %s229, 4
          %s237 = int_to_ptr.vmem [resolvable:$true] %s236
          %239 = dma.hbm_to_vmem [thread:$0]  %s234, 128, %s237, %s226
        $region32: #{_infonce_impl.1} parent=15 // pred_fallthru
          _
      $region16: #{_infonce_impl.1} parent=5 // pred_fallthru
        _
      %p240 = scmp.le.s32.totalorder 1, %s19
      %p241 = scmp.lt.s32.totalorder %s19, 3
      %p242 = pnand %p240, %p241
      %p243 = pneg %p242
      // Predicated region
      $region33: #{_infonce_impl.1} parent=5 // pred_check
        _
      $region34: #{_infonce_impl.1} parent=5 // pred_check_branch
        %245 = sbr.rel (%p242) target = $region36
      $region35: #{_infonce_impl.1} parent=5 // pred_region
        %s246 = ssub.s32 %s19, 1
        %s247 = sand.u32 %s32, 1
        %s248 = scalar_lea.sflag [#allocation3], %s247
        %s249 = sand.u32 %s32, 1
        %s250 = smul.addr %s249, 8
        %s251 = scalar_lea.vmem [#allocation2], %s250
        // Predicated region
        $region37: #{_infonce_impl.1} parent=35 // pred_check
          %p252 = pneg %p45
        $region38: #{_infonce_impl.1} parent=35 // pred_check_branch
          %254 = sbr.rel (%p252) target = $region40
        $region39: #{_infonce_impl.1} parent=35 // pred_region
          %255 = dma.done %s248, 128
        $region40: #{_infonce_impl.1} parent=35 // pred_fallthru
          _
        %s256 = sand.u32 %s24, 1
        %s257 = scalar_lea.sflag [#allocation5], %s256
        %s258 = sand.u32 %s58, 1
        %s259 = smul.addr %s258, 8
        %s260 = scalar_lea.vmem [#allocation4], %s259
        // Predicated region
        $region41: #{_infonce_impl.1} parent=35 // pred_check
          %p261 = pneg %p71
        $region42: #{_infonce_impl.1} parent=35 // pred_check_branch
          %263 = sbr.rel (%p261) target = $region44
        $region43: #{_infonce_impl.1} parent=35 // pred_region
          %264 = dma.done %s257, 128
        $region44: #{_infonce_impl.1} parent=35 // pred_fallthru
          _
        %s265 = sand.u32 %s24, 1
        %s266 = scalar_lea.sflag [#allocation5], %s265
        %s267 = sand.u32 %s84, 1
        %s268 = smul.addr %s267, 8
        %s269 = scalar_lea.vmem [#allocation6], %s268
        // Predicated region
        $region45: #{_infonce_impl.1} parent=35 // pred_check
          %p270 = pneg %p97
        $region46: #{_infonce_impl.1} parent=35 // pred_check_branch
          %272 = sbr.rel (%p270) target = $region48
        $region47: #{_infonce_impl.1} parent=35 // pred_region
          %273 = dma.done %s266, 128
        $region48: #{_infonce_impl.1} parent=35 // pred_fallthru
          _
        %s274 = sand.u32 %s110, 1
        %s275 = scalar_lea.sflag [#allocation8], %s274
        %s276 = sand.u32 %s110, 1
        %s277 = smul.addr %s276, 8
        %s278 = scalar_lea.vmem [#allocation7], %s277
        // Predicated region
        $region49: #{_infonce_impl.1} parent=35 // pred_check
          %p279 = pneg %p123
        $region50: #{_infonce_impl.1} parent=35 // pred_check_branch
          %281 = sbr.rel (%p279) target = $region52
        $region51: #{_infonce_impl.1} parent=35 // pred_region
          %282 = dma.done %s275, 128
        $region52: #{_infonce_impl.1} parent=35 // pred_fallthru
          _
        %s283 = sand.u32 %s32, 1
        %s284 = scalar_lea.sflag [#allocation3], %s283
        %s285 = sand.u32 %s32, 1
        %s286 = smul.addr %s285, 8
        %s287 = scalar_lea.vmem [#allocation2], %s286
        %p288 = pneg %p45
        %p289 = pneg %p42
        %s290 = sand.u32 %s24, 1
        %s291 = scalar_lea.sflag [#allocation5], %s290
        %s292 = sand.u32 %s58, 1
        %s293 = smul.addr %s292, 8
        %s294 = scalar_lea.vmem [#allocation4], %s293
        %p295 = pneg %p71
        %p296 = pneg %p68
        %s297 = sand.u32 %s24, 1
        %s298 = scalar_lea.sflag [#allocation5], %s297
        %s299 = sand.u32 %s84, 1
        %s300 = smul.addr %s299, 8
        %s301 = scalar_lea.vmem [#allocation6], %s300
        %p302 = pneg %p97
        %p303 = pneg %p94
        %s304 = sand.u32 %s110, 1
        %s305 = scalar_lea.sflag [#allocation8], %s304
        %s306 = sand.u32 %s110, 1
        %s307 = smul.addr %s306, 8
        %s308 = scalar_lea.vmem [#allocation7], %s307
        %p309 = pneg %p123
        %p310 = pneg %p120
        %p311 = pneg %p149
        %p312 = pneg %p146
        %p313 = scmp.lt.s32.totalorder %s24, 1
        %s314 = scalar_select %p313, %s24, 1
        %s315 = smul.addr %s314, 8
        %s316 = scalar_lea.vmem %s4, %s315
        %p317 = scmp.lt.s32.totalorder %s24, 1
        %s318 = scalar_select %p317, %s24, 1
        %s319 = smul.addr %s318, 8
        %s320 = scalar_lea.vmem %s4, %s319
        %v321 = vld [vmem:[%s278] sm:$0xff]
        %v322 = vld [vmem:[%s251] sm:$0xff]
        %v323 = vld [vmem:[%s260] sm:$0xff]
        %v324 = vld [vmem:[%s269] sm:$0xff]
        %v325 = vlaneseq
        %v326 = vand.u32 %v325, 127
        %vm327 = vcmp.eq.s32.totalorder %v326, 0
        %v328 = vsel %vm327, 1, 0
        %v329 = vcvt.s32.f32 %v328
        %v330 = vmul.f32 %v321, %v322
        %vm331 = vcmp.eq.s32.totalorder %v326, 1
        %v332 = vsel %vm331, 1, 0
        %v333 = vcvt.s32.f32 %v332
        %v334 = vmul.f32 %v321, %v323
        %335 = vmatprep.subr.mxu0 0.0
        %v336 = vand.u32 %v333, 4294901760
        %337 = vmatpush1.msra.mxu0 %v336
        %338 = vmatprep.subr.mxu0 0.0
        %v339 = vand.u32 %v333, 4294901760
        %340 = vmatpush1.msra.mxu0 %v339
        %341 = vmatprep.subr.mxu0 0.0
        %v342 = vand.u32 %v333, 4294901760
        %343 = vmatpush1.msra.mxu0 %v342
        %344 = vmatprep.subr.mxu0 0.0
        %v345 = vand.u32 %v333, 4294901760
        %346 = vmatpush1.msra.mxu0 %v345
        %347 = vmatprep.subr.mxu0 0.0
        %v348 = vand.u32 %v333, 4294901760
        %349 = vmatpush1.msra.mxu0 %v348
        %350 = vmatprep.subr.mxu0 0.0
        %v351 = vand.u32 %v333, 4294901760
        %352 = vmatpush1.msra.mxu0 %v351
        %353 = vmatprep.subr.mxu0 0.0
        %v354 = vand.u32 %v333, 4294901760
        %355 = vmatpush1.msra.mxu0 %v354
        %356 = vmatprep.subr.mxu0 0.0
        %v357 = vand.u32 %v333, 4294901760
        %358 = vmatpush1.msra.mxu0 %v357
        %359 = vmatprep.subr.mxu0 0.0
        %v360 = vand.u32 %v333, 4294901760
        %361 = vmatpush1.msra.mxu0 %v360
        %362 = vmatprep.subr.mxu0 0.0
        %v363 = vand.u32 %v333, 4294901760
        %364 = vmatpush1.msra.mxu0 %v363
        %365 = vmatprep.subr.mxu0 0.0
        %v366 = vand.u32 %v333, 4294901760
        %367 = vmatpush1.msra.mxu0 %v366
        %368 = vmatprep.subr.mxu0 0.0
        %v369 = vand.u32 %v333, 4294901760
        %370 = vmatpush1.msra.mxu0 %v369
        %371 = vmatprep.subr.mxu0 0.0
        %v372 = vand.u32 %v333, 4294901760
        %373 = vmatpush1.msra.mxu0 %v372
        %374 = vmatprep.subr.mxu0 0.0
        %v375 = vand.u32 %v333, 4294901760
        %376 = vmatpush1.msra.mxu0 %v375
        %377 = vmatprep.subr.mxu0 0.0
        %v378 = vand.u32 %v333, 4294901760
        %379 = vmatpush1.msra.mxu0 %v378
        %380 = vmatprep.subr.mxu0 0.0
        %v381 = vand.u32 %v333, 4294901760
        %382 = vmatpush1.msra.mxu0 %v381
        %383 = vmatprep.subr.mxu0 0.0
        %384 = vmatpush1.msra.mxu0 0.0
        %385 = vmatprep.subr.mxu0 0.0
        %386 = vmatpush1.msra.mxu0 0.0
        %387 = vmatprep.subr.mxu0 0.0
        %388 = vmatpush1.msra.mxu0 0.0
        %389 = vmatprep.subr.mxu0 0.0
        %390 = vmatpush1.msra.mxu0 0.0
        %391 = vmatprep.subr.mxu0 0.0
        %392 = vmatpush1.msra.mxu0 0.0
        %393 = vmatprep.subr.mxu0 0.0
        %394 = vmatpush1.msra.mxu0 0.0
        %395 = vmatprep.subr.mxu0 0.0
        %396 = vmatpush1.msra.mxu0 0.0
        %397 = vmatprep.subr.mxu0 0.0
        %398 = vmatpush1.msra.mxu0 0.0
        %399 = vmatprep.subr.mxu0 0.0
        %400 = vmatpush1.msra.mxu0 0.0
        %401 = vmatprep.subr.mxu0 0.0
        %402 = vmatpush1.msra.mxu0 0.0
        %403 = vmatprep.subr.mxu0 0.0
        %404 = vmatpush1.msra.mxu0 0.0
        %405 = vmatprep.subr.mxu0 0.0
        %406 = vmatpush1.msra.mxu0 0.0
        %407 = vmatprep.subr.mxu0 0.0
        %408 = vmatpush1.msra.mxu0 0.0
        %409 = vmatprep.subr.mxu0 0.0
        %410 = vmatpush1.msra.mxu0 0.0
        %411 = vmatprep.subr.mxu0 0.0
        %412 = vmatpush1.msra.mxu0 0.0
        %413 = vmatprep.subr.mxu0 0.0
        %414 = vmatpush1.msra.mxu0 0.0
        %415 = vmatprep.mubr.f32.mxu0 0.0
        %v416 = vand.u32 %v334, 4294901760
        %v417 = vsub.f32 %v334, %v416
        %v418 = vand.u32 %v417, 4294901760
        %v419 = vsub.f32 %v417, %v418
        %v420 = vand.u32 %v419, 4294901760
        %421 = vmatmul.mubr.f32.gmra.mrb[0].mxu0 %v420
        %v422 = vpop.f32.mrb[0].mxu0
        %v423 = vadd.f32 0.0, %v422
        %v424 = vpop.f32.mrb[0].mxu0
        %425 = vdwg.mxu0
        %426 = vmatprep.subr.mxu0 0.0
        %v427 = vand.u32 %v333, 4294901760
        %v428 = vsub.f32 %v333, %v427
        %v429 = vand.u32 %v428, 4294901760
        %v430 = vsub.f32 %v428, %v429
        %v431 = vand.u32 %v430, 4294901760
        %432 = vmatpush1.msra.mxu0 %v431
        %433 = vmatprep.subr.mxu0 0.0
        %v434 = vand.u32 %v333, 4294901760
        %v435 = vsub.f32 %v333, %v434
        %v436 = vand.u32 %v435, 4294901760
        %v437 = vsub.f32 %v435, %v436
        %v438 = vand.u32 %v437, 4294901760
        %439 = vmatpush1.msra.mxu0 %v438
        %440 = vmatprep.subr.mxu0 0.0
        %v441 = vand.u32 %v333, 4294901760
        %v442 = vsub.f32 %v333, %v441
        %v443 = vand.u32 %v442, 4294901760
        %v444 = vsub.f32 %v442, %v443
        %v445 = vand.u32 %v444, 4294901760
        %446 = vmatpush1.msra.mxu0 %v445
        %447 = vmatprep.subr.mxu0 0.0
        %v448 = vand.u32 %v333, 4294901760
        %v449 = vsub.f32 %v333, %v448
        %v450 = vand.u32 %v449, 4294901760
        %v451 = vsub.f32 %v449, %v450
        %v452 = vand.u32 %v451, 4294901760
        %453 = vmatpush1.msra.mxu0 %v452
        %454 = vmatprep.subr.mxu0 0.0
        %v455 = vand.u32 %v333, 4294901760
        %v456 = vsub.f32 %v333, %v455
        %v457 = vand.u32 %v456, 4294901760
        %v458 = vsub.f32 %v456, %v457
        %v459 = vand.u32 %v458, 4294901760
        %460 = vmatpush1.msra.mxu0 %v459
        %461 = vmatprep.subr.mxu0 0.0
        %v462 = vand.u32 %v333, 4294901760
        %v463 = vsub.f32 %v333, %v462
        %v464 = vand.u32 %v463, 4294901760
        %v465 = vsub.f32 %v463, %v464
        %v466 = vand.u32 %v465, 4294901760
        %467 = vmatpush1.msra.mxu0 %v466
        %468 = vmatprep.subr.mxu0 0.0
        %v469 = vand.u32 %v333, 4294901760
        %v470 = vsub.f32 %v333, %v469
        %v471 = vand.u32 %v470, 4294901760
        %v472 = vsub.f32 %v470, %v471
        %v473 = vand.u32 %v472, 4294901760
        %474 = vmatpush1.msra.mxu0 %v473
        %475 = vmatprep.subr.mxu0 0.0
        %v476 = vand.u32 %v333, 4294901760
        %v477 = vsub.f32 %v333, %v476
        %v478 = vand.u32 %v477, 4294901760
        %v479 = vsub.f32 %v477, %v478
        %v480 = vand.u32 %v479, 4294901760
        %481 = vmatpush1.msra.mxu0 %v480
        %482 = vmatprep.subr.mxu0 0.0
        %v483 = vand.u32 %v333, 4294901760
        %v484 = vsub.f32 %v333, %v483
        %v485 = vand.u32 %v484, 4294901760
        %v486 = vsub.f32 %v484, %v485
        %v487 = vand.u32 %v486, 4294901760
        %488 = vmatpush1.msra.mxu0 %v487
        %489 = vmatprep.subr.mxu0 0.0
        %v490 = vand.u32 %v333, 4294901760
        %v491 = vsub.f32 %v333, %v490
        %v492 = vand.u32 %v491, 4294901760
        %v493 = vsub.f32 %v491, %v492
        %v494 = vand.u32 %v493, 4294901760
        %495 = vmatpush1.msra.mxu0 %v494
        %496 = vmatprep.subr.mxu0 0.0
        %v497 = vand.u32 %v333, 4294901760
        %v498 = vsub.f32 %v333, %v497
        %v499 = vand.u32 %v498, 4294901760
        %v500 = vsub.f32 %v498, %v499
        %v501 = vand.u32 %v500, 4294901760
        %502 = vmatpush1.msra.mxu0 %v501
        %503 = vmatprep.subr.mxu0 0.0
        %v504 = vand.u32 %v333, 4294901760
        %v505 = vsub.f32 %v333, %v504
        %v506 = vand.u32 %v505, 4294901760
        %v507 = vsub.f32 %v505, %v506
        %v508 = vand.u32 %v507, 4294901760
        %509 = vmatpush1.msra.mxu0 %v508
        %510 = vmatprep.subr.mxu0 0.0
        %v511 = vand.u32 %v333, 4294901760
        %v512 = vsub.f32 %v333, %v511
        %v513 = vand.u32 %v512, 4294901760
        %v514 = vsub.f32 %v512, %v513
        %v515 = vand.u32 %v514, 4294901760
        %516 = vmatpush1.msra.mxu0 %v515
        %517 = vmatprep.subr.mxu0 0.0
        %v518 = vand.u32 %v333, 4294901760
        %v519 = vsub.f32 %v333, %v518
        %v520 = vand.u32 %v519, 4294901760
        %v521 = vsub.f32 %v519, %v520
        %v522 = vand.u32 %v521, 4294901760
        %523 = vmatpush1.msra.mxu0 %v522
        %524 = vmatprep.subr.mxu0 0.0
        %v525 = vand.u32 %v333, 4294901760
        %v526 = vsub.f32 %v333, %v525
        %v527 = vand.u32 %v526, 4294901760
        %v528 = vsub.f32 %v526, %v527
        %v529 = vand.u32 %v528, 4294901760
        %530 = vmatpush1.msra.mxu0 %v529
        %531 = vmatprep.subr.mxu0 0.0
        %v532 = vand.u32 %v333, 4294901760
        %v533 = vsub.f32 %v333, %v532
        %v534 = vand.u32 %v533, 4294901760
        %v535 = vsub.f32 %v533, %v534
        %v536 = vand.u32 %v535, 4294901760
        %537 = vmatpush1.msra.mxu0 %v536
        %538 = vmatprep.subr.mxu0 0.0
        %539 = vmatpush1.msra.mxu0 0.0
        %540 = vmatprep.subr.mxu0 0.0
        %541 = vmatpush1.msra.mxu0 0.0
        %542 = vmatprep.subr.mxu0 0.0
        %543 = vmatpush1.msra.mxu0 0.0
        %544 = vmatprep.subr.mxu0 0.0
        %545 = vmatpush1.msra.mxu0 0.0
        %546 = vmatprep.subr.mxu0 0.0
        %547 = vmatpush1.msra.mxu0 0.0
        %548 = vmatprep.subr.mxu0 0.0
        %549 = vmatpush1.msra.mxu0 0.0
        %550 = vmatprep.subr.mxu0 0.0
        %551 = vmatpush1.msra.mxu0 0.0
        %552 = vmatprep.subr.mxu0 0.0
        %553 = vmatpush1.msra.mxu0 0.0
        %554 = vmatprep.subr.mxu0 0.0
        %555 = vmatpush1.msra.mxu0 0.0
        %556 = vmatprep.subr.mxu0 0.0
        %557 = vmatpush1.msra.mxu0 0.0
        %558 = vmatprep.subr.mxu0 0.0
        %559 = vmatpush1.msra.mxu0 0.0
        %560 = vmatprep.subr.mxu0 0.0
        %561 = vmatpush1.msra.mxu0 0.0
        %562 = vmatprep.subr.mxu0 0.0
        %563 = vmatpush1.msra.mxu0 0.0
        %564 = vmatprep.subr.mxu0 0.0
        %565 = vmatpush1.msra.mxu0 0.0
        %566 = vmatprep.subr.mxu0 0.0
        %567 = vmatpush1.msra.mxu0 0.0
        %568 = vmatprep.subr.mxu0 0.0
        %569 = vmatpush1.msra.mxu0 0.0
        %570 = vmatprep.mubr.f32.mxu0 0.0
        %v571 = vand.u32 %v334, 4294901760
        %572 = vmatmul.mubr.f32.gmra.mrb[0].mxu0 %v571
        %v573 = vpop.f32.mrb[0].mxu0
        %v574 = vadd.f32 %v423, %v573
        %v575 = vpop.f32.mrb[0].mxu0
        %576 = vdwg.mxu0
        %577 = vmatprep.subr.mxu0 0.0
        %v578 = vand.u32 %v333, 4294901760
        %v579 = vsub.f32 %v333, %v578
        %580 = vmatpush1.msra.mxu0 %v579
        %581 = vmatprep.subr.mxu0 0.0
        %v582 = vand.u32 %v333, 4294901760
        %v583 = vsub.f32 %v333, %v582
        %584 = vmatpush1.msra.mxu0 %v583
        %585 = vmatprep.subr.mxu0 0.0
        %v586 = vand.u32 %v333, 4294901760
        %v587 = vsub.f32 %v333, %v586
        %588 = vmatpush1.msra.mxu0 %v587
        %589 = vmatprep.subr.mxu0 0.0
        %v590 = vand.u32 %v333, 4294901760
        %v591 = vsub.f32 %v333, %v590
        %592 = vmatpush1.msra.mxu0 %v591
        %593 = vmatprep.subr.mxu0 0.0
        %v594 = vand.u32 %v333, 4294901760
        %v595 = vsub.f32 %v333, %v594
        %596 = vmatpush1.msra.mxu0 %v595
        %597 = vmatprep.subr.mxu0 0.0
        %v598 = vand.u32 %v333, 4294901760
        %v599 = vsub.f32 %v333, %v598
        %600 = vmatpush1.msra.mxu0 %v599
        %601 = vmatprep.subr.mxu0 0.0
        %v602 = vand.u32 %v333, 4294901760
        %v603 = vsub.f32 %v333, %v602
        %604 = vmatpush1.msra.mxu0 %v603
        %605 = vmatprep.subr.mxu0 0.0
        %v606 = vand.u32 %v333, 4294901760
        %v607 = vsub.f32 %v333, %v606
        %608 = vmatpush1.msra.mxu0 %v607
        %609 = vmatprep.subr.mxu0 0.0
        %v610 = vand.u32 %v333, 4294901760
        %v611 = vsub.f32 %v333, %v610
        %612 = vmatpush1.msra.mxu0 %v611
        %613 = vmatprep.subr.mxu0 0.0
        %v614 = vand.u32 %v333, 4294901760
        %v615 = vsub.f32 %v333, %v614
        %616 = vmatpush1.msra.mxu0 %v615
        %617 = vmatprep.subr.mxu0 0.0
        %v618 = vand.u32 %v333, 4294901760
        %v619 = vsub.f32 %v333, %v618
        %620 = vmatpush1.msra.mxu0 %v619
        %621 = vmatprep.subr.mxu0 0.0
        %v622 = vand.u32 %v333, 4294901760
        %v623 = vsub.f32 %v333, %v622
        %624 = vmatpush1.msra.mxu0 %v623
        %625 = vmatprep.subr.mxu0 0.0
        %v626 = vand.u32 %v333, 4294901760
        %v627 = vsub.f32 %v333, %v626
        %628 = vmatpush1.msra.mxu0 %v627
        %629 = vmatprep.subr.mxu0 0.0
        %v630 = vand.u32 %v333, 4294901760
        %v631 = vsub.f32 %v333, %v630
        %632 = vmatpush1.msra.mxu0 %v631
        %633 = vmatprep.subr.mxu0 0.0
        %v634 = vand.u32 %v333, 4294901760
        %v635 = vsub.f32 %v333, %v634
        %636 = vmatpush1.msra.mxu0 %v635
        %637 = vmatprep.subr.mxu0 0.0
        %v638 = vand.u32 %v333, 4294901760
        %v639 = vsub.f32 %v333, %v638
        %640 = vmatpush1.msra.mxu0 %v639
        %641 = vmatprep.subr.mxu0 0.0
        %642 = vmatpush1.msra.mxu0 0.0
        %643 = vmatprep.subr.mxu0 0.0
        %644 = vmatpush1.msra.mxu0 0.0
        %645 = vmatprep.subr.mxu0 0.0
        %646 = vmatpush1.msra.mxu0 0.0
        %647 = vmatprep.subr.mxu0 0.0
        %648 = vmatpush1.msra.mxu0 0.0
        %649 = vmatprep.subr.mxu0 0.0
        %650 = vmatpush1.msra.mxu0 0.0
        %651 = vmatprep.subr.mxu0 0.0
        %652 = vmatpush1.msra.mxu0 0.0
        %653 = vmatprep.subr.mxu0 0.0
        %654 = vmatpush1.msra.mxu0 0.0
        %655 = vmatprep.subr.mxu0 0.0
        %656 = vmatpush1.msra.mxu0 0.0
        %657 = vmatprep.subr.mxu0 0.0
        %658 = vmatpush1.msra.mxu0 0.0
        %659 = vmatprep.subr.mxu0 0.0
        %660 = vmatpush1.msra.mxu0 0.0
        %661 = vmatprep.subr.mxu0 0.0
        %662 = vmatpush1.msra.mxu0 0.0
        %663 = vmatprep.subr.mxu0 0.0
        %664 = vmatpush1.msra.mxu0 0.0
        %665 = vmatprep.subr.mxu0 0.0
        %666 = vmatpush1.msra.mxu0 0.0
        %667 = vmatprep.subr.mxu0 0.0
        %668 = vmatpush1.msra.mxu0 0.0
        %669 = vmatprep.subr.mxu0 0.0
        %670 = vmatpush1.msra.mxu0 0.0
        %671 = vmatprep.subr.mxu0 0.0
        %672 = vmatpush1.msra.mxu0 0.0
        %673 = vmatprep.mubr.f32.mxu0 0.0
        %v674 = vand.u32 %v334, 4294901760
        %v675 = vsub.f32 %v334, %v674
        %676 = vmatmul.mubr.f32.gmra.mrb[0].mxu0 %v675
        %v677 = vpop.f32.mrb[0].mxu0
        %v678 = vadd.f32 %v574, %v677
        %v679 = vpop.f32.mrb[0].mxu0
        %680 = vdwg.mxu0
        %681 = vmatprep.subr.mxu0 0.0
        %v682 = vand.u32 %v333, 4294901760
        %683 = vmatpush1.msra.mxu0 %v682
        %684 = vmatprep.subr.mxu0 0.0
        %v685 = vand.u32 %v333, 4294901760
        %686 = vmatpush1.msra.mxu0 %v685
        %687 = vmatprep.subr.mxu0 0.0
        %v688 = vand.u32 %v333, 4294901760
        %689 = vmatpush1.msra.mxu0 %v688
        %690 = vmatprep.subr.mxu0 0.0
        %v691 = vand.u32 %v333, 4294901760
        %692 = vmatpush1.msra.mxu0 %v691
        %693 = vmatprep.subr.mxu0 0.0
        %v694 = vand.u32 %v333, 4294901760
        %695 = vmatpush1.msra.mxu0 %v694
        %696 = vmatprep.subr.mxu0 0.0
        %v697 = vand.u32 %v333, 4294901760
        %698 = vmatpush1.msra.mxu0 %v697
        %699 = vmatprep.subr.mxu0 0.0
        %v700 = vand.u32 %v333, 4294901760
        %701 = vmatpush1.msra.mxu0 %v700
        %702 = vmatprep.subr.mxu0 0.0
        %v703 = vand.u32 %v333, 4294901760
        %704 = vmatpush1.msra.mxu0 %v703
        %705 = vmatprep.subr.mxu0 0.0
        %v706 = vand.u32 %v333, 4294901760
        %707 = vmatpush1.msra.mxu0 %v706
        %708 = vmatprep.subr.mxu0 0.0
        %v709 = vand.u32 %v333, 4294901760
        %710 = vmatpush1.msra.mxu0 %v709
        %711 = vmatprep.subr.mxu0 0.0
        %v712 = vand.u32 %v333, 4294901760
        %713 = vmatpush1.msra.mxu0 %v712
        %714 = vmatprep.subr.mxu0 0.0
        %v715 = vand.u32 %v333, 4294901760
        %716 = vmatpush1.msra.mxu0 %v715
        %717 = vmatprep.subr.mxu0 0.0
        %v718 = vand.u32 %v333, 4294901760
        %719 = vmatpush1.msra.mxu0 %v718
        %720 = vmatprep.subr.mxu0 0.0
        %v721 = vand.u32 %v333, 4294901760
        %722 = vmatpush1.msra.mxu0 %v721
        %723 = vmatprep.subr.mxu0 0.0
        %v724 = vand.u32 %v333, 4294901760
        %725 = vmatpush1.msra.mxu0 %v724
        %726 = vmatprep.subr.mxu0 0.0
        %v727 = vand.u32 %v333, 4294901760
        %728 = vmatpush1.msra.mxu0 %v727
        %729 = vmatprep.subr.mxu0 0.0
        %730 = vmatpush1.msra.mxu0 0.0
        %731 = vmatprep.subr.mxu0 0.0
        %732 = vmatpush1.msra.mxu0 0.0
        %733 = vmatprep.subr.mxu0 0.0
        %734 = vmatpush1.msra.mxu0 0.0
        %735 = vmatprep.subr.mxu0 0.0
        %736 = vmatpush1.msra.mxu0 0.0
        %737 = vmatprep.subr.mxu0 0.0
        %738 = vmatpush1.msra.mxu0 0.0
        %739 = vmatprep.subr.mxu0 0.0
        %740 = vmatpush1.msra.mxu0 0.0
        %741 = vmatprep.subr.mxu0 0.0
        %742 = vmatpush1.msra.mxu0 0.0
        %743 = vmatprep.subr.mxu0 0.0
        %744 = vmatpush1.msra.mxu0 0.0
        %745 = vmatprep.subr.mxu0 0.0
        %746 = vmatpush1.msra.mxu0 0.0
        %747 = vmatprep.subr.mxu0 0.0
        %748 = vmatpush1.msra.mxu0 0.0
        %749 = vmatprep.subr.mxu0 0.0
        %750 = vmatpush1.msra.mxu0 0.0
        %751 = vmatprep.subr.mxu0 0.0
        %752 = vmatpush1.msra.mxu0 0.0
        %753 = vmatprep.subr.mxu0 0.0
        %754 = vmatpush1.msra.mxu0 0.0
        %755 = vmatprep.subr.mxu0 0.0
        %756 = vmatpush1.msra.mxu0 0.0
        %757 = vmatprep.subr.mxu0 0.0
        %758 = vmatpush1.msra.mxu0 0.0
        %759 = vmatprep.subr.mxu0 0.0
        %760 = vmatpush1.msra.mxu0 0.0
        %761 = vmatprep.mubr.f32.mxu0 0.0
        %v762 = vand.u32 %v334, 4294901760
        %v763 = vsub.f32 %v334, %v762
        %v764 = vand.u32 %v763, 4294901760
        %765 = vmatmul.mubr.f32.gmra.mrb[0].mxu0 %v764
        %v766 = vpop.f32.mrb[0].mxu0
        %v767 = vadd.f32 %v678, %v766
        %v768 = vpop.f32.mrb[0].mxu0
        %769 = vdwg.mxu0
        %770 = vmatprep.subr.mxu0 0.0
        %v771 = vand.u32 %v333, 4294901760
        %v772 = vsub.f32 %v333, %v771
        %v773 = vand.u32 %v772, 4294901760
        %774 = vmatpush1.msra.mxu0 %v773
        %775 = vmatprep.subr.mxu0 0.0
        %v776 = vand.u32 %v333, 4294901760
        %v777 = vsub.f32 %v333, %v776
        %v778 = vand.u32 %v777, 4294901760
        %779 = vmatpush1.msra.mxu0 %v778
        %780 = vmatprep.subr.mxu0 0.0
        %v781 = vand.u32 %v333, 4294901760
        %v782 = vsub.f32 %v333, %v781
        %v783 = vand.u32 %v782, 4294901760
        %784 = vmatpush1.msra.mxu0 %v783
        %785 = vmatprep.subr.mxu0 0.0
        %v786 = vand.u32 %v333, 4294901760
        %v787 = vsub.f32 %v333, %v786
        %v788 = vand.u32 %v787, 4294901760
        %789 = vmatpush1.msra.mxu0 %v788
        %790 = vmatprep.subr.mxu0 0.0
        %v791 = vand.u32 %v333, 4294901760
        %v792 = vsub.f32 %v333, %v791
        %v793 = vand.u32 %v792, 4294901760
        %794 = vmatpush1.msra.mxu0 %v793
        %795 = vmatprep.subr.mxu0 0.0
        %v796 = vand.u32 %v333, 4294901760
        %v797 = vsub.f32 %v333, %v796
        %v798 = vand.u32 %v797, 4294901760
        %799 = vmatpush1.msra.mxu0 %v798
        %800 = vmatprep.subr.mxu0 0.0
        %v801 = vand.u32 %v333, 4294901760
        %v802 = vsub.f32 %v333, %v801
        %v803 = vand.u32 %v802, 4294901760
        %804 = vmatpush1.msra.mxu0 %v803
        %805 = vmatprep.subr.mxu0 0.0
        %v806 = vand.u32 %v333, 4294901760
        %v807 = vsub.f32 %v333, %v806
        %v808 = vand.u32 %v807, 4294901760
        %809 = vmatpush1.msra.mxu0 %v808
        %810 = vmatprep.subr.mxu0 0.0
        %v811 = vand.u32 %v333, 4294901760
        %v812 = vsub.f32 %v333, %v811
        %v813 = vand.u32 %v812, 4294901760
        %814 = vmatpush1.msra.mxu0 %v813
        %815 = vmatprep.subr.mxu0 0.0
        %v816 = vand.u32 %v333, 4294901760
        %v817 = vsub.f32 %v333, %v816
        %v818 = vand.u32 %v817, 4294901760
        %819 = vmatpush1.msra.mxu0 %v818
        %820 = vmatprep.subr.mxu0 0.0
        %v821 = vand.u32 %v333, 4294901760
        %v822 = vsub.f32 %v333, %v821
        %v823 = vand.u32 %v822, 4294901760
        %824 = vmatpush1.msra.mxu0 %v823
        %825 = vmatprep.subr.mxu0 0.0
        %v826 = vand.u32 %v333, 4294901760
        %v827 = vsub.f32 %v333, %v826
        %v828 = vand.u32 %v827, 4294901760
        %829 = vmatpush1.msra.mxu0 %v828
        %830 = vmatprep.subr.mxu0 0.0
        %v831 = vand.u32 %v333, 4294901760
        %v832 = vsub.f32 %v333, %v831
        %v833 = vand.u32 %v832, 4294901760
        %834 = vmatpush1.msra.mxu0 %v833
        %835 = vmatprep.subr.mxu0 0.0
        %v836 = vand.u32 %v333, 4294901760
        %v837 = vsub.f32 %v333, %v836
        %v838 = vand.u32 %v837, 4294901760
        %839 = vmatpush1.msra.mxu0 %v838
        %840 = vmatprep.subr.mxu0 0.0
        %v841 = vand.u32 %v333, 4294901760
        %v842 = vsub.f32 %v333, %v841
        %v843 = vand.u32 %v842, 4294901760
        %844 = vmatpush1.msra.mxu0 %v843
        %845 = vmatprep.subr.mxu0 0.0
        %v846 = vand.u32 %v333, 4294901760
        %v847 = vsub.f32 %v333, %v846
        %v848 = vand.u32 %v847, 4294901760
        %849 = vmatpush1.msra.mxu0 %v848
        %850 = vmatprep.subr.mxu0 0.0
        %851 = vmatpush1.msra.mxu0 0.0
        %852 = vmatprep.subr.mxu0 0.0
        %853 = vmatpush1.msra.mxu0 0.0
        %854 = vmatprep.subr.mxu0 0.0
        %855 = vmatpush1.msra.mxu0 0.0
        %856 = vmatprep.subr.mxu0 0.0
        %857 = vmatpush1.msra.mxu0 0.0
        %858 = vmatprep.subr.mxu0 0.0
        %859 = vmatpush1.msra.mxu0 0.0
        %860 = vmatprep.subr.mxu0 0.0
        %861 = vmatpush1.msra.mxu0 0.0
        %862 = vmatprep.subr.mxu0 0.0
        %863 = vmatpush1.msra.mxu0 0.0
        %864 = vmatprep.subr.mxu0 0.0
        %865 = vmatpush1.msra.mxu0 0.0
        %866 = vmatprep.subr.mxu0 0.0
        %867 = vmatpush1.msra.mxu0 0.0
        %868 = vmatprep.subr.mxu0 0.0
        %869 = vmatpush1.msra.mxu0 0.0
        %870 = vmatprep.subr.mxu0 0.0
        %871 = vmatpush1.msra.mxu0 0.0
        %872 = vmatprep.subr.mxu0 0.0
        %873 = vmatpush1.msra.mxu0 0.0
        %874 = vmatprep.subr.mxu0 0.0
        %875 = vmatpush1.msra.mxu0 0.0
        %876 = vmatprep.subr.mxu0 0.0
        %877 = vmatpush1.msra.mxu0 0.0
        %878 = vmatprep.subr.mxu0 0.0
        %879 = vmatpush1.msra.mxu0 0.0
        %880 = vmatprep.subr.mxu0 0.0
        %881 = vmatpush1.msra.mxu0 0.0
        %882 = vmatprep.mubr.f32.mxu0 0.0
        %v883 = vand.u32 %v334, 4294901760
        %884 = vmatmul.mubr.f32.gmra.mrb[0].mxu0 %v883
        %v885 = vpop.f32.mrb[0].mxu0
        %v886 = vadd.f32 %v767, %v885
        %v887 = vpop.f32.mrb[0].mxu0
        %888 = vdwg.mxu0
        %889 = vmatprep.subr.mxu0 0.0
        %v890 = vand.u32 %v333, 4294901760
        %891 = vmatpush1.msra.mxu0 %v890
        %892 = vmatprep.subr.mxu0 0.0
        %v893 = vand.u32 %v333, 4294901760
        %894 = vmatpush1.msra.mxu0 %v893
        %895 = vmatprep.subr.mxu0 0.0
        %v896 = vand.u32 %v333, 4294901760
        %897 = vmatpush1.msra.mxu0 %v896
        %898 = vmatprep.subr.mxu0 0.0
        %v899 = vand.u32 %v333, 4294901760
        %900 = vmatpush1.msra.mxu0 %v899
        %901 = vmatprep.subr.mxu0 0.0
        %v902 = vand.u32 %v333, 4294901760
        %903 = vmatpush1.msra.mxu0 %v902
        %904 = vmatprep.subr.mxu0 0.0
        %v905 = vand.u32 %v333, 4294901760
        %906 = vmatpush1.msra.mxu0 %v905
        %907 = vmatprep.subr.mxu0 0.0
        %v908 = vand.u32 %v333, 4294901760
        %909 = vmatpush1.msra.mxu0 %v908
        %910 = vmatprep.subr.mxu0 0.0
        %v911 = vand.u32 %v333, 4294901760
        %912 = vmatpush1.msra.mxu0 %v911
        %913 = vmatprep.subr.mxu0 0.0
        %v914 = vand.u32 %v333, 4294901760
        %915 = vmatpush1.msra.mxu0 %v914
        %916 = vmatprep.subr.mxu0 0.0
        %v917 = vand.u32 %v333, 4294901760
        %918 = vmatpush1.msra.mxu0 %v917
        %919 = vmatprep.subr.mxu0 0.0
        %v920 = vand.u32 %v333, 4294901760
        %921 = vmatpush1.msra.mxu0 %v920
        %922 = vmatprep.subr.mxu0 0.0
        %v923 = vand.u32 %v333, 4294901760
        %924 = vmatpush1.msra.mxu0 %v923
        %925 = vmatprep.subr.mxu0 0.0
        %v926 = vand.u32 %v333, 4294901760
        %927 = vmatpush1.msra.mxu0 %v926
        %928 = vmatprep.subr.mxu0 0.0
        %v929 = vand.u32 %v333, 4294901760
        %930 = vmatpush1.msra.mxu0 %v929
        %931 = vmatprep.subr.mxu0 0.0
        %v932 = vand.u32 %v333, 4294901760
        %933 = vmatpush1.msra.mxu0 %v932
        %934 = vmatprep.subr.mxu0 0.0
        %v935 = vand.u32 %v333, 4294901760
        %936 = vmatpush1.msra.mxu0 %v935
        %937 = vmatprep.subr.mxu0 0.0
        %938 = vmatpush1.msra.mxu0 0.0
        %939 = vmatprep.subr.mxu0 0.0
        %940 = vmatpush1.msra.mxu0 0.0
        %941 = vmatprep.subr.mxu0 0.0
        %942 = vmatpush1.msra.mxu0 0.0
        %943 = vmatprep.subr.mxu0 0.0
        %944 = vmatpush1.msra.mxu0 0.0
        %945 = vmatprep.subr.mxu0 0.0
        %946 = vmatpush1.msra.mxu0 0.0
        %947 = vmatprep.subr.mxu0 0.0
        %948 = vmatpush1.msra.mxu0 0.0
        %949 = vmatprep.subr.mxu0 0.0
        %950 = vmatpush1.msra.mxu0 0.0
        %951 = vmatprep.subr.mxu0 0.0
        %952 = vmatpush1.msra.mxu0 0.0
        %953 = vmatprep.subr.mxu0 0.0
        %954 = vmatpush1.msra.mxu0 0.0
        %955 = vmatprep.subr.mxu0 0.0
        %956 = vmatpush1.msra.mxu0 0.0
        %957 = vmatprep.subr.mxu0 0.0
        %958 = vmatpush1.msra.mxu0 0.0
        %959 = vmatprep.subr.mxu0 0.0
        %960 = vmatpush1.msra.mxu0 0.0
        %961 = vmatprep.subr.mxu0 0.0
        %962 = vmatpush1.msra.mxu0 0.0
        %963 = vmatprep.subr.mxu0 0.0
        %964 = vmatpush1.msra.mxu0 0.0
        %965 = vmatprep.subr.mxu0 0.0
        %966 = vmatpush1.msra.mxu0 0.0
        %967 = vmatprep.subr.mxu0 0.0
        %968 = vmatpush1.msra.mxu0 0.0
        %969 = vmatprep.mubr.f32.mxu0 0.0
        %v970 = vand.u32 %v334, 4294901760
        %971 = vmatmul.mubr.f32.gmra.mrb[0].mxu0 %v970
        %v972 = vpop.f32.mrb[0].mxu0
        %v973 = vadd.f32 %v886, %v972
        %v974 = vpop.f32.mrb[0].mxu0
        %975 = vdwg.mxu0
        %976 = vmatprep.subr.mxu0 0.0
        %v977 = vand.u32 %v329, 4294901760
        %978 = vmatpush1.msra.mxu0 %v977
        %979 = vmatprep.subr.mxu0 0.0
        %v980 = vand.u32 %v329, 4294901760
        %981 = vmatpush1.msra.mxu0 %v980
        %982 = vmatprep.subr.mxu0 0.0
        %v983 = vand.u32 %v329, 4294901760
        %984 = vmatpush1.msra.mxu0 %v983
        %985 = vmatprep.subr.mxu0 0.0
        %v986 = vand.u32 %v329, 4294901760
        %987 = vmatpush1.msra.mxu0 %v986
        %988 = vmatprep.subr.mxu0 0.0
        %v989 = vand.u32 %v329, 4294901760
        %990 = vmatpush1.msra.mxu0 %v989
        %991 = vmatprep.subr.mxu0 0.0
        %v992 = vand.u32 %v329, 4294901760
        %993 = vmatpush1.msra.mxu0 %v992
        %994 = vmatprep.subr.mxu0 0.0
        %v995 = vand.u32 %v329, 4294901760
        %996 = vmatpush1.msra.mxu0 %v995
        %997 = vmatprep.subr.mxu0 0.0
        %v998 = vand.u32 %v329, 4294901760
        %999 = vmatpush1.msra.mxu0 %v998
        %1000 = vmatprep.subr.mxu0 0.0
        %v1001 = vand.u32 %v329, 4294901760
        %1002 = vmatpush1.msra.mxu0 %v1001
        %1003 = vmatprep.subr.mxu0 0.0
        %v1004 = vand.u32 %v329, 4294901760
        %1005 = vmatpush1.msra.mxu0 %v1004
        %1006 = vmatprep.subr.mxu0 0.0
        %v1007 = vand.u32 %v329, 4294901760
        %1008 = vmatpush1.msra.mxu0 %v1007
        %1009 = vmatprep.subr.mxu0 0.0
        %v1010 = vand.u32 %v329, 4294901760
        %1011 = vmatpush1.msra.mxu0 %v1010
        %1012 = vmatprep.subr.mxu0 0.0
        %v1013 = vand.u32 %v329, 4294901760
        %1014 = vmatpush1.msra.mxu0 %v1013
        %1015 = vmatprep.subr.mxu0 0.0
        %v1016 = vand.u32 %v329, 4294901760
        %1017 = vmatpush1.msra.mxu0 %v1016
        %1018 = vmatprep.subr.mxu0 0.0
        %v1019 = vand.u32 %v329, 4294901760
        %1020 = vmatpush1.msra.mxu0 %v1019
        %1021 = vmatprep.subr.mxu0 0.0
        %v1022 = vand.u32 %v329, 4294901760
        %1023 = vmatpush1.msra.mxu0 %v1022
        %1024 = vmatprep.subr.mxu0 0.0
        %1025 = vmatpush1.msra.mxu0 0.0
        %1026 = vmatprep.subr.mxu0 0.0
        %1027 = vmatpush1.msra.mxu0 0.0
        %1028 = vmatprep.subr.mxu0 0.0
        %1029 = vmatpush1.msra.mxu0 0.0
        %1030 = vmatprep.subr.mxu0 0.0
        %1031 = vmatpush1.msra.mxu0 0.0
        %1032 = vmatprep.subr.mxu0 0.0
        %1033 = vmatpush1.msra.mxu0 0.0
        %1034 = vmatprep.subr.mxu0 0.0
        %1035 = vmatpush1.msra.mxu0 0.0
        %1036 = vmatprep.subr.mxu0 0.0
        %1037 = vmatpush1.msra.mxu0 0.0
        %1038 = vmatprep.subr.mxu0 0.0
        %1039 = vmatpush1.msra.mxu0 0.0
        %1040 = vmatprep.subr.mxu0 0.0
        %1041 = vmatpush1.msra.mxu0 0.0
        %1042 = vmatprep.subr.mxu0 0.0
        %1043 = vmatpush1.msra.mxu0 0.0
        %1044 = vmatprep.subr.mxu0 0.0
        %1045 = vmatpush1.msra.mxu0 0.0
        %1046 = vmatprep.subr.mxu0 0.0
        %1047 = vmatpush1.msra.mxu0 0.0
        %1048 = vmatprep.subr.mxu0 0.0
        %1049 = vmatpush1.msra.mxu0 0.0
        %1050 = vmatprep.subr.mxu0 0.0
        %1051 = vmatpush1.msra.mxu0 0.0
        %1052 = vmatprep.subr.mxu0 0.0
        %1053 = vmatpush1.msra.mxu0 0.0
        %1054 = vmatprep.subr.mxu0 0.0
        %1055 = vmatpush1.msra.mxu0 0.0
        %1056 = vmatprep.mubr.f32.mxu0 0.0
        %v1057 = vand.u32 %v330, 4294901760
        %v1058 = vsub.f32 %v330, %v1057
        %v1059 = vand.u32 %v1058, 4294901760
        %v1060 = vsub.f32 %v1058, %v1059
        %v1061 = vand.u32 %v1060, 4294901760
        %1062 = vmatmul.mubr.f32.gmra.mrb[0].mxu0 %v1061
        %v1063 = vpop.f32.mrb[0].mxu0
        %v1064 = vadd.f32 %v973, %v1063
        %v1065 = vpop.f32.mrb[0].mxu0
        %1066 = vdwg.mxu0
        %1067 = vmatprep.subr.mxu0 0.0
        %v1068 = vand.u32 %v329, 4294901760
        %v1069 = vsub.f32 %v329, %v1068
        %v1070 = vand.u32 %v1069, 4294901760
        %v1071 = vsub.f32 %v1069, %v1070
        %v1072 = vand.u32 %v1071, 4294901760
        %1073 = vmatpush1.msra.mxu0 %v1072
        %1074 = vmatprep.subr.mxu0 0.0
        %v1075 = vand.u32 %v329, 4294901760
        %v1076 = vsub.f32 %v329, %v1075
        %v1077 = vand.u32 %v1076, 4294901760
        %v1078 = vsub.f32 %v1076, %v1077
        %v1079 = vand.u32 %v1078, 4294901760
        %1080 = vmatpush1.msra.mxu0 %v1079
        %1081 = vmatprep.subr.mxu0 0.0
        %v1082 = vand.u32 %v329, 4294901760
        %v1083 = vsub.f32 %v329, %v1082
        %v1084 = vand.u32 %v1083, 4294901760
        %v1085 = vsub.f32 %v1083, %v1084
        %v1086 = vand.u32 %v1085, 4294901760
        %1087 = vmatpush1.msra.mxu0 %v1086
        %1088 = vmatprep.subr.mxu0 0.0
        %v1089 = vand.u32 %v329, 4294901760
        %v1090 = vsub.f32 %v329, %v1089
        %v1091 = vand.u32 %v1090, 4294901760
        %v1092 = vsub.f32 %v1090, %v1091
        %v1093 = vand.u32 %v1092, 4294901760
        %1094 = vmatpush1.msra.mxu0 %v1093
        %1095 = vmatprep.subr.mxu0 0.0
        %v1096 = vand.u32 %v329, 4294901760
        %v1097 = vsub.f32 %v329, %v1096
        %v1098 = vand.u32 %v1097, 4294901760
        %v1099 = vsub.f32 %v1097, %v1098
        %v1100 = vand.u32 %v1099, 4294901760
        %1101 = vmatpush1.msra.mxu0 %v1100
        %1102 = vmatprep.subr.mxu0 0.0
        %v1103 = vand.u32 %v329, 4294901760
        %v1104 = vsub.f32 %v329, %v1103
        %v1105 = vand.u32 %v1104, 4294901760
        %v1106 = vsub.f32 %v1104, %v1105
        %v1107 = vand.u32 %v1106, 4294901760
        %1108 = vmatpush1.msra.mxu0 %v1107
        %1109 = vmatprep.subr.mxu0 0.0
        %v1110 = vand.u32 %v329, 4294901760
        %v1111 = vsub.f32 %v329, %v1110
        %v1112 = vand.u32 %v1111, 4294901760
        %v1113 = vsub.f32 %v1111, %v1112
        %v1114 = vand.u32 %v1113, 4294901760
        %1115 = vmatpush1.msra.mxu0 %v1114
        %1116 = vmatprep.subr.mxu0 0.0
        %v1117 = vand.u32 %v329, 4294901760
        %v1118 = vsub.f32 %v329, %v1117
        %v1119 = vand.u32 %v1118, 4294901760
        %v1120 = vsub.f32 %v1118, %v1119
        %v1121 = vand.u32 %v1120, 4294901760
        %1122 = vmatpush1.msra.mxu0 %v1121
        %1123 = vmatprep.subr.mxu0 0.0
        %v1124 = vand.u32 %v329, 4294901760
        %v1125 = vsub.f32 %v329, %v1124
        %v1126 = vand.u32 %v1125, 4294901760
        %v1127 = vsub.f32 %v1125, %v1126
        %v1128 = vand.u32 %v1127, 4294901760
        %1129 = vmatpush1.msra.mxu0 %v1128
        %1130 = vmatprep.subr.mxu0 0.0
        %v1131 = vand.u32 %v329, 4294901760
        %v1132 = vsub.f32 %v329, %v1131
        %v1133 = vand.u32 %v1132, 4294901760
        %v1134 = vsub.f32 %v1132, %v1133
        %v1135 = vand.u32 %v1134, 4294901760
        %1136 = vmatpush1.msra.mxu0 %v1135
        %1137 = vmatprep.subr.mxu0 0.0
        %v1138 = vand.u32 %v329, 4294901760
        %v1139 = vsub.f32 %v329, %v1138
        %v1140 = vand.u32 %v1139, 4294901760
        %v1141 = vsub.f32 %v1139, %v1140
        %v1142 = vand.u32 %v1141, 4294901760
        %1143 = vmatpush1.msra.mxu0 %v1142
        %1144 = vmatprep.subr.mxu0 0.0
        %v1145 = vand.u32 %v329, 4294901760
        %v1146 = vsub.f32 %v329, %v1145
        %v1147 = vand.u32 %v1146, 4294901760
        %v1148 = vsub.f32 %v1146, %v1147
        %v1149 = vand.u32 %v1148, 4294901760
        %1150 = vmatpush1.msra.mxu0 %v1149
        %1151 = vmatprep.subr.mxu0 0.0
        %v1152 = vand.u32 %v329, 4294901760
        %v1153 = vsub.f32 %v329, %v1152
        %v1154 = vand.u32 %v1153, 4294901760
        %v1155 = vsub.f32 %v1153, %v1154
        %v1156 = vand.u32 %v1155, 4294901760
        %1157 = vmatpush1.msra.mxu0 %v1156
        %1158 = vmatprep.subr.mxu0 0.0
        %v1159 = vand.u32 %v329, 4294901760
        %v1160 = vsub.f32 %v329, %v1159
        %v1161 = vand.u32 %v1160, 4294901760
        %v1162 = vsub.f32 %v1160, %v1161
        %v1163 = vand.u32 %v1162, 4294901760
        %1164 = vmatpush1.msra.mxu0 %v1163
        %1165 = vmatprep.subr.mxu0 0.0
        %v1166 = vand.u32 %v329, 4294901760
        %v1167 = vsub.f32 %v329, %v1166
        %v1168 = vand.u32 %v1167, 4294901760
        %v1169 = vsub.f32 %v1167, %v1168
        %v1170 = vand.u32 %v1169, 4294901760
        %1171 = vmatpush1.msra.mxu0 %v1170
        %1172 = vmatprep.subr.mxu0 0.0
        %v1173 = vand.u32 %v329, 4294901760
        %v1174 = vsub.f32 %v329, %v1173
        %v1175 = vand.u32 %v1174, 4294901760
        %v1176 = vsub.f32 %v1174, %v1175
        %v1177 = vand.u32 %v1176, 4294901760
        %1178 = vmatpush1.msra.mxu0 %v1177
        %1179 = vmatprep.subr.mxu0 0.0
        %1180 = vmatpush1.msra.mxu0 0.0
        %1181 = vmatprep.subr.mxu0 0.0
        %1182 = vmatpush1.msra.mxu0 0.0
        %1183 = vmatprep.subr.mxu0 0.0
        %1184 = vmatpush1.msra.mxu0 0.0
        %1185 = vmatprep.subr.mxu0 0.0
        %1186 = vmatpush1.msra.mxu0 0.0
        %1187 = vmatprep.subr.mxu0 0.0
        %1188 = vmatpush1.msra.mxu0 0.0
        %1189 = vmatprep.subr.mxu0 0.0
        %1190 = vmatpush1.msra.mxu0 0.0
        %1191 = vmatprep.subr.mxu0 0.0
        %1192 = vmatpush1.msra.mxu0 0.0
        %1193 = vmatprep.subr.mxu0 0.0
        %1194 = vmatpush1.msra.mxu0 0.0
        %1195 = vmatprep.subr.mxu0 0.0
        %1196 = vmatpush1.msra.mxu0 0.0
        %1197 = vmatprep.subr.mxu0 0.0
        %1198 = vmatpush1.msra.mxu0 0.0
        %1199 = vmatprep.subr.mxu0 0.0
        %1200 = vmatpush1.msra.mxu0 0.0
        %1201 = vmatprep.subr.mxu0 0.0
        %1202 = vmatpush1.msra.mxu0 0.0
        %1203 = vmatprep.subr.mxu0 0.0
        %1204 = vmatpush1.msra.mxu0 0.0
        %1205 = vmatprep.subr.mxu0 0.0
        %1206 = vmatpush1.msra.mxu0 0.0
        %1207 = vmatprep.subr.mxu0 0.0
        %1208 = vmatpush1.msra.mxu0 0.0
        %1209 = vmatprep.subr.mxu0 0.0
        %1210 = vmatpush1.msra.mxu0 0.0
        %1211 = vmatprep.mubr.f32.mxu0 0.0
        %v1212 = vand.u32 %v330, 4294901760
        %1213 = vmatmul.mubr.f32.gmra.mrb[0].mxu0 %v1212
        %v1214 = vpop.f32.mrb[0].mxu0
        %v1215 = vadd.f32 %v1064, %v1214
        %v1216 = vpop.f32.mrb[0].mxu0
        %1217 = vdwg.mxu0
        %1218 = vmatprep.subr.mxu0 0.0
        %v1219 = vand.u32 %v329, 4294901760
        %v1220 = vsub.f32 %v329, %v1219
        %1221 = vmatpush1.msra.mxu0 %v1220
        %1222 = vmatprep.subr.mxu0 0.0
        %v1223 = vand.u32 %v329, 4294901760
        %v1224 = vsub.f32 %v329, %v1223
        %1225 = vmatpush1.msra.mxu0 %v1224
        %1226 = vmatprep.subr.mxu0 0.0
        %v1227 = vand.u32 %v329, 4294901760
        %v1228 = vsub.f32 %v329, %v1227
        %1229 = vmatpush1.msra.mxu0 %v1228
        %1230 = vmatprep.subr.mxu0 0.0
        %v1231 = vand.u32 %v329, 4294901760
        %v1232 = vsub.f32 %v329, %v1231
        %1233 = vmatpush1.msra.mxu0 %v1232
        %1234 = vmatprep.subr.mxu0 0.0
        %v1235 = vand.u32 %v329, 4294901760
        %v1236 = vsub.f32 %v329, %v1235
        %1237 = vmatpush1.msra.mxu0 %v1236
        %1238 = vmatprep.subr.mxu0 0.0
        %v1239 = vand.u32 %v329, 4294901760
        %v1240 = vsub.f32 %v329, %v1239
        %1241 = vmatpush1.msra.mxu0 %v1240
        %1242 = vmatprep.subr.mxu0 0.0
        %v1243 = vand.u32 %v329, 4294901760
        %v1244 = vsub.f32 %v329, %v1243
        %1245 = vmatpush1.msra.mxu0 %v1244
        %1246 = vmatprep.subr.mxu0 0.0
        %v1247 = vand.u32 %v329, 4294901760
        %v1248 = vsub.f32 %v329, %v1247
        %1249 = vmatpush1.msra.mxu0 %v1248
        %1250 = vmatprep.subr.mxu0 0.0
        %v1251 = vand.u32 %v329, 4294901760
        %v1252 = vsub.f32 %v329, %v1251
        %1253 = vmatpush1.msra.mxu0 %v1252
        %1254 = vmatprep.subr.mxu0 0.0
        %v1255 = vand.u32 %v329, 4294901760
        %v1256 = vsub.f32 %v329, %v1255
        %1257 = vmatpush1.msra.mxu0 %v1256
        %1258 = vmatprep.subr.mxu0 0.0
        %v1259 = vand.u32 %v329, 4294901760
        %v1260 = vsub.f32 %v329, %v1259
        %1261 = vmatpush1.msra.mxu0 %v1260
        %1262 = vmatprep.subr.mxu0 0.0
        %v1263 = vand.u32 %v329, 4294901760
        %v1264 = vsub.f32 %v329, %v1263
        %1265 = vmatpush1.msra.mxu0 %v1264
        %1266 = vmatprep.subr.mxu0 0.0
        %v1267 = vand.u32 %v329, 4294901760
        %v1268 = vsub.f32 %v329, %v1267
        %1269 = vmatpush1.msra.mxu0 %v1268
        %1270 = vmatprep.subr.mxu0 0.0
        %v1271 = vand.u32 %v329, 4294901760
        %v1272 = vsub.f32 %v329, %v1271
        %1273 = vmatpush1.msra.mxu0 %v1272
        %1274 = vmatprep.subr.mxu0 0.0
        %v1275 = vand.u32 %v329, 4294901760
        %v1276 = vsub.f32 %v329, %v1275
        %1277 = vmatpush1.msra.mxu0 %v1276
        %1278 = vmatprep.subr.mxu0 0.0
        %v1279 = vand.u32 %v329, 4294901760
        %v1280 = vsub.f32 %v329, %v1279
        %1281 = vmatpush1.msra.mxu0 %v1280
        %1282 = vmatprep.subr.mxu0 0.0
        %1283 = vmatpush1.msra.mxu0 0.0
        %1284 = vmatprep.subr.mxu0 0.0
        %1285 = vmatpush1.msra.mxu0 0.0
        %1286 = vmatprep.subr.mxu0 0.0
        %1287 = vmatpush1.msra.mxu0 0.0
        %1288 = vmatprep.subr.mxu0 0.0
        %1289 = vmatpush1.msra.mxu0 0.0
        %1290 = vmatprep.subr.mxu0 0.0
        %1291 = vmatpush1.msra.mxu0 0.0
        %1292 = vmatprep.subr.mxu0 0.0
        %1293 = vmatpush1.msra.mxu0 0.0
        %1294 = vmatprep.subr.mxu0 0.0
        %1295 = vmatpush1.msra.mxu0 0.0
        %1296 = vmatprep.subr.mxu0 0.0
        %1297 = vmatpush1.msra.mxu0 0.0
        %1298 = vmatprep.subr.mxu0 0.0
        %1299 = vmatpush1.msra.mxu0 0.0
        %1300 = vmatprep.subr.mxu0 0.0
        %1301 = vmatpush1.msra.mxu0 0.0
        %1302 = vmatprep.subr.mxu0 0.0
        %1303 = vmatpush1.msra.mxu0 0.0
        %1304 = vmatprep.subr.mxu0 0.0
        %1305 = vmatpush1.msra.mxu0 0.0
        %1306 = vmatprep.subr.mxu0 0.0
        %1307 = vmatpush1.msra.mxu0 0.0
        %1308 = vmatprep.subr.mxu0 0.0
        %1309 = vmatpush1.msra.mxu0 0.0
        %1310 = vmatprep.subr.mxu0 0.0
        %1311 = vmatpush1.msra.mxu0 0.0
        %1312 = vmatprep.subr.mxu0 0.0
        %1313 = vmatpush1.msra.mxu0 0.0
        %1314 = vmatprep.mubr.f32.mxu0 0.0
        %v1315 = vand.u32 %v330, 4294901760
        %v1316 = vsub.f32 %v330, %v1315
        %1317 = vmatmul.mubr.f32.gmra.mrb[0].mxu0 %v1316
        %v1318 = vpop.f32.mrb[0].mxu0
        %v1319 = vadd.f32 %v1215, %v1318
        %v1320 = vpop.f32.mrb[0].mxu0
        %1321 = vdwg.mxu0
        %1322 = vmatprep.subr.mxu0 0.0
        %v1323 = vand.u32 %v329, 4294901760
        %1324 = vmatpush1.msra.mxu0 %v1323
        %1325 = vmatprep.subr.mxu0 0.0
        %v1326 = vand.u32 %v329, 4294901760
        %1327 = vmatpush1.msra.mxu0 %v1326
        %1328 = vmatprep.subr.mxu0 0.0
        %v1329 = vand.u32 %v329, 4294901760
        %1330 = vmatpush1.msra.mxu0 %v1329
        %1331 = vmatprep.subr.mxu0 0.0
        %v1332 = vand.u32 %v329, 4294901760
        %1333 = vmatpush1.msra.mxu0 %v1332
        %1334 = vmatprep.subr.mxu0 0.0
        %v1335 = vand.u32 %v329, 4294901760
        %1336 = vmatpush1.msra.mxu0 %v1335
        %1337 = vmatprep.subr.mxu0 0.0
        %v1338 = vand.u32 %v329, 4294901760
        %1339 = vmatpush1.msra.mxu0 %v1338
        %1340 = vmatprep.subr.mxu0 0.0
        %v1341 = vand.u32 %v329, 4294901760
        %1342 = vmatpush1.msra.mxu0 %v1341
        %1343 = vmatprep.subr.mxu0 0.0
        %v1344 = vand.u32 %v329, 4294901760
        %1345 = vmatpush1.msra.mxu0 %v1344
        %1346 = vmatprep.subr.mxu0 0.0
        %v1347 = vand.u32 %v329, 4294901760
        %1348 = vmatpush1.msra.mxu0 %v1347
        %1349 = vmatprep.subr.mxu0 0.0
        %v1350 = vand.u32 %v329, 4294901760
        %1351 = vmatpush1.msra.mxu0 %v1350
        %1352 = vmatprep.subr.mxu0 0.0
        %v1353 = vand.u32 %v329, 4294901760
        %1354 = vmatpush1.msra.mxu0 %v1353
        %1355 = vmatprep.subr.mxu0 0.0
        %v1356 = vand.u32 %v329, 4294901760
        %1357 = vmatpush1.msra.mxu0 %v1356
        %1358 = vmatprep.subr.mxu0 0.0
        %v1359 = vand.u32 %v329, 4294901760
        %1360 = vmatpush1.msra.mxu0 %v1359
        %1361 = vmatprep.subr.mxu0 0.0
        %v1362 = vand.u32 %v329, 4294901760
        %1363 = vmatpush1.msra.mxu0 %v1362
        %1364 = vmatprep.subr.mxu0 0.0
        %v1365 = vand.u32 %v329, 4294901760
        %1366 = vmatpush1.msra.mxu0 %v1365
        %1367 = vmatprep.subr.mxu0 0.0
        %v1368 = vand.u32 %v329, 4294901760
        %1369 = vmatpush1.msra.mxu0 %v1368
        %1370 = vmatprep.subr.mxu0 0.0
        %1371 = vmatpush1.msra.mxu0 0.0
        %1372 = vmatprep.subr.mxu0 0.0
        %1373 = vmatpush1.msra.mxu0 0.0
        %1374 = vmatprep.subr.mxu0 0.0
        %1375 = vmatpush1.msra.mxu0 0.0
        %1376 = vmatprep.subr.mxu0 0.0
        %1377 = vmatpush1.msra.mxu0 0.0
        %1378 = vmatprep.subr.mxu0 0.0
        %1379 = vmatpush1.msra.mxu0 0.0
        %1380 = vmatprep.subr.mxu0 0.0
        %1381 = vmatpush1.msra.mxu0 0.0
        %1382 = vmatprep.subr.mxu0 0.0
        %1383 = vmatpush1.msra.mxu0 0.0
        %1384 = vmatprep.subr.mxu0 0.0
        %1385 = vmatpush1.msra.mxu0 0.0
        %1386 = vmatprep.subr.mxu0 0.0
        %1387 = vmatpush1.msra.mxu0 0.0
        %1388 = vmatprep.subr.mxu0 0.0
        %1389 = vmatpush1.msra.mxu0 0.0
        %1390 = vmatprep.subr.mxu0 0.0
        %1391 = vmatpush1.msra.mxu0 0.0
        %1392 = vmatprep.subr.mxu0 0.0
        %1393 = vmatpush1.msra.mxu0 0.0
        %1394 = vmatprep.subr.mxu0 0.0
        %1395 = vmatpush1.msra.mxu0 0.0
        %1396 = vmatprep.subr.mxu0 0.0
        %1397 = vmatpush1.msra.mxu0 0.0
        %1398 = vmatprep.subr.mxu0 0.0
        %1399 = vmatpush1.msra.mxu0 0.0
        %1400 = vmatprep.subr.mxu0 0.0
        %1401 = vmatpush1.msra.mxu0 0.0
        %1402 = vmatprep.mubr.f32.mxu0 0.0
        %v1403 = vand.u32 %v330, 4294901760
        %v1404 = vsub.f32 %v330, %v1403
        %v1405 = vand.u32 %v1404, 4294901760
        %1406 = vmatmul.mubr.f32.gmra.mrb[0].mxu0 %v1405
        %v1407 = vpop.f32.mrb[0].mxu0
        %v1408 = vadd.f32 %v1319, %v1407
        %v1409 = vpop.f32.mrb[0].mxu0
        %1410 = vdwg.mxu0
        %1411 = vmatprep.subr.mxu0 0.0
        %v1412 = vand.u32 %v329, 4294901760
        %v1413 = vsub.f32 %v329, %v1412
        %v1414 = vand.u32 %v1413, 4294901760
        %1415 = vmatpush1.msra.mxu0 %v1414
        %1416 = vmatprep.subr.mxu0 0.0
        %v1417 = vand.u32 %v329, 4294901760
        %v1418 = vsub.f32 %v329, %v1417
        %v1419 = vand.u32 %v1418, 4294901760
        %1420 = vmatpush1.msra.mxu0 %v1419
        %1421 = vmatprep.subr.mxu0 0.0
        %v1422 = vand.u32 %v329, 4294901760
        %v1423 = vsub.f32 %v329, %v1422
        %v1424 = vand.u32 %v1423, 4294901760
        %1425 = vmatpush1.msra.mxu0 %v1424
        %1426 = vmatprep.subr.mxu0 0.0
        %v1427 = vand.u32 %v329, 4294901760
        %v1428 = vsub.f32 %v329, %v1427
        %v1429 = vand.u32 %v1428, 4294901760
        %1430 = vmatpush1.msra.mxu0 %v1429
        %1431 = vmatprep.subr.mxu0 0.0
        %v1432 = vand.u32 %v329, 4294901760
        %v1433 = vsub.f32 %v329, %v1432
        %v1434 = vand.u32 %v1433, 4294901760
        %1435 = vmatpush1.msra.mxu0 %v1434
        %1436 = vmatprep.subr.mxu0 0.0
        %v1437 = vand.u32 %v329, 4294901760
        %v1438 = vsub.f32 %v329, %v1437
        %v1439 = vand.u32 %v1438, 4294901760
        %1440 = vmatpush1.msra.mxu0 %v1439
        %1441 = vmatprep.subr.mxu0 0.0
        %v1442 = vand.u32 %v329, 4294901760
        %v1443 = vsub.f32 %v329, %v1442
        %v1444 = vand.u32 %v1443, 4294901760
        %1445 = vmatpush1.msra.mxu0 %v1444
        %1446 = vmatprep.subr.mxu0 0.0
        %v1447 = vand.u32 %v329, 4294901760
        %v1448 = vsub.f32 %v329, %v1447
        %v1449 = vand.u32 %v1448, 4294901760
        %1450 = vmatpush1.msra.mxu0 %v1449
        %1451 = vmatprep.subr.mxu0 0.0
        %v1452 = vand.u32 %v329, 4294901760
        %v1453 = vsub.f32 %v329, %v1452
        %v1454 = vand.u32 %v1453, 4294901760
        %1455 = vmatpush1.msra.mxu0 %v1454
        %1456 = vmatprep.subr.mxu0 0.0
        %v1457 = vand.u32 %v329, 4294901760
        %v1458 = vsub.f32 %v329, %v1457
        %v1459 = vand.u32 %v1458, 4294901760
        %1460 = vmatpush1.msra.mxu0 %v1459
        %1461 = vmatprep.subr.mxu0 0.0
        %v1462 = vand.u32 %v329, 4294901760
        %v1463 = vsub.f32 %v329, %v1462
        %v1464 = vand.u32 %v1463, 4294901760
        %1465 = vmatpush1.msra.mxu0 %v1464
        %1466 = vmatprep.subr.mxu0 0.0
        %v1467 = vand.u32 %v329, 4294901760
        %v1468 = vsub.f32 %v329, %v1467
        %v1469 = vand.u32 %v1468, 4294901760
        %1470 = vmatpush1.msra.mxu0 %v1469
        %1471 = vmatprep.subr.mxu0 0.0
        %v1472 = vand.u32 %v329, 4294901760
        %v1473 = vsub.f32 %v329, %v1472
        %v1474 = vand.u32 %v1473, 4294901760
        %1475 = vmatpush1.msra.mxu0 %v1474
        %1476 = vmatprep.subr.mxu0 0.0
        %v1477 = vand.u32 %v329, 4294901760
        %v1478 = vsub.f32 %v329, %v1477
        %v1479 = vand.u32 %v1478, 4294901760
        %1480 = vmatpush1.msra.mxu0 %v1479
        %1481 = vmatprep.subr.mxu0 0.0
        %v1482 = vand.u32 %v329, 4294901760
        %v1483 = vsub.f32 %v329, %v1482
        %v1484 = vand.u32 %v1483, 4294901760
        %1485 = vmatpush1.msra.mxu0 %v1484
        %1486 = vmatprep.subr.mxu0 0.0
        %v1487 = vand.u32 %v329, 4294901760
        %v1488 = vsub.f32 %v329, %v1487
        %v1489 = vand.u32 %v1488, 4294901760
        %1490 = vmatpush1.msra.mxu0 %v1489
        %1491 = vmatprep.subr.mxu0 0.0
        %1492 = vmatpush1.msra.mxu0 0.0
        %1493 = vmatprep.subr.mxu0 0.0
        %1494 = vmatpush1.msra.mxu0 0.0
        %1495 = vmatprep.subr.mxu0 0.0
        %1496 = vmatpush1.msra.mxu0 0.0
        %1497 = vmatprep.subr.mxu0 0.0
        %1498 = vmatpush1.msra.mxu0 0.0
        %1499 = vmatprep.subr.mxu0 0.0
        %1500 = vmatpush1.msra.mxu0 0.0
        %1501 = vmatprep.subr.mxu0 0.0
        %1502 = vmatpush1.msra.mxu0 0.0
        %1503 = vmatprep.subr.mxu0 0.0
        %1504 = vmatpush1.msra.mxu0 0.0
        %1505 = vmatprep.subr.mxu0 0.0
        %1506 = vmatpush1.msra.mxu0 0.0
        %1507 = vmatprep.subr.mxu0 0.0
        %1508 = vmatpush1.msra.mxu0 0.0
        %1509 = vmatprep.subr.mxu0 0.0
        %1510 = vmatpush1.msra.mxu0 0.0
        %1511 = vmatprep.subr.mxu0 0.0
        %1512 = vmatpush1.msra.mxu0 0.0
        %1513 = vmatprep.subr.mxu0 0.0
        %1514 = vmatpush1.msra.mxu0 0.0
        %1515 = vmatprep.subr.mxu0 0.0
        %1516 = vmatpush1.msra.mxu0 0.0
        %1517 = vmatprep.subr.mxu0 0.0
        %1518 = vmatpush1.msra.mxu0 0.0
        %1519 = vmatprep.subr.mxu0 0.0
        %1520 = vmatpush1.msra.mxu0 0.0
        %1521 = vmatprep.subr.mxu0 0.0
        %1522 = vmatpush1.msra.mxu0 0.0
        %1523 = vmatprep.mubr.f32.mxu0 0.0
        %v1524 = vand.u32 %v330, 4294901760
        %1525 = vmatmul.mubr.f32.gmra.mrb[0].mxu0 %v1524
        %v1526 = vpop.f32.mrb[0].mxu0
        %v1527 = vadd.f32 %v1408, %v1526
        %v1528 = vpop.f32.mrb[0].mxu0
        %1529 = vdwg.mxu0
        %1530 = vmatprep.subr.mxu0 0.0
        %v1531 = vand.u32 %v329, 4294901760
        %1532 = vmatpush1.msra.mxu0 %v1531
        %1533 = vmatprep.subr.mxu0 0.0
        %v1534 = vand.u32 %v329, 4294901760
        %1535 = vmatpush1.msra.mxu0 %v1534
        %1536 = vmatprep.subr.mxu0 0.0
        %v1537 = vand.u32 %v329, 4294901760
        %1538 = vmatpush1.msra.mxu0 %v1537
        %1539 = vmatprep.subr.mxu0 0.0
        %v1540 = vand.u32 %v329, 4294901760
        %1541 = vmatpush1.msra.mxu0 %v1540
        %1542 = vmatprep.subr.mxu0 0.0
        %v1543 = vand.u32 %v329, 4294901760
        %1544 = vmatpush1.msra.mxu0 %v1543
        %1545 = vmatprep.subr.mxu0 0.0
        %v1546 = vand.u32 %v329, 4294901760
        %1547 = vmatpush1.msra.mxu0 %v1546
        %1548 = vmatprep.subr.mxu0 0.0
        %v1549 = vand.u32 %v329, 4294901760
        %1550 = vmatpush1.msra.mxu0 %v1549
        %1551 = vmatprep.subr.mxu0 0.0
        %v1552 = vand.u32 %v329, 4294901760
        %1553 = vmatpush1.msra.mxu0 %v1552
        %1554 = vmatprep.subr.mxu0 0.0
        %v1555 = vand.u32 %v329, 4294901760
        %1556 = vmatpush1.msra.mxu0 %v1555
        %1557 = vmatprep.subr.mxu0 0.0
        %v1558 = vand.u32 %v329, 4294901760
        %1559 = vmatpush1.msra.mxu0 %v1558
        %1560 = vmatprep.subr.mxu0 0.0
        %v1561 = vand.u32 %v329, 4294901760
        %1562 = vmatpush1.msra.mxu0 %v1561
        %1563 = vmatprep.subr.mxu0 0.0
        %v1564 = vand.u32 %v329, 4294901760
        %1565 = vmatpush1.msra.mxu0 %v1564
        %1566 = vmatprep.subr.mxu0 0.0
        %v1567 = vand.u32 %v329, 4294901760
        %1568 = vmatpush1.msra.mxu0 %v1567
        %1569 = vmatprep.subr.mxu0 0.0
        %v1570 = vand.u32 %v329, 4294901760
        %1571 = vmatpush1.msra.mxu0 %v1570
        %1572 = vmatprep.subr.mxu0 0.0
        %v1573 = vand.u32 %v329, 4294901760
        %1574 = vmatpush1.msra.mxu0 %v1573
        %1575 = vmatprep.subr.mxu0 0.0
        %v1576 = vand.u32 %v329, 4294901760
        %1577 = vmatpush1.msra.mxu0 %v1576
        %1578 = vmatprep.subr.mxu0 0.0
        %1579 = vmatpush1.msra.mxu0 0.0
        %1580 = vmatprep.subr.mxu0 0.0
        %1581 = vmatpush1.msra.mxu0 0.0
        %1582 = vmatprep.subr.mxu0 0.0
        %1583 = vmatpush1.msra.mxu0 0.0
        %1584 = vmatprep.subr.mxu0 0.0
        %1585 = vmatpush1.msra.mxu0 0.0
        %1586 = vmatprep.subr.mxu0 0.0
        %1587 = vmatpush1.msra.mxu0 0.0
        %1588 = vmatprep.subr.mxu0 0.0
        %1589 = vmatpush1.msra.mxu0 0.0
        %1590 = vmatprep.subr.mxu0 0.0
        %1591 = vmatpush1.msra.mxu0 0.0
        %1592 = vmatprep.subr.mxu0 0.0
        %1593 = vmatpush1.msra.mxu0 0.0
        %1594 = vmatprep.subr.mxu0 0.0
        %1595 = vmatpush1.msra.mxu0 0.0
        %1596 = vmatprep.subr.mxu0 0.0
        %1597 = vmatpush1.msra.mxu0 0.0
        %1598 = vmatprep.subr.mxu0 0.0
        %1599 = vmatpush1.msra.mxu0 0.0
        %1600 = vmatprep.subr.mxu0 0.0
        %1601 = vmatpush1.msra.mxu0 0.0
        %1602 = vmatprep.subr.mxu0 0.0
        %1603 = vmatpush1.msra.mxu0 0.0
        %1604 = vmatprep.subr.mxu0 0.0
        %1605 = vmatpush1.msra.mxu0 0.0
        %1606 = vmatprep.subr.mxu0 0.0
        %1607 = vmatpush1.msra.mxu0 0.0
        %1608 = vmatprep.subr.mxu0 0.0
        %1609 = vmatpush1.msra.mxu0 0.0
        %1610 = vmatprep.mubr.f32.mxu0 0.0
        %v1611 = vand.u32 %v330, 4294901760
        %1612 = vmatmul.mubr.f32.gmra.mrb[0].mxu0 %v1611
        %v1613 = vpop.f32.mrb[0].mxu0
        %v1614 = vadd.f32 %v1527, %v1613
        %v1615 = vpop.f32.mrb[0].mxu0
        %1616 = vdwg.mxu0
        %vm1617 = vcmp.eq.s32.totalorder %v326, 2
        %v1618 = vsel %vm1617, 1, 0
        %v1619 = vcvt.s32.f32 %v1618
        %v1620 = vmul.f32 %v321, %v324
        %1621 = vmatprep.subr.mxu0 0.0
        %v1622 = vand.u32 %v1619, 4294901760
        %1623 = vmatpush1.msra.mxu0 %v1622
        %1624 = vmatprep.subr.mxu0 0.0
        %v1625 = vand.u32 %v1619, 4294901760
        %1626 = vmatpush1.msra.mxu0 %v1625
        %1627 = vmatprep.subr.mxu0 0.0
        %v1628 = vand.u32 %v1619, 4294901760
        %1629 = vmatpush1.msra.mxu0 %v1628
        %1630 = vmatprep.subr.mxu0 0.0
        %v1631 = vand.u32 %v1619, 4294901760
        %1632 = vmatpush1.msra.mxu0 %v1631
        %1633 = vmatprep.subr.mxu0 0.0
        %v1634 = vand.u32 %v1619, 4294901760
        %1635 = vmatpush1.msra.mxu0 %v1634
        %1636 = vmatprep.subr.mxu0 0.0
        %v1637 = vand.u32 %v1619, 4294901760
        %1638 = vmatpush1.msra.mxu0 %v1637
        %1639 = vmatprep.subr.mxu0 0.0
        %v1640 = vand.u32 %v1619, 4294901760
        %1641 = vmatpush1.msra.mxu0 %v1640
        %1642 = vmatprep.subr.mxu0 0.0
        %v1643 = vand.u32 %v1619, 4294901760
        %1644 = vmatpush1.msra.mxu0 %v1643
        %1645 = vmatprep.subr.mxu0 0.0
        %v1646 = vand.u32 %v1619, 4294901760
        %1647 = vmatpush1.msra.mxu0 %v1646
        %1648 = vmatprep.subr.mxu0 0.0
        %v1649 = vand.u32 %v1619, 4294901760
        %1650 = vmatpush1.msra.mxu0 %v1649
        %1651 = vmatprep.subr.mxu0 0.0
        %v1652 = vand.u32 %v1619, 4294901760
        %1653 = vmatpush1.msra.mxu0 %v1652
        %1654 = vmatprep.subr.mxu0 0.0
        %v1655 = vand.u32 %v1619, 4294901760
        %1656 = vmatpush1.msra.mxu0 %v1655
        %1657 = vmatprep.subr.mxu0 0.0
        %v1658 = vand.u32 %v1619, 4294901760
        %1659 = vmatpush1.msra.mxu0 %v1658
        %1660 = vmatprep.subr.mxu0 0.0
        %v1661 = vand.u32 %v1619, 4294901760
        %1662 = vmatpush1.msra.mxu0 %v1661
        %1663 = vmatprep.subr.mxu0 0.0
        %v1664 = vand.u32 %v1619, 4294901760
        %1665 = vmatpush1.msra.mxu0 %v1664
        %1666 = vmatprep.subr.mxu0 0.0
        %v1667 = vand.u32 %v1619, 4294901760
        %1668 = vmatpush1.msra.mxu0 %v1667
        %1669 = vmatprep.subr.mxu0 0.0
        %1670 = vmatpush1.msra.mxu0 0.0
        %1671 = vmatprep.subr.mxu0 0.0
        %1672 = vmatpush1.msra.mxu0 0.0
        %1673 = vmatprep.subr.mxu0 0.0
        %1674 = vmatpush1.msra.mxu0 0.0
        %1675 = vmatprep.subr.mxu0 0.0
        %1676 = vmatpush1.msra.mxu0 0.0
        %1677 = vmatprep.subr.mxu0 0.0
        %1678 = vmatpush1.msra.mxu0 0.0
        %1679 = vmatprep.subr.mxu0 0.0
        %1680 = vmatpush1.msra.mxu0 0.0
        %1681 = vmatprep.subr.mxu0 0.0
        %1682 = vmatpush1.msra.mxu0 0.0
        %1683 = vmatprep.subr.mxu0 0.0
        %1684 = vmatpush1.msra.mxu0 0.0
        %1685 = vmatprep.subr.mxu0 0.0
        %1686 = vmatpush1.msra.mxu0 0.0
        %1687 = vmatprep.subr.mxu0 0.0
        %1688 = vmatpush1.msra.mxu0 0.0
        %1689 = vmatprep.subr.mxu0 0.0
        %1690 = vmatpush1.msra.mxu0 0.0
        %1691 = vmatprep.subr.mxu0 0.0
        %1692 = vmatpush1.msra.mxu0 0.0
        %1693 = vmatprep.subr.mxu0 0.0
        %1694 = vmatpush1.msra.mxu0 0.0
        %1695 = vmatprep.subr.mxu0 0.0
        %1696 = vmatpush1.msra.mxu0 0.0
        %1697 = vmatprep.subr.mxu0 0.0
        %1698 = vmatpush1.msra.mxu0 0.0
        %1699 = vmatprep.subr.mxu0 0.0
        %1700 = vmatpush1.msra.mxu0 0.0
        %1701 = vmatprep.mubr.f32.mxu0 0.0
        %v1702 = vand.u32 %v1620, 4294901760
        %v1703 = vsub.f32 %v1620, %v1702
        %v1704 = vand.u32 %v1703, 4294901760
        %v1705 = vsub.f32 %v1703, %v1704
        %v1706 = vand.u32 %v1705, 4294901760
        %1707 = vmatmul.mubr.f32.gmra.mrb[0].mxu0 %v1706
        %v1708 = vpop.f32.mrb[0].mxu0
        %v1709 = vadd.f32 0.0, %v1708
        %v1710 = vpop.f32.mrb[0].mxu0
        %1711 = vdwg.mxu0
        %1712 = vmatprep.subr.mxu0 0.0
        %v1713 = vand.u32 %v1619, 4294901760
        %v1714 = vsub.f32 %v1619, %v1713
        %v1715 = vand.u32 %v1714, 4294901760
        %v1716 = vsub.f32 %v1714, %v1715
        %v1717 = vand.u32 %v1716, 4294901760
        %1718 = vmatpush1.msra.mxu0 %v1717
        %1719 = vmatprep.subr.mxu0 0.0
        %v1720 = vand.u32 %v1619, 4294901760
        %v1721 = vsub.f32 %v1619, %v1720
        %v1722 = vand.u32 %v1721, 4294901760
        %v1723 = vsub.f32 %v1721, %v1722
        %v1724 = vand.u32 %v1723, 4294901760
        %1725 = vmatpush1.msra.mxu0 %v1724
        %1726 = vmatprep.subr.mxu0 0.0
        %v1727 = vand.u32 %v1619, 4294901760
        %v1728 = vsub.f32 %v1619, %v1727
        %v1729 = vand.u32 %v1728, 4294901760
        %v1730 = vsub.f32 %v1728, %v1729
        %v1731 = vand.u32 %v1730, 4294901760
        %1732 = vmatpush1.msra.mxu0 %v1731
        %1733 = vmatprep.subr.mxu0 0.0
        %v1734 = vand.u32 %v1619, 4294901760
        %v1735 = vsub.f32 %v1619, %v1734
        %v1736 = vand.u32 %v1735, 4294901760
        %v1737 = vsub.f32 %v1735, %v1736
        %v1738 = vand.u32 %v1737, 4294901760
        %1739 = vmatpush1.msra.mxu0 %v1738
        %1740 = vmatprep.subr.mxu0 0.0
        %v1741 = vand.u32 %v1619, 4294901760
        %v1742 = vsub.f32 %v1619, %v1741
        %v1743 = vand.u32 %v1742, 4294901760
        %v1744 = vsub.f32 %v1742, %v1743
        %v1745 = vand.u32 %v1744, 4294901760
        %1746 = vmatpush1.msra.mxu0 %v1745
        %1747 = vmatprep.subr.mxu0 0.0
        %v1748 = vand.u32 %v1619, 4294901760
        %v1749 = vsub.f32 %v1619, %v1748
        %v1750 = vand.u32 %v1749, 4294901760
        %v1751 = vsub.f32 %v1749, %v1750
        %v1752 = vand.u32 %v1751, 4294901760
        %1753 = vmatpush1.msra.mxu0 %v1752
        %1754 = vmatprep.subr.mxu0 0.0
        %v1755 = vand.u32 %v1619, 4294901760
        %v1756 = vsub.f32 %v1619, %v1755
        %v1757 = vand.u32 %v1756, 4294901760
        %v1758 = vsub.f32 %v1756, %v1757
        %v1759 = vand.u32 %v1758, 4294901760
        %1760 = vmatpush1.msra.mxu0 %v1759
        %1761 = vmatprep.subr.mxu0 0.0
        %v1762 = vand.u32 %v1619, 4294901760
        %v1763 = vsub.f32 %v1619, %v1762
        %v1764 = vand.u32 %v1763, 4294901760
        %v1765 = vsub.f32 %v1763, %v1764
        %v1766 = vand.u32 %v1765, 4294901760
        %1767 = vmatpush1.msra.mxu0 %v1766
        %1768 = vmatprep.subr.mxu0 0.0
        %v1769 = vand.u32 %v1619, 4294901760
        %v1770 = vsub.f32 %v1619, %v1769
        %v1771 = vand.u32 %v1770, 4294901760
        %v1772 = vsub.f32 %v1770, %v1771
        %v1773 = vand.u32 %v1772, 4294901760
        %1774 = vmatpush1.msra.mxu0 %v1773
        %1775 = vmatprep.subr.mxu0 0.0
        %v1776 = vand.u32 %v1619, 4294901760
        %v1777 = vsub.f32 %v1619, %v1776
        %v1778 = vand.u32 %v1777, 4294901760
        %v1779 = vsub.f32 %v1777, %v1778
        %v1780 = vand.u32 %v1779, 4294901760
        %1781 = vmatpush1.msra.mxu0 %v1780
        %1782 = vmatprep.subr.mxu0 0.0
        %v1783 = vand.u32 %v1619, 4294901760
        %v1784 = vsub.f32 %v1619, %v1783
        %v1785 = vand.u32 %v1784, 4294901760
        %v1786 = vsub.f32 %v1784, %v1785
        %v1787 = vand.u32 %v1786, 4294901760
        %1788 = vmatpush1.msra.mxu0 %v1787
        %1789 = vmatprep.subr.mxu0 0.0
        %v1790 = vand.u32 %v1619, 4294901760
        %v1791 = vsub.f32 %v1619, %v1790
        %v1792 = vand.u32 %v1791, 4294901760
        %v1793 = vsub.f32 %v1791, %v1792
        %v1794 = vand.u32 %v1793, 4294901760
        %1795 = vmatpush1.msra.mxu0 %v1794
        %1796 = vmatprep.subr.mxu0 0.0
        %v1797 = vand.u32 %v1619, 4294901760
        %v1798 = vsub.f32 %v1619, %v1797
        %v1799 = vand.u32 %v1798, 4294901760
        %v1800 = vsub.f32 %v1798, %v1799
        %v1801 = vand.u32 %v1800, 4294901760
        %1802 = vmatpush1.msra.mxu0 %v1801
        %1803 = vmatprep.subr.mxu0 0.0
        %v1804 = vand.u32 %v1619, 4294901760
        %v1805 = vsub.f32 %v1619, %v1804
        %v1806 = vand.u32 %v1805, 4294901760
        %v1807 = vsub.f32 %v1805, %v1806
        %v1808 = vand.u32 %v1807, 4294901760
        %1809 = vmatpush1.msra.mxu0 %v1808
        %1810 = vmatprep.subr.mxu0 0.0
        %v1811 = vand.u32 %v1619, 4294901760
        %v1812 = vsub.f32 %v1619, %v1811
        %v1813 = vand.u32 %v1812, 4294901760
        %v1814 = vsub.f32 %v1812, %v1813
        %v1815 = vand.u32 %v1814, 4294901760
        %1816 = vmatpush1.msra.mxu0 %v1815
        %1817 = vmatprep.subr.mxu0 0.0
        %v1818 = vand.u32 %v1619, 4294901760
        %v1819 = vsub.f32 %v1619, %v1818
        %v1820 = vand.u32 %v1819, 4294901760
        %v1821 = vsub.f32 %v1819, %v1820
        %v1822 = vand.u32 %v1821, 4294901760
        %1823 = vmatpush1.msra.mxu0 %v1822
        %1824 = vmatprep.subr.mxu0 0.0
        %1825 = vmatpush1.msra.mxu0 0.0
        %1826 = vmatprep.subr.mxu0 0.0
        %1827 = vmatpush1.msra.mxu0 0.0
        %1828 = vmatprep.subr.mxu0 0.0
        %1829 = vmatpush1.msra.mxu0 0.0
        %1830 = vmatprep.subr.mxu0 0.0
        %1831 = vmatpush1.msra.mxu0 0.0
        %1832 = vmatprep.subr.mxu0 0.0
        %1833 = vmatpush1.msra.mxu0 0.0
        %1834 = vmatprep.subr.mxu0 0.0
        %1835 = vmatpush1.msra.mxu0 0.0
        %1836 = vmatprep.subr.mxu0 0.0
        %1837 = vmatpush1.msra.mxu0 0.0
        %1838 = vmatprep.subr.mxu0 0.0
        %1839 = vmatpush1.msra.mxu0 0.0
        %1840 = vmatprep.subr.mxu0 0.0
        %1841 = vmatpush1.msra.mxu0 0.0
        %1842 = vmatprep.subr.mxu0 0.0
        %1843 = vmatpush1.msra.mxu0 0.0
        %1844 = vmatprep.subr.mxu0 0.0
        %1845 = vmatpush1.msra.mxu0 0.0
        %1846 = vmatprep.subr.mxu0 0.0
        %1847 = vmatpush1.msra.mxu0 0.0
        %1848 = vmatprep.subr.mxu0 0.0
        %1849 = vmatpush1.msra.mxu0 0.0
        %1850 = vmatprep.subr.mxu0 0.0
        %1851 = vmatpush1.msra.mxu0 0.0
        %1852 = vmatprep.subr.mxu0 0.0
        %1853 = vmatpush1.msra.mxu0 0.0
        %1854 = vmatprep.subr.mxu0 0.0
        %1855 = vmatpush1.msra.mxu0 0.0
        %1856 = vmatprep.mubr.f32.mxu0 0.0
        %v1857 = vand.u32 %v1620, 4294901760
        %1858 = vmatmul.mubr.f32.gmra.mrb[0].mxu0 %v1857
        %v1859 = vpop.f32.mrb[0].mxu0
        %v1860 = vadd.f32 %v1709, %v1859
        %v1861 = vpop.f32.mrb[0].mxu0
        %1862 = vdwg.mxu0
        %1863 = vmatprep.subr.mxu0 0.0
        %v1864 = vand.u32 %v1619, 4294901760
        %v1865 = vsub.f32 %v1619, %v1864
        %1866 = vmatpush1.msra.mxu0 %v1865
        %1867 = vmatprep.subr.mxu0 0.0
        %v1868 = vand.u32 %v1619, 4294901760
        %v1869 = vsub.f32 %v1619, %v1868
        %1870 = vmatpush1.msra.mxu0 %v1869
        %1871 = vmatprep.subr.mxu0 0.0
        %v1872 = vand.u32 %v1619, 4294901760
        %v1873 = vsub.f32 %v1619, %v1872
        %1874 = vmatpush1.msra.mxu0 %v1873
        %1875 = vmatprep.subr.mxu0 0.0
        %v1876 = vand.u32 %v1619, 4294901760
        %v1877 = vsub.f32 %v1619, %v1876
        %1878 = vmatpush1.msra.mxu0 %v1877
        %1879 = vmatprep.subr.mxu0 0.0
        %v1880 = vand.u32 %v1619, 4294901760
        %v1881 = vsub.f32 %v1619, %v1880
        %1882 = vmatpush1.msra.mxu0 %v1881
        %1883 = vmatprep.subr.mxu0 0.0
        %v1884 = vand.u32 %v1619, 4294901760
        %v1885 = vsub.f32 %v1619, %v1884
        %1886 = vmatpush1.msra.mxu0 %v1885
        %1887 = vmatprep.subr.mxu0 0.0
        %v1888 = vand.u32 %v1619, 4294901760
        %v1889 = vsub.f32 %v1619, %v1888
        %1890 = vmatpush1.msra.mxu0 %v1889
        %1891 = vmatprep.subr.mxu0 0.0
        %v1892 = vand.u32 %v1619, 4294901760
        %v1893 = vsub.f32 %v1619, %v1892
        %1894 = vmatpush1.msra.mxu0 %v1893
        %1895 = vmatprep.subr.mxu0 0.0
        %v1896 = vand.u32 %v1619, 4294901760
        %v1897 = vsub.f32 %v1619, %v1896
        %1898 = vmatpush1.msra.mxu0 %v1897
        %1899 = vmatprep.subr.mxu0 0.0
        %v1900 = vand.u32 %v1619, 4294901760
        %v1901 = vsub.f32 %v1619, %v1900
        %1902 = vmatpush1.msra.mxu0 %v1901
        %1903 = vmatprep.subr.mxu0 0.0
        %v1904 = vand.u32 %v1619, 4294901760
        %v1905 = vsub.f32 %v1619, %v1904
        %1906 = vmatpush1.msra.mxu0 %v1905
        %1907 = vmatprep.subr.mxu0 0.0
        %v1908 = vand.u32 %v1619, 4294901760
        %v1909 = vsub.f32 %v1619, %v1908
        %1910 = vmatpush1.msra.mxu0 %v1909
        %1911 = vmatprep.subr.mxu0 0.0
        %v1912 = vand.u32 %v1619, 4294901760
        %v1913 = vsub.f32 %v1619, %v1912
        %1914 = vmatpush1.msra.mxu0 %v1913
        %1915 = vmatprep.subr.mxu0 0.0
        %v1916 = vand.u32 %v1619, 4294901760
        %v1917 = vsub.f32 %v1619, %v1916
        %1918 = vmatpush1.msra.mxu0 %v1917
        %1919 = vmatprep.subr.mxu0 0.0
        %v1920 = vand.u32 %v1619, 4294901760
        %v1921 = vsub.f32 %v1619, %v1920
        %1922 = vmatpush1.msra.mxu0 %v1921
        %1923 = vmatprep.subr.mxu0 0.0
        %v1924 = vand.u32 %v1619, 4294901760
        %v1925 = vsub.f32 %v1619, %v1924
        %1926 = vmatpush1.msra.mxu0 %v1925
        %1927 = vmatprep.subr.mxu0 0.0
        %1928 = vmatpush1.msra.mxu0 0.0
        %1929 = vmatprep.subr.mxu0 0.0
        %1930 = vmatpush1.msra.mxu0 0.0
        %1931 = vmatprep.subr.mxu0 0.0
        %1932 = vmatpush1.msra.mxu0 0.0
        %1933 = vmatprep.subr.mxu0 0.0
        %1934 = vmatpush1.msra.mxu0 0.0
        %1935 = vmatprep.subr.mxu0 0.0
        %1936 = vmatpush1.msra.mxu0 0.0
        %1937 = vmatprep.subr.mxu0 0.0
        %1938 = vmatpush1.msra.mxu0 0.0
        %1939 = vmatprep.subr.mxu0 0.0
        %1940 = vmatpush1.msra.mxu0 0.0
        %1941 = vmatprep.subr.mxu0 0.0
        %1942 = vmatpush1.msra.mxu0 0.0
        %1943 = vmatprep.subr.mxu0 0.0
        %1944 = vmatpush1.msra.mxu0 0.0
        %1945 = vmatprep.subr.mxu0 0.0
        %1946 = vmatpush1.msra.mxu0 0.0
        %1947 = vmatprep.subr.mxu0 0.0
        %1948 = vmatpush1.msra.mxu0 0.0
        %1949 = vmatprep.subr.mxu0 0.0
        %1950 = vmatpush1.msra.mxu0 0.0
        %1951 = vmatprep.subr.mxu0 0.0
        %1952 = vmatpush1.msra.mxu0 0.0
        %1953 = vmatprep.subr.mxu0 0.0
        %1954 = vmatpush1.msra.mxu0 0.0
        %1955 = vmatprep.subr.mxu0 0.0
        %1956 = vmatpush1.msra.mxu0 0.0
        %1957 = vmatprep.subr.mxu0 0.0
        %1958 = vmatpush1.msra.mxu0 0.0
        %1959 = vmatprep.mubr.f32.mxu0 0.0
        %v1960 = vand.u32 %v1620, 4294901760
        %v1961 = vsub.f32 %v1620, %v1960
        %1962 = vmatmul.mubr.f32.gmra.mrb[0].mxu0 %v1961
        %v1963 = vpop.f32.mrb[0].mxu0
        %v1964 = vadd.f32 %v1860, %v1963
        %v1965 = vpop.f32.mrb[0].mxu0
        %1966 = vdwg.mxu0
        %1967 = vmatprep.subr.mxu0 0.0
        %v1968 = vand.u32 %v1619, 4294901760
        %1969 = vmatpush1.msra.mxu0 %v1968
        %1970 = vmatprep.subr.mxu0 0.0
        %v1971 = vand.u32 %v1619, 4294901760
        %1972 = vmatpush1.msra.mxu0 %v1971
        %1973 = vmatprep.subr.mxu0 0.0
        %v1974 = vand.u32 %v1619, 4294901760
        %1975 = vmatpush1.msra.mxu0 %v1974
        %1976 = vmatprep.subr.mxu0 0.0
        %v1977 = vand.u32 %v1619, 4294901760
        %1978 = vmatpush1.msra.mxu0 %v1977
        %1979 = vmatprep.subr.mxu0 0.0
        %v1980 = vand.u32 %v1619, 4294901760
        %1981 = vmatpush1.msra.mxu0 %v1980
        %1982 = vmatprep.subr.mxu0 0.0
        %v1983 = vand.u32 %v1619, 4294901760
        %1984 = vmatpush1.msra.mxu0 %v1983
        %1985 = vmatprep.subr.mxu0 0.0
        %v1986 = vand.u32 %v1619, 4294901760
        %1987 = vmatpush1.msra.mxu0 %v1986
        %1988 = vmatprep.subr.mxu0 0.0
        %v1989 = vand.u32 %v1619, 4294901760
        %1990 = vmatpush1.msra.mxu0 %v1989
        %1991 = vmatprep.subr.mxu0 0.0
        %v1992 = vand.u32 %v1619, 4294901760
        %1993 = vmatpush1.msra.mxu0 %v1992
        %1994 = vmatprep.subr.mxu0 0.0
        %v1995 = vand.u32 %v1619, 4294901760
        %1996 = vmatpush1.msra.mxu0 %v1995
        %1997 = vmatprep.subr.mxu0 0.0
        %v1998 = vand.u32 %v1619, 4294901760
        %1999 = vmatpush1.msra.mxu0 %v1998
        %2000 = vmatprep.subr.mxu0 0.0
        %v2001 = vand.u32 %v1619, 4294901760
        %2002 = vmatpush1.msra.mxu0 %v2001
        %2003 = vmatprep.subr.mxu0 0.0
        %v2004 = vand.u32 %v1619, 4294901760
        %2005 = vmatpush1.msra.mxu0 %v2004
        %2006 = vmatprep.subr.mxu0 0.0
        %v2007 = vand.u32 %v1619, 4294901760
        %2008 = vmatpush1.msra.mxu0 %v2007
        %2009 = vmatprep.subr.mxu0 0.0
        %v2010 = vand.u32 %v1619, 4294901760
        %2011 = vmatpush1.msra.mxu0 %v2010
        %2012 = vmatprep.subr.mxu0 0.0
        %v2013 = vand.u32 %v1619, 4294901760
        %2014 = vmatpush1.msra.mxu0 %v2013
        %2015 = vmatprep.subr.mxu0 0.0
        %2016 = vmatpush1.msra.mxu0 0.0
        %2017 = vmatprep.subr.mxu0 0.0
        %2018 = vmatpush1.msra.mxu0 0.0
        %2019 = vmatprep.subr.mxu0 0.0
        %2020 = vmatpush1.msra.mxu0 0.0
        %2021 = vmatprep.subr.mxu0 0.0
        %2022 = vmatpush1.msra.mxu0 0.0
        %2023 = vmatprep.subr.mxu0 0.0
        %2024 = vmatpush1.msra.mxu0 0.0
        %2025 = vmatprep.subr.mxu0 0.0
        %2026 = vmatpush1.msra.mxu0 0.0
        %2027 = vmatprep.subr.mxu0 0.0
        %2028 = vmatpush1.msra.mxu0 0.0
        %2029 = vmatprep.subr.mxu0 0.0
        %2030 = vmatpush1.msra.mxu0 0.0
        %2031 = vmatprep.subr.mxu0 0.0
        %2032 = vmatpush1.msra.mxu0 0.0
        %2033 = vmatprep.subr.mxu0 0.0
        %2034 = vmatpush1.msra.mxu0 0.0
        %2035 = vmatprep.subr.mxu0 0.0
        %2036 = vmatpush1.msra.mxu0 0.0
        %2037 = vmatprep.subr.mxu0 0.0
        %2038 = vmatpush1.msra.mxu0 0.0
        %2039 = vmatprep.subr.mxu0 0.0
        %2040 = vmatpush1.msra.mxu0 0.0
        %2041 = vmatprep.subr.mxu0 0.0
        %2042 = vmatpush1.msra.mxu0 0.0
        %2043 = vmatprep.subr.mxu0 0.0
        %2044 = vmatpush1.msra.mxu0 0.0
        %2045 = vmatprep.subr.mxu0 0.0
        %2046 = vmatpush1.msra.mxu0 0.0
        %2047 = vmatprep.mubr.f32.mxu0 0.0
        %v2048 = vand.u32 %v1620, 4294901760
        %v2049 = vsub.f32 %v1620, %v2048
        %v2050 = vand.u32 %v2049, 4294901760
        %2051 = vmatmul.mubr.f32.gmra.mrb[0].mxu0 %v2050
        %v2052 = vpop.f32.mrb[0].mxu0
        %v2053 = vadd.f32 %v1964, %v2052
        %v2054 = vpop.f32.mrb[0].mxu0
        %2055 = vdwg.mxu0
        %2056 = vmatprep.subr.mxu0 0.0
        %v2057 = vand.u32 %v1619, 4294901760
        %v2058 = vsub.f32 %v1619, %v2057
        %v2059 = vand.u32 %v2058, 4294901760
        %2060 = vmatpush1.msra.mxu0 %v2059
        %2061 = vmatprep.subr.mxu0 0.0
        %v2062 = vand.u32 %v1619, 4294901760
        %v2063 = vsub.f32 %v1619, %v2062
        %v2064 = vand.u32 %v2063, 4294901760
        %2065 = vmatpush1.msra.mxu0 %v2064
        %2066 = vmatprep.subr.mxu0 0.0
        %v2067 = vand.u32 %v1619, 4294901760
        %v2068 = vsub.f32 %v1619, %v2067
        %v2069 = vand.u32 %v2068, 4294901760
        %2070 = vmatpush1.msra.mxu0 %v2069
        %2071 = vmatprep.subr.mxu0 0.0
        %v2072 = vand.u32 %v1619, 4294901760
        %v2073 = vsub.f32 %v1619, %v2072
        %v2074 = vand.u32 %v2073, 4294901760
        %2075 = vmatpush1.msra.mxu0 %v2074
        %2076 = vmatprep.subr.mxu0 0.0
        %v2077 = vand.u32 %v1619, 4294901760
        %v2078 = vsub.f32 %v1619, %v2077
        %v2079 = vand.u32 %v2078, 4294901760
        %2080 = vmatpush1.msra.mxu0 %v2079
        %2081 = vmatprep.subr.mxu0 0.0
        %v2082 = vand.u32 %v1619, 4294901760
        %v2083 = vsub.f32 %v1619, %v2082
        %v2084 = vand.u32 %v2083, 4294901760
        %2085 = vmatpush1.msra.mxu0 %v2084
        %2086 = vmatprep.subr.mxu0 0.0
        %v2087 = vand.u32 %v1619, 4294901760
        %v2088 = vsub.f32 %v1619, %v2087
        %v2089 = vand.u32 %v2088, 4294901760
        %2090 = vmatpush1.msra.mxu0 %v2089
        %2091 = vmatprep.subr.mxu0 0.0
        %v2092 = vand.u32 %v1619, 4294901760
        %v2093 = vsub.f32 %v1619, %v2092
        %v2094 = vand.u32 %v2093, 4294901760
        %2095 = vmatpush1.msra.mxu0 %v2094
        %2096 = vmatprep.subr.mxu0 0.0
        %v2097 = vand.u32 %v1619, 4294901760
        %v2098 = vsub.f32 %v1619, %v2097
        %v2099 = vand.u32 %v2098, 4294901760
        %2100 = vmatpush1.msra.mxu0 %v2099
        %2101 = vmatprep.subr.mxu0 0.0
        %v2102 = vand.u32 %v1619, 4294901760
        %v2103 = vsub.f32 %v1619, %v2102
        %v2104 = vand.u32 %v2103, 4294901760
        %2105 = vmatpush1.msra.mxu0 %v2104
        %2106 = vmatprep.subr.mxu0 0.0
        %v2107 = vand.u32 %v1619, 4294901760
        %v2108 = vsub.f32 %v1619, %v2107
        %v2109 = vand.u32 %v2108, 4294901760
        %2110 = vmatpush1.msra.mxu0 %v2109
        %2111 = vmatprep.subr.mxu0 0.0
        %v2112 = vand.u32 %v1619, 4294901760
        %v2113 = vsub.f32 %v1619, %v2112
        %v2114 = vand.u32 %v2113, 4294901760
        %2115 = vmatpush1.msra.mxu0 %v2114
        %2116 = vmatprep.subr.mxu0 0.0
        %v2117 = vand.u32 %v1619, 4294901760
        %v2118 = vsub.f32 %v1619, %v2117
        %v2119 = vand.u32 %v2118, 4294901760
        %2120 = vmatpush1.msra.mxu0 %v2119
        %2121 = vmatprep.subr.mxu0 0.0
        %v2122 = vand.u32 %v1619, 4294901760
        %v2123 = vsub.f32 %v1619, %v2122
        %v2124 = vand.u32 %v2123, 4294901760
        %2125 = vmatpush1.msra.mxu0 %v2124
        %2126 = vmatprep.subr.mxu0 0.0
        %v2127 = vand.u32 %v1619, 4294901760
        %v2128 = vsub.f32 %v1619, %v2127
        %v2129 = vand.u32 %v2128, 4294901760
        %2130 = vmatpush1.msra.mxu0 %v2129
        %2131 = vmatprep.subr.mxu0 0.0
        %v2132 = vand.u32 %v1619, 4294901760
        %v2133 = vsub.f32 %v1619, %v2132
        %v2134 = vand.u32 %v2133, 4294901760
        %2135 = vmatpush1.msra.mxu0 %v2134
        %2136 = vmatprep.subr.mxu0 0.0
        %2137 = vmatpush1.msra.mxu0 0.0
        %2138 = vmatprep.subr.mxu0 0.0
        %2139 = vmatpush1.msra.mxu0 0.0
        %2140 = vmatprep.subr.mxu0 0.0
        %2141 = vmatpush1.msra.mxu0 0.0
        %2142 = vmatprep.subr.mxu0 0.0
        %2143 = vmatpush1.msra.mxu0 0.0
        %2144 = vmatprep.subr.mxu0 0.0
        %2145 = vmatpush1.msra.mxu0 0.0
        %2146 = vmatprep.subr.mxu0 0.0
        %2147 = vmatpush1.msra.mxu0 0.0
        %2148 = vmatprep.subr.mxu0 0.0
        %2149 = vmatpush1.msra.mxu0 0.0
        %2150 = vmatprep.subr.mxu0 0.0
        %2151 = vmatpush1.msra.mxu0 0.0
        %2152 = vmatprep.subr.mxu0 0.0
        %2153 = vmatpush1.msra.mxu0 0.0
        %2154 = vmatprep.subr.mxu0 0.0
        %2155 = vmatpush1.msra.mxu0 0.0
        %2156 = vmatprep.subr.mxu0 0.0
        %2157 = vmatpush1.msra.mxu0 0.0
        %2158 = vmatprep.subr.mxu0 0.0
        %2159 = vmatpush1.msra.mxu0 0.0
        %2160 = vmatprep.subr.mxu0 0.0
        %2161 = vmatpush1.msra.mxu0 0.0
        %2162 = vmatprep.subr.mxu0 0.0
        %2163 = vmatpush1.msra.mxu0 0.0
        %2164 = vmatprep.subr.mxu0 0.0
        %2165 = vmatpush1.msra.mxu0 0.0
        %2166 = vmatprep.subr.mxu0 0.0
        %2167 = vmatpush1.msra.mxu0 0.0
        %2168 = vmatprep.mubr.f32.mxu0 0.0
        %v2169 = vand.u32 %v1620, 4294901760
        %2170 = vmatmul.mubr.f32.gmra.mrb[0].mxu0 %v2169
        %v2171 = vpop.f32.mrb[0].mxu0
        %v2172 = vadd.f32 %v2053, %v2171
        %v2173 = vpop.f32.mrb[0].mxu0
        %2174 = vdwg.mxu0
        %2175 = vmatprep.subr.mxu0 0.0
        %v2176 = vand.u32 %v1619, 4294901760
        %2177 = vmatpush1.msra.mxu0 %v2176
        %2178 = vmatprep.subr.mxu0 0.0
        %v2179 = vand.u32 %v1619, 4294901760
        %2180 = vmatpush1.msra.mxu0 %v2179
        %2181 = vmatprep.subr.mxu0 0.0
        %v2182 = vand.u32 %v1619, 4294901760
        %2183 = vmatpush1.msra.mxu0 %v2182
        %2184 = vmatprep.subr.mxu0 0.0
        %v2185 = vand.u32 %v1619, 4294901760
        %2186 = vmatpush1.msra.mxu0 %v2185
        %2187 = vmatprep.subr.mxu0 0.0
        %v2188 = vand.u32 %v1619, 4294901760
        %2189 = vmatpush1.msra.mxu0 %v2188
        %2190 = vmatprep.subr.mxu0 0.0
        %v2191 = vand.u32 %v1619, 4294901760
        %2192 = vmatpush1.msra.mxu0 %v2191
        %2193 = vmatprep.subr.mxu0 0.0
        %v2194 = vand.u32 %v1619, 4294901760
        %2195 = vmatpush1.msra.mxu0 %v2194
        %2196 = vmatprep.subr.mxu0 0.0
        %v2197 = vand.u32 %v1619, 4294901760
        %2198 = vmatpush1.msra.mxu0 %v2197
        %2199 = vmatprep.subr.mxu0 0.0
        %v2200 = vand.u32 %v1619, 4294901760
        %2201 = vmatpush1.msra.mxu0 %v2200
        %2202 = vmatprep.subr.mxu0 0.0
        %v2203 = vand.u32 %v1619, 4294901760
        %2204 = vmatpush1.msra.mxu0 %v2203
        %2205 = vmatprep.subr.mxu0 0.0
        %v2206 = vand.u32 %v1619, 4294901760
        %2207 = vmatpush1.msra.mxu0 %v2206
        %2208 = vmatprep.subr.mxu0 0.0
        %v2209 = vand.u32 %v1619, 4294901760
        %2210 = vmatpush1.msra.mxu0 %v2209
        %2211 = vmatprep.subr.mxu0 0.0
        %v2212 = vand.u32 %v1619, 4294901760
        %2213 = vmatpush1.msra.mxu0 %v2212
        %2214 = vmatprep.subr.mxu0 0.0
        %v2215 = vand.u32 %v1619, 4294901760
        %2216 = vmatpush1.msra.mxu0 %v2215
        %2217 = vmatprep.subr.mxu0 0.0
        %v2218 = vand.u32 %v1619, 4294901760
        %2219 = vmatpush1.msra.mxu0 %v2218
        %2220 = vmatprep.subr.mxu0 0.0
        %v2221 = vand.u32 %v1619, 4294901760
        %2222 = vmatpush1.msra.mxu0 %v2221
        %2223 = vmatprep.subr.mxu0 0.0
        %2224 = vmatpush1.msra.mxu0 0.0
        %2225 = vmatprep.subr.mxu0 0.0
        %2226 = vmatpush1.msra.mxu0 0.0
        %2227 = vmatprep.subr.mxu0 0.0
        %2228 = vmatpush1.msra.mxu0 0.0
        %2229 = vmatprep.subr.mxu0 0.0
        %2230 = vmatpush1.msra.mxu0 0.0
        %2231 = vmatprep.subr.mxu0 0.0
        %2232 = vmatpush1.msra.mxu0 0.0
        %2233 = vmatprep.subr.mxu0 0.0
        %2234 = vmatpush1.msra.mxu0 0.0
        %2235 = vmatprep.subr.mxu0 0.0
        %2236 = vmatpush1.msra.mxu0 0.0
        %2237 = vmatprep.subr.mxu0 0.0
        %2238 = vmatpush1.msra.mxu0 0.0
        %2239 = vmatprep.subr.mxu0 0.0
        %2240 = vmatpush1.msra.mxu0 0.0
        %2241 = vmatprep.subr.mxu0 0.0
        %2242 = vmatpush1.msra.mxu0 0.0
        %2243 = vmatprep.subr.mxu0 0.0
        %2244 = vmatpush1.msra.mxu0 0.0
        %2245 = vmatprep.subr.mxu0 0.0
        %2246 = vmatpush1.msra.mxu0 0.0
        %2247 = vmatprep.subr.mxu0 0.0
        %2248 = vmatpush1.msra.mxu0 0.0
        %2249 = vmatprep.subr.mxu0 0.0
        %2250 = vmatpush1.msra.mxu0 0.0
        %2251 = vmatprep.subr.mxu0 0.0
        %2252 = vmatpush1.msra.mxu0 0.0
        %2253 = vmatprep.subr.mxu0 0.0
        %2254 = vmatpush1.msra.mxu0 0.0
        %2255 = vmatprep.mubr.f32.mxu0 0.0
        %v2256 = vand.u32 %v1620, 4294901760
        %2257 = vmatmul.mubr.f32.gmra.mrb[0].mxu0 %v2256
        %v2258 = vpop.f32.mrb[0].mxu0
        %v2259 = vadd.f32 %v2172, %v2258
        %v2260 = vpop.f32.mrb[0].mxu0
        %2261 = vdwg.mxu0
        %v2262 = vadd.f32 %v1614, %v2259
        %vm2263 = vcmp.eq.s32.totalorder %v326, 3
        %v2264 = vsel %vm2263, 1, 0
        %v2265 = vcvt.s32.f32 %v2264
        %v2266 = vmul.f32 %v321, %v321
        %2267 = vmatprep.subr.mxu0 0.0
        %v2268 = vand.u32 %v2265, 4294901760
        %2269 = vmatpush1.msra.mxu0 %v2268
        %2270 = vmatprep.subr.mxu0 0.0
        %v2271 = vand.u32 %v2265, 4294901760
        %2272 = vmatpush1.msra.mxu0 %v2271
        %2273 = vmatprep.subr.mxu0 0.0
        %v2274 = vand.u32 %v2265, 4294901760
        %2275 = vmatpush1.msra.mxu0 %v2274
        %2276 = vmatprep.subr.mxu0 0.0
        %v2277 = vand.u32 %v2265, 4294901760
        %2278 = vmatpush1.msra.mxu0 %v2277
        %2279 = vmatprep.subr.mxu0 0.0
        %v2280 = vand.u32 %v2265, 4294901760
        %2281 = vmatpush1.msra.mxu0 %v2280
        %2282 = vmatprep.subr.mxu0 0.0
        %v2283 = vand.u32 %v2265, 4294901760
        %2284 = vmatpush1.msra.mxu0 %v2283
        %2285 = vmatprep.subr.mxu0 0.0
        %v2286 = vand.u32 %v2265, 4294901760
        %2287 = vmatpush1.msra.mxu0 %v2286
        %2288 = vmatprep.subr.mxu0 0.0
        %v2289 = vand.u32 %v2265, 4294901760
        %2290 = vmatpush1.msra.mxu0 %v2289
        %2291 = vmatprep.subr.mxu0 0.0
        %v2292 = vand.u32 %v2265, 4294901760
        %2293 = vmatpush1.msra.mxu0 %v2292
        %2294 = vmatprep.subr.mxu0 0.0
        %v2295 = vand.u32 %v2265, 4294901760
        %2296 = vmatpush1.msra.mxu0 %v2295
        %2297 = vmatprep.subr.mxu0 0.0
        %v2298 = vand.u32 %v2265, 4294901760
        %2299 = vmatpush1.msra.mxu0 %v2298
        %2300 = vmatprep.subr.mxu0 0.0
        %v2301 = vand.u32 %v2265, 4294901760
        %2302 = vmatpush1.msra.mxu0 %v2301
        %2303 = vmatprep.subr.mxu0 0.0
        %v2304 = vand.u32 %v2265, 4294901760
        %2305 = vmatpush1.msra.mxu0 %v2304
        %2306 = vmatprep.subr.mxu0 0.0
        %v2307 = vand.u32 %v2265, 4294901760
        %2308 = vmatpush1.msra.mxu0 %v2307
        %2309 = vmatprep.subr.mxu0 0.0
        %v2310 = vand.u32 %v2265, 4294901760
        %2311 = vmatpush1.msra.mxu0 %v2310
        %2312 = vmatprep.subr.mxu0 0.0
        %v2313 = vand.u32 %v2265, 4294901760
        %2314 = vmatpush1.msra.mxu0 %v2313
        %2315 = vmatprep.subr.mxu0 0.0
        %2316 = vmatpush1.msra.mxu0 0.0
        %2317 = vmatprep.subr.mxu0 0.0
        %2318 = vmatpush1.msra.mxu0 0.0
        %2319 = vmatprep.subr.mxu0 0.0
        %2320 = vmatpush1.msra.mxu0 0.0
        %2321 = vmatprep.subr.mxu0 0.0
        %2322 = vmatpush1.msra.mxu0 0.0
        %2323 = vmatprep.subr.mxu0 0.0
        %2324 = vmatpush1.msra.mxu0 0.0
        %2325 = vmatprep.subr.mxu0 0.0
        %2326 = vmatpush1.msra.mxu0 0.0
        %2327 = vmatprep.subr.mxu0 0.0
        %2328 = vmatpush1.msra.mxu0 0.0
        %2329 = vmatprep.subr.mxu0 0.0
        %2330 = vmatpush1.msra.mxu0 0.0
        %2331 = vmatprep.subr.mxu0 0.0
        %2332 = vmatpush1.msra.mxu0 0.0
        %2333 = vmatprep.subr.mxu0 0.0
        %2334 = vmatpush1.msra.mxu0 0.0
        %2335 = vmatprep.subr.mxu0 0.0
        %2336 = vmatpush1.msra.mxu0 0.0
        %2337 = vmatprep.subr.mxu0 0.0
        %2338 = vmatpush1.msra.mxu0 0.0
        %2339 = vmatprep.subr.mxu0 0.0
        %2340 = vmatpush1.msra.mxu0 0.0
        %2341 = vmatprep.subr.mxu0 0.0
        %2342 = vmatpush1.msra.mxu0 0.0
        %2343 = vmatprep.subr.mxu0 0.0
        %2344 = vmatpush1.msra.mxu0 0.0
        %2345 = vmatprep.subr.mxu0 0.0
        %2346 = vmatpush1.msra.mxu0 0.0
        %2347 = vmatprep.mubr.f32.mxu0 0.0
        %v2348 = vand.u32 %v2266, 4294901760
        %v2349 = vsub.f32 %v2266, %v2348
        %v2350 = vand.u32 %v2349, 4294901760
        %v2351 = vsub.f32 %v2349, %v2350
        %v2352 = vand.u32 %v2351, 4294901760
        %2353 = vmatmul.mubr.f32.gmra.mrb[0].mxu0 %v2352
        %v2354 = vpop.f32.mrb[0].mxu0
        %v2355 = vadd.f32 0.0, %v2354
        %v2356 = vpop.f32.mrb[0].mxu0
        %2357 = vdwg.mxu0
        %2358 = vmatprep.subr.mxu0 0.0
        %v2359 = vand.u32 %v2265, 4294901760
        %v2360 = vsub.f32 %v2265, %v2359
        %v2361 = vand.u32 %v2360, 4294901760
        %v2362 = vsub.f32 %v2360, %v2361
        %v2363 = vand.u32 %v2362, 4294901760
        %2364 = vmatpush1.msra.mxu0 %v2363
        %2365 = vmatprep.subr.mxu0 0.0
        %v2366 = vand.u32 %v2265, 4294901760
        %v2367 = vsub.f32 %v2265, %v2366
        %v2368 = vand.u32 %v2367, 4294901760
        %v2369 = vsub.f32 %v2367, %v2368
        %v2370 = vand.u32 %v2369, 4294901760
        %2371 = vmatpush1.msra.mxu0 %v2370
        %2372 = vmatprep.subr.mxu0 0.0
        %v2373 = vand.u32 %v2265, 4294901760
        %v2374 = vsub.f32 %v2265, %v2373
        %v2375 = vand.u32 %v2374, 4294901760
        %v2376 = vsub.f32 %v2374, %v2375
        %v2377 = vand.u32 %v2376, 4294901760
        %2378 = vmatpush1.msra.mxu0 %v2377
        %2379 = vmatprep.subr.mxu0 0.0
        %v2380 = vand.u32 %v2265, 4294901760
        %v2381 = vsub.f32 %v2265, %v2380
        %v2382 = vand.u32 %v2381, 4294901760
        %v2383 = vsub.f32 %v2381, %v2382
        %v2384 = vand.u32 %v2383, 4294901760
        %2385 = vmatpush1.msra.mxu0 %v2384
        %2386 = vmatprep.subr.mxu0 0.0
        %v2387 = vand.u32 %v2265, 4294901760
        %v2388 = vsub.f32 %v2265, %v2387
        %v2389 = vand.u32 %v2388, 4294901760
        %v2390 = vsub.f32 %v2388, %v2389
        %v2391 = vand.u32 %v2390, 4294901760
        %2392 = vmatpush1.msra.mxu0 %v2391
        %2393 = vmatprep.subr.mxu0 0.0
        %v2394 = vand.u32 %v2265, 4294901760
        %v2395 = vsub.f32 %v2265, %v2394
        %v2396 = vand.u32 %v2395, 4294901760
        %v2397 = vsub.f32 %v2395, %v2396
        %v2398 = vand.u32 %v2397, 4294901760
        %2399 = vmatpush1.msra.mxu0 %v2398
        %2400 = vmatprep.subr.mxu0 0.0
        %v2401 = vand.u32 %v2265, 4294901760
        %v2402 = vsub.f32 %v2265, %v2401
        %v2403 = vand.u32 %v2402, 4294901760
        %v2404 = vsub.f32 %v2402, %v2403
        %v2405 = vand.u32 %v2404, 4294901760
        %2406 = vmatpush1.msra.mxu0 %v2405
        %2407 = vmatprep.subr.mxu0 0.0
        %v2408 = vand.u32 %v2265, 4294901760
        %v2409 = vsub.f32 %v2265, %v2408
        %v2410 = vand.u32 %v2409, 4294901760
        %v2411 = vsub.f32 %v2409, %v2410
        %v2412 = vand.u32 %v2411, 4294901760
        %2413 = vmatpush1.msra.mxu0 %v2412
        %2414 = vmatprep.subr.mxu0 0.0
        %v2415 = vand.u32 %v2265, 4294901760
        %v2416 = vsub.f32 %v2265, %v2415
        %v2417 = vand.u32 %v2416, 4294901760
        %v2418 = vsub.f32 %v2416, %v2417
        %v2419 = vand.u32 %v2418, 4294901760
        %2420 = vmatpush1.msra.mxu0 %v2419
        %2421 = vmatprep.subr.mxu0 0.0
        %v2422 = vand.u32 %v2265, 4294901760
        %v2423 = vsub.f32 %v2265, %v2422
        %v2424 = vand.u32 %v2423, 4294901760
        %v2425 = vsub.f32 %v2423, %v2424
        %v2426 = vand.u32 %v2425, 4294901760
        %2427 = vmatpush1.msra.mxu0 %v2426
        %2428 = vmatprep.subr.mxu0 0.0
        %v2429 = vand.u32 %v2265, 4294901760
        %v2430 = vsub.f32 %v2265, %v2429
        %v2431 = vand.u32 %v2430, 4294901760
        %v2432 = vsub.f32 %v2430, %v2431
        %v2433 = vand.u32 %v2432, 4294901760
        %2434 = vmatpush1.msra.mxu0 %v2433
        %2435 = vmatprep.subr.mxu0 0.0
        %v2436 = vand.u32 %v2265, 4294901760
        %v2437 = vsub.f32 %v2265, %v2436
        %v2438 = vand.u32 %v2437, 4294901760
        %v2439 = vsub.f32 %v2437, %v2438
        %v2440 = vand.u32 %v2439, 4294901760
        %2441 = vmatpush1.msra.mxu0 %v2440
        %2442 = vmatprep.subr.mxu0 0.0
        %v2443 = vand.u32 %v2265, 4294901760
        %v2444 = vsub.f32 %v2265, %v2443
        %v2445 = vand.u32 %v2444, 4294901760
        %v2446 = vsub.f32 %v2444, %v2445
        %v2447 = vand.u32 %v2446, 4294901760
        %2448 = vmatpush1.msra.mxu0 %v2447
        %2449 = vmatprep.subr.mxu0 0.0
        %v2450 = vand.u32 %v2265, 4294901760
        %v2451 = vsub.f32 %v2265, %v2450
        %v2452 = vand.u32 %v2451, 4294901760
        %v2453 = vsub.f32 %v2451, %v2452
        %v2454 = vand.u32 %v2453, 4294901760
        %2455 = vmatpush1.msra.mxu0 %v2454
        %2456 = vmatprep.subr.mxu0 0.0
        %v2457 = vand.u32 %v2265, 4294901760
        %v2458 = vsub.f32 %v2265, %v2457
        %v2459 = vand.u32 %v2458, 4294901760
        %v2460 = vsub.f32 %v2458, %v2459
        %v2461 = vand.u32 %v2460, 4294901760
        %2462 = vmatpush1.msra.mxu0 %v2461
        %2463 = vmatprep.subr.mxu0 0.0
        %v2464 = vand.u32 %v2265, 4294901760
        %v2465 = vsub.f32 %v2265, %v2464
        %v2466 = vand.u32 %v2465, 4294901760
        %v2467 = vsub.f32 %v2465, %v2466
        %v2468 = vand.u32 %v2467, 4294901760
        %2469 = vmatpush1.msra.mxu0 %v2468
        %2470 = vmatprep.subr.mxu0 0.0
        %2471 = vmatpush1.msra.mxu0 0.0
        %2472 = vmatprep.subr.mxu0 0.0
        %2473 = vmatpush1.msra.mxu0 0.0
        %2474 = vmatprep.subr.mxu0 0.0
        %2475 = vmatpush1.msra.mxu0 0.0
        %2476 = vmatprep.subr.mxu0 0.0
        %2477 = vmatpush1.msra.mxu0 0.0
        %2478 = vmatprep.subr.mxu0 0.0
        %2479 = vmatpush1.msra.mxu0 0.0
        %2480 = vmatprep.subr.mxu0 0.0
        %2481 = vmatpush1.msra.mxu0 0.0
        %2482 = vmatprep.subr.mxu0 0.0
        %2483 = vmatpush1.msra.mxu0 0.0
        %2484 = vmatprep.subr.mxu0 0.0
        %2485 = vmatpush1.msra.mxu0 0.0
        %2486 = vmatprep.subr.mxu0 0.0
        %2487 = vmatpush1.msra.mxu0 0.0
        %2488 = vmatprep.subr.mxu0 0.0
        %2489 = vmatpush1.msra.mxu0 0.0
        %2490 = vmatprep.subr.mxu0 0.0
        %2491 = vmatpush1.msra.mxu0 0.0
        %2492 = vmatprep.subr.mxu0 0.0
        %2493 = vmatpush1.msra.mxu0 0.0
        %2494 = vmatprep.subr.mxu0 0.0
        %2495 = vmatpush1.msra.mxu0 0.0
        %2496 = vmatprep.subr.mxu0 0.0
        %2497 = vmatpush1.msra.mxu0 0.0
        %2498 = vmatprep.subr.mxu0 0.0
        %2499 = vmatpush1.msra.mxu0 0.0
        %2500 = vmatprep.subr.mxu0 0.0
        %2501 = vmatpush1.msra.mxu0 0.0
        %2502 = vmatprep.mubr.f32.mxu0 0.0
        %v2503 = vand.u32 %v2266, 4294901760
        %2504 = vmatmul.mubr.f32.gmra.mrb[0].mxu0 %v2503
        %v2505 = vpop.f32.mrb[0].mxu0
        %v2506 = vadd.f32 %v2355, %v2505
        %v2507 = vpop.f32.mrb[0].mxu0
        %2508 = vdwg.mxu0
        %2509 = vmatprep.subr.mxu0 0.0
        %v2510 = vand.u32 %v2265, 4294901760
        %v2511 = vsub.f32 %v2265, %v2510
        %2512 = vmatpush1.msra.mxu0 %v2511
        %2513 = vmatprep.subr.mxu0 0.0
        %v2514 = vand.u32 %v2265, 4294901760
        %v2515 = vsub.f32 %v2265, %v2514
        %2516 = vmatpush1.msra.mxu0 %v2515
        %2517 = vmatprep.subr.mxu0 0.0
        %v2518 = vand.u32 %v2265, 4294901760
        %v2519 = vsub.f32 %v2265, %v2518
        %2520 = vmatpush1.msra.mxu0 %v2519
        %2521 = vmatprep.subr.mxu0 0.0
        %v2522 = vand.u32 %v2265, 4294901760
        %v2523 = vsub.f32 %v2265, %v2522
        %2524 = vmatpush1.msra.mxu0 %v2523
        %2525 = vmatprep.subr.mxu0 0.0
        %v2526 = vand.u32 %v2265, 4294901760
        %v2527 = vsub.f32 %v2265, %v2526
        %2528 = vmatpush1.msra.mxu0 %v2527
        %2529 = vmatprep.subr.mxu0 0.0
        %v2530 = vand.u32 %v2265, 4294901760
        %v2531 = vsub.f32 %v2265, %v2530
        %2532 = vmatpush1.msra.mxu0 %v2531
        %2533 = vmatprep.subr.mxu0 0.0
        %v2534 = vand.u32 %v2265, 4294901760
        %v2535 = vsub.f32 %v2265, %v2534
        %2536 = vmatpush1.msra.mxu0 %v2535
        %2537 = vmatprep.subr.mxu0 0.0
        %v2538 = vand.u32 %v2265, 4294901760
        %v2539 = vsub.f32 %v2265, %v2538
        %2540 = vmatpush1.msra.mxu0 %v2539
        %2541 = vmatprep.subr.mxu0 0.0
        %v2542 = vand.u32 %v2265, 4294901760
        %v2543 = vsub.f32 %v2265, %v2542
        %2544 = vmatpush1.msra.mxu0 %v2543
        %2545 = vmatprep.subr.mxu0 0.0
        %v2546 = vand.u32 %v2265, 4294901760
        %v2547 = vsub.f32 %v2265, %v2546
        %2548 = vmatpush1.msra.mxu0 %v2547
        %2549 = vmatprep.subr.mxu0 0.0
        %v2550 = vand.u32 %v2265, 4294901760
        %v2551 = vsub.f32 %v2265, %v2550
        %2552 = vmatpush1.msra.mxu0 %v2551
        %2553 = vmatprep.subr.mxu0 0.0
        %v2554 = vand.u32 %v2265, 4294901760
        %v2555 = vsub.f32 %v2265, %v2554
        %2556 = vmatpush1.msra.mxu0 %v2555
        %2557 = vmatprep.subr.mxu0 0.0
        %v2558 = vand.u32 %v2265, 4294901760
        %v2559 = vsub.f32 %v2265, %v2558
        %2560 = vmatpush1.msra.mxu0 %v2559
        %2561 = vmatprep.subr.mxu0 0.0
        %v2562 = vand.u32 %v2265, 4294901760
        %v2563 = vsub.f32 %v2265, %v2562
        %2564 = vmatpush1.msra.mxu0 %v2563
        %2565 = vmatprep.subr.mxu0 0.0
        %v2566 = vand.u32 %v2265, 4294901760
        %v2567 = vsub.f32 %v2265, %v2566
        %2568 = vmatpush1.msra.mxu0 %v2567
        %2569 = vmatprep.subr.mxu0 0.0
        %v2570 = vand.u32 %v2265, 4294901760
        %v2571 = vsub.f32 %v2265, %v2570
        %2572 = vmatpush1.msra.mxu0 %v2571
        %2573 = vmatprep.subr.mxu0 0.0
        %2574 = vmatpush1.msra.mxu0 0.0
        %2575 = vmatprep.subr.mxu0 0.0
        %2576 = vmatpush1.msra.mxu0 0.0
        %2577 = vmatprep.subr.mxu0 0.0
        %2578 = vmatpush1.msra.mxu0 0.0
        %2579 = vmatprep.subr.mxu0 0.0
        %2580 = vmatpush1.msra.mxu0 0.0
        %2581 = vmatprep.subr.mxu0 0.0
        %2582 = vmatpush1.msra.mxu0 0.0
        %2583 = vmatprep.subr.mxu0 0.0
        %2584 = vmatpush1.msra.mxu0 0.0
        %2585 = vmatprep.subr.mxu0 0.0
        %2586 = vmatpush1.msra.mxu0 0.0
        %2587 = vmatprep.subr.mxu0 0.0
        %2588 = vmatpush1.msra.mxu0 0.0
        %2589 = vmatprep.subr.mxu0 0.0
        %2590 = vmatpush1.msra.mxu0 0.0
        %2591 = vmatprep.subr.mxu0 0.0
        %2592 = vmatpush1.msra.mxu0 0.0
        %2593 = vmatprep.subr.mxu0 0.0
        %2594 = vmatpush1.msra.mxu0 0.0
        %2595 = vmatprep.subr.mxu0 0.0
        %2596 = vmatpush1.msra.mxu0 0.0
        %2597 = vmatprep.subr.mxu0 0.0
        %2598 = vmatpush1.msra.mxu0 0.0
        %2599 = vmatprep.subr.mxu0 0.0
        %2600 = vmatpush1.msra.mxu0 0.0
        %2601 = vmatprep.subr.mxu0 0.0
        %2602 = vmatpush1.msra.mxu0 0.0
        %2603 = vmatprep.subr.mxu0 0.0
        %2604 = vmatpush1.msra.mxu0 0.0
        %2605 = vmatprep.mubr.f32.mxu0 0.0
        %v2606 = vand.u32 %v2266, 4294901760
        %v2607 = vsub.f32 %v2266, %v2606
        %2608 = vmatmul.mubr.f32.gmra.mrb[0].mxu0 %v2607
        %v2609 = vpop.f32.mrb[0].mxu0
        %v2610 = vadd.f32 %v2506, %v2609
        %v2611 = vpop.f32.mrb[0].mxu0
        %2612 = vdwg.mxu0
        %2613 = vmatprep.subr.mxu0 0.0
        %v2614 = vand.u32 %v2265, 4294901760
        %2615 = vmatpush1.msra.mxu0 %v2614
        %2616 = vmatprep.subr.mxu0 0.0
        %v2617 = vand.u32 %v2265, 4294901760
        %2618 = vmatpush1.msra.mxu0 %v2617
        %2619 = vmatprep.subr.mxu0 0.0
        %v2620 = vand.u32 %v2265, 4294901760
        %2621 = vmatpush1.msra.mxu0 %v2620
        %2622 = vmatprep.subr.mxu0 0.0
        %v2623 = vand.u32 %v2265, 4294901760
        %2624 = vmatpush1.msra.mxu0 %v2623
        %2625 = vmatprep.subr.mxu0 0.0
        %v2626 = vand.u32 %v2265, 4294901760
        %2627 = vmatpush1.msra.mxu0 %v2626
        %2628 = vmatprep.subr.mxu0 0.0
        %v2629 = vand.u32 %v2265, 4294901760
        %2630 = vmatpush1.msra.mxu0 %v2629
        %2631 = vmatprep.subr.mxu0 0.0
        %v2632 = vand.u32 %v2265, 4294901760
        %2633 = vmatpush1.msra.mxu0 %v2632
        %2634 = vmatprep.subr.mxu0 0.0
        %v2635 = vand.u32 %v2265, 4294901760
        %2636 = vmatpush1.msra.mxu0 %v2635
        %2637 = vmatprep.subr.mxu0 0.0
        %v2638 = vand.u32 %v2265, 4294901760
        %2639 = vmatpush1.msra.mxu0 %v2638
        %2640 = vmatprep.subr.mxu0 0.0
        %v2641 = vand.u32 %v2265, 4294901760
        %2642 = vmatpush1.msra.mxu0 %v2641
        %2643 = vmatprep.subr.mxu0 0.0
        %v2644 = vand.u32 %v2265, 4294901760
        %2645 = vmatpush1.msra.mxu0 %v2644
        %2646 = vmatprep.subr.mxu0 0.0
        %v2647 = vand.u32 %v2265, 4294901760
        %2648 = vmatpush1.msra.mxu0 %v2647
        %2649 = vmatprep.subr.mxu0 0.0
        %v2650 = vand.u32 %v2265, 4294901760
        %2651 = vmatpush1.msra.mxu0 %v2650
        %2652 = vmatprep.subr.mxu0 0.0
        %v2653 = vand.u32 %v2265, 4294901760
        %2654 = vmatpush1.msra.mxu0 %v2653
        %2655 = vmatprep.subr.mxu0 0.0
        %v2656 = vand.u32 %v2265, 4294901760
        %2657 = vmatpush1.msra.mxu0 %v2656
        %2658 = vmatprep.subr.mxu0 0.0
        %v2659 = vand.u32 %v2265, 4294901760
        %2660 = vmatpush1.msra.mxu0 %v2659
        %2661 = vmatprep.subr.mxu0 0.0
        %2662 = vmatpush1.msra.mxu0 0.0
        %2663 = vmatprep.subr.mxu0 0.0
        %2664 = vmatpush1.msra.mxu0 0.0
        %2665 = vmatprep.subr.mxu0 0.0
        %2666 = vmatpush1.msra.mxu0 0.0
        %2667 = vmatprep.subr.mxu0 0.0
        %2668 = vmatpush1.msra.mxu0 0.0
        %2669 = vmatprep.subr.mxu0 0.0
        %2670 = vmatpush1.msra.mxu0 0.0
        %2671 = vmatprep.subr.mxu0 0.0
        %2672 = vmatpush1.msra.mxu0 0.0
        %2673 = vmatprep.subr.mxu0 0.0
        %2674 = vmatpush1.msra.mxu0 0.0
        %2675 = vmatprep.subr.mxu0 0.0
        %2676 = vmatpush1.msra.mxu0 0.0
        %2677 = vmatprep.subr.mxu0 0.0
        %2678 = vmatpush1.msra.mxu0 0.0
        %2679 = vmatprep.subr.mxu0 0.0
        %2680 = vmatpush1.msra.mxu0 0.0
        %2681 = vmatprep.subr.mxu0 0.0
        %2682 = vmatpush1.msra.mxu0 0.0
        %2683 = vmatprep.subr.mxu0 0.0
        %2684 = vmatpush1.msra.mxu0 0.0
        %2685 = vmatprep.subr.mxu0 0.0
        %2686 = vmatpush1.msra.mxu0 0.0
        %2687 = vmatprep.subr.mxu0 0.0
        %2688 = vmatpush1.msra.mxu0 0.0
        %2689 = vmatprep.subr.mxu0 0.0
        %2690 = vmatpush1.msra.mxu0 0.0
        %2691 = vmatprep.subr.mxu0 0.0
        %2692 = vmatpush1.msra.mxu0 0.0
        %2693 = vmatprep.mubr.f32.mxu0 0.0
        %v2694 = vand.u32 %v2266, 4294901760
        %v2695 = vsub.f32 %v2266, %v2694
        %v2696 = vand.u32 %v2695, 4294901760
        %2697 = vmatmul.mubr.f32.gmra.mrb[0].mxu0 %v2696
        %v2698 = vpop.f32.mrb[0].mxu0
        %v2699 = vadd.f32 %v2610, %v2698
        %v2700 = vpop.f32.mrb[0].mxu0
        %2701 = vdwg.mxu0
        %2702 = vmatprep.subr.mxu0 0.0
        %v2703 = vand.u32 %v2265, 4294901760
        %v2704 = vsub.f32 %v2265, %v2703
        %v2705 = vand.u32 %v2704, 4294901760
        %2706 = vmatpush1.msra.mxu0 %v2705
        %2707 = vmatprep.subr.mxu0 0.0
        %v2708 = vand.u32 %v2265, 4294901760
        %v2709 = vsub.f32 %v2265, %v2708
        %v2710 = vand.u32 %v2709, 4294901760
        %2711 = vmatpush1.msra.mxu0 %v2710
        %2712 = vmatprep.subr.mxu0 0.0
        %v2713 = vand.u32 %v2265, 4294901760
        %v2714 = vsub.f32 %v2265, %v2713
        %v2715 = vand.u32 %v2714, 4294901760
        %2716 = vmatpush1.msra.mxu0 %v2715
        %2717 = vmatprep.subr.mxu0 0.0
        %v2718 = vand.u32 %v2265, 4294901760
        %v2719 = vsub.f32 %v2265, %v2718
        %v2720 = vand.u32 %v2719, 4294901760
        %2721 = vmatpush1.msra.mxu0 %v2720
        %2722 = vmatprep.subr.mxu0 0.0
        %v2723 = vand.u32 %v2265, 4294901760
        %v2724 = vsub.f32 %v2265, %v2723
        %v2725 = vand.u32 %v2724, 4294901760
        %2726 = vmatpush1.msra.mxu0 %v2725
        %2727 = vmatprep.subr.mxu0 0.0
        %v2728 = vand.u32 %v2265, 4294901760
        %v2729 = vsub.f32 %v2265, %v2728
        %v2730 = vand.u32 %v2729, 4294901760
        %2731 = vmatpush1.msra.mxu0 %v2730
        %2732 = vmatprep.subr.mxu0 0.0
        %v2733 = vand.u32 %v2265, 4294901760
        %v2734 = vsub.f32 %v2265, %v2733
        %v2735 = vand.u32 %v2734, 4294901760
        %2736 = vmatpush1.msra.mxu0 %v2735
        %2737 = vmatprep.subr.mxu0 0.0
        %v2738 = vand.u32 %v2265, 4294901760
        %v2739 = vsub.f32 %v2265, %v2738
        %v2740 = vand.u32 %v2739, 4294901760
        %2741 = vmatpush1.msra.mxu0 %v2740
        %2742 = vmatprep.subr.mxu0 0.0
        %v2743 = vand.u32 %v2265, 4294901760
        %v2744 = vsub.f32 %v2265, %v2743
        %v2745 = vand.u32 %v2744, 4294901760
        %2746 = vmatpush1.msra.mxu0 %v2745
        %2747 = vmatprep.subr.mxu0 0.0
        %v2748 = vand.u32 %v2265, 4294901760
        %v2749 = vsub.f32 %v2265, %v2748
        %v2750 = vand.u32 %v2749, 4294901760
        %2751 = vmatpush1.msra.mxu0 %v2750
        %2752 = vmatprep.subr.mxu0 0.0
        %v2753 = vand.u32 %v2265, 4294901760
        %v2754 = vsub.f32 %v2265, %v2753
        %v2755 = vand.u32 %v2754, 4294901760
        %2756 = vmatpush1.msra.mxu0 %v2755
        %2757 = vmatprep.subr.mxu0 0.0
        %v2758 = vand.u32 %v2265, 4294901760
        %v2759 = vsub.f32 %v2265, %v2758
        %v2760 = vand.u32 %v2759, 4294901760
        %2761 = vmatpush1.msra.mxu0 %v2760
        %2762 = vmatprep.subr.mxu0 0.0
        %v2763 = vand.u32 %v2265, 4294901760
        %v2764 = vsub.f32 %v2265, %v2763
        %v2765 = vand.u32 %v2764, 4294901760
        %2766 = vmatpush1.msra.mxu0 %v2765
        %2767 = vmatprep.subr.mxu0 0.0
        %v2768 = vand.u32 %v2265, 4294901760
        %v2769 = vsub.f32 %v2265, %v2768
        %v2770 = vand.u32 %v2769, 4294901760
        %2771 = vmatpush1.msra.mxu0 %v2770
        %2772 = vmatprep.subr.mxu0 0.0
        %v2773 = vand.u32 %v2265, 4294901760
        %v2774 = vsub.f32 %v2265, %v2773
        %v2775 = vand.u32 %v2774, 4294901760
        %2776 = vmatpush1.msra.mxu0 %v2775
        %2777 = vmatprep.subr.mxu0 0.0
        %v2778 = vand.u32 %v2265, 4294901760
        %v2779 = vsub.f32 %v2265, %v2778
        %v2780 = vand.u32 %v2779, 4294901760
        %2781 = vmatpush1.msra.mxu0 %v2780
        %2782 = vmatprep.subr.mxu0 0.0
        %2783 = vmatpush1.msra.mxu0 0.0
        %2784 = vmatprep.subr.mxu0 0.0
        %2785 = vmatpush1.msra.mxu0 0.0
        %2786 = vmatprep.subr.mxu0 0.0
        %2787 = vmatpush1.msra.mxu0 0.0
        %2788 = vmatprep.subr.mxu0 0.0
        %2789 = vmatpush1.msra.mxu0 0.0
        %2790 = vmatprep.subr.mxu0 0.0
        %2791 = vmatpush1.msra.mxu0 0.0
        %2792 = vmatprep.subr.mxu0 0.0
        %2793 = vmatpush1.msra.mxu0 0.0
        %2794 = vmatprep.subr.mxu0 0.0
        %2795 = vmatpush1.msra.mxu0 0.0
        %2796 = vmatprep.subr.mxu0 0.0
        %2797 = vmatpush1.msra.mxu0 0.0
        %2798 = vmatprep.subr.mxu0 0.0
        %2799 = vmatpush1.msra.mxu0 0.0
        %2800 = vmatprep.subr.mxu0 0.0
        %2801 = vmatpush1.msra.mxu0 0.0
        %2802 = vmatprep.subr.mxu0 0.0
        %2803 = vmatpush1.msra.mxu0 0.0
        %2804 = vmatprep.subr.mxu0 0.0
        %2805 = vmatpush1.msra.mxu0 0.0
        %2806 = vmatprep.subr.mxu0 0.0
        %2807 = vmatpush1.msra.mxu0 0.0
        %2808 = vmatprep.subr.mxu0 0.0
        %2809 = vmatpush1.msra.mxu0 0.0
        %2810 = vmatprep.subr.mxu0 0.0
        %2811 = vmatpush1.msra.mxu0 0.0
        %2812 = vmatprep.subr.mxu0 0.0
        %2813 = vmatpush1.msra.mxu0 0.0
        %2814 = vmatprep.mubr.f32.mxu0 0.0
        %v2815 = vand.u32 %v2266, 4294901760
        %2816 = vmatmul.mubr.f32.gmra.mrb[0].mxu0 %v2815
        %v2817 = vpop.f32.mrb[0].mxu0
        %v2818 = vadd.f32 %v2699, %v2817
        %v2819 = vpop.f32.mrb[0].mxu0
        %2820 = vdwg.mxu0
        %2821 = vmatprep.subr.mxu0 0.0
        %v2822 = vand.u32 %v2265, 4294901760
        %2823 = vmatpush1.msra.mxu0 %v2822
        %2824 = vmatprep.subr.mxu0 0.0
        %v2825 = vand.u32 %v2265, 4294901760
        %2826 = vmatpush1.msra.mxu0 %v2825
        %2827 = vmatprep.subr.mxu0 0.0
        %v2828 = vand.u32 %v2265, 4294901760
        %2829 = vmatpush1.msra.mxu0 %v2828
        %2830 = vmatprep.subr.mxu0 0.0
        %v2831 = vand.u32 %v2265, 4294901760
        %2832 = vmatpush1.msra.mxu0 %v2831
        %2833 = vmatprep.subr.mxu0 0.0
        %v2834 = vand.u32 %v2265, 4294901760
        %2835 = vmatpush1.msra.mxu0 %v2834
        %2836 = vmatprep.subr.mxu0 0.0
        %v2837 = vand.u32 %v2265, 4294901760
        %2838 = vmatpush1.msra.mxu0 %v2837
        %2839 = vmatprep.subr.mxu0 0.0
        %v2840 = vand.u32 %v2265, 4294901760
        %2841 = vmatpush1.msra.mxu0 %v2840
        %2842 = vmatprep.subr.mxu0 0.0
        %v2843 = vand.u32 %v2265, 4294901760
        %2844 = vmatpush1.msra.mxu0 %v2843
        %2845 = vmatprep.subr.mxu0 0.0
        %v2846 = vand.u32 %v2265, 4294901760
        %2847 = vmatpush1.msra.mxu0 %v2846
        %2848 = vmatprep.subr.mxu0 0.0
        %v2849 = vand.u32 %v2265, 4294901760
        %2850 = vmatpush1.msra.mxu0 %v2849
        %2851 = vmatprep.subr.mxu0 0.0
        %v2852 = vand.u32 %v2265, 4294901760
        %2853 = vmatpush1.msra.mxu0 %v2852
        %2854 = vmatprep.subr.mxu0 0.0
        %v2855 = vand.u32 %v2265, 4294901760
        %2856 = vmatpush1.msra.mxu0 %v2855
        %2857 = vmatprep.subr.mxu0 0.0
        %v2858 = vand.u32 %v2265, 4294901760
        %2859 = vmatpush1.msra.mxu0 %v2858
        %2860 = vmatprep.subr.mxu0 0.0
        %v2861 = vand.u32 %v2265, 4294901760
        %2862 = vmatpush1.msra.mxu0 %v2861
        %2863 = vmatprep.subr.mxu0 0.0
        %v2864 = vand.u32 %v2265, 4294901760
        %2865 = vmatpush1.msra.mxu0 %v2864
        %2866 = vmatprep.subr.mxu0 0.0
        %v2867 = vand.u32 %v2265, 4294901760
        %2868 = vmatpush1.msra.mxu0 %v2867
        %2869 = vmatprep.subr.mxu0 0.0
        %2870 = vmatpush1.msra.mxu0 0.0
        %2871 = vmatprep.subr.mxu0 0.0
        %2872 = vmatpush1.msra.mxu0 0.0
        %2873 = vmatprep.subr.mxu0 0.0
        %2874 = vmatpush1.msra.mxu0 0.0
        %2875 = vmatprep.subr.mxu0 0.0
        %2876 = vmatpush1.msra.mxu0 0.0
        %2877 = vmatprep.subr.mxu0 0.0
        %2878 = vmatpush1.msra.mxu0 0.0
        %2879 = vmatprep.subr.mxu0 0.0
        %2880 = vmatpush1.msra.mxu0 0.0
        %2881 = vmatprep.subr.mxu0 0.0
        %2882 = vmatpush1.msra.mxu0 0.0
        %2883 = vmatprep.subr.mxu0 0.0
        %2884 = vmatpush1.msra.mxu0 0.0
        %2885 = vmatprep.subr.mxu0 0.0
        %2886 = vmatpush1.msra.mxu0 0.0
        %2887 = vmatprep.subr.mxu0 0.0
        %2888 = vmatpush1.msra.mxu0 0.0
        %2889 = vmatprep.subr.mxu0 0.0
        %2890 = vmatpush1.msra.mxu0 0.0
        %2891 = vmatprep.subr.mxu0 0.0
        %2892 = vmatpush1.msra.mxu0 0.0
        %2893 = vmatprep.subr.mxu0 0.0
        %2894 = vmatpush1.msra.mxu0 0.0
        %2895 = vmatprep.subr.mxu0 0.0
        %2896 = vmatpush1.msra.mxu0 0.0
        %2897 = vmatprep.subr.mxu0 0.0
        %2898 = vmatpush1.msra.mxu0 0.0
        %2899 = vmatprep.subr.mxu0 0.0
        %2900 = vmatpush1.msra.mxu0 0.0
        %2901 = vmatprep.mubr.f32.mxu0 0.0
        %v2902 = vand.u32 %v2266, 4294901760
        %2903 = vmatmul.mubr.f32.gmra.mrb[0].mxu0 %v2902
        %v2904 = vpop.f32.mrb[0].mxu0
        %v2905 = vadd.f32 %v2818, %v2904
        %v2906 = vpop.f32.mrb[0].mxu0
        %2907 = vdwg.mxu0
        %v2908 = vadd.f32 %v2262, %v2905
        %vm2909 = vcmp.eq.s32.totalorder %v326, 4
        %v2910 = vsel %vm2909, 1, 0
        %v2911 = vcvt.s32.f32 %v2910
        %v2912 = vmul.f32 %v322, %v322
        %2913 = vmatprep.subr.mxu0 0.0
        %v2914 = vand.u32 %v2911, 4294901760
        %2915 = vmatpush1.msra.mxu0 %v2914
        %2916 = vmatprep.subr.mxu0 0.0
        %v2917 = vand.u32 %v2911, 4294901760
        %2918 = vmatpush1.msra.mxu0 %v2917
        %2919 = vmatprep.subr.mxu0 0.0
        %v2920 = vand.u32 %v2911, 4294901760
        %2921 = vmatpush1.msra.mxu0 %v2920
        %2922 = vmatprep.subr.mxu0 0.0
        %v2923 = vand.u32 %v2911, 4294901760
        %2924 = vmatpush1.msra.mxu0 %v2923
        %2925 = vmatprep.subr.mxu0 0.0
        %v2926 = vand.u32 %v2911, 4294901760
        %2927 = vmatpush1.msra.mxu0 %v2926
        %2928 = vmatprep.subr.mxu0 0.0
        %v2929 = vand.u32 %v2911, 4294901760
        %2930 = vmatpush1.msra.mxu0 %v2929
        %2931 = vmatprep.subr.mxu0 0.0
        %v2932 = vand.u32 %v2911, 4294901760
        %2933 = vmatpush1.msra.mxu0 %v2932
        %2934 = vmatprep.subr.mxu0 0.0
        %v2935 = vand.u32 %v2911, 4294901760
        %2936 = vmatpush1.msra.mxu0 %v2935
        %2937 = vmatprep.subr.mxu0 0.0
        %v2938 = vand.u32 %v2911, 4294901760
        %2939 = vmatpush1.msra.mxu0 %v2938
        %2940 = vmatprep.subr.mxu0 0.0
        %v2941 = vand.u32 %v2911, 4294901760
        %2942 = vmatpush1.msra.mxu0 %v2941
        %2943 = vmatprep.subr.mxu0 0.0
        %v2944 = vand.u32 %v2911, 4294901760
        %2945 = vmatpush1.msra.mxu0 %v2944
        %2946 = vmatprep.subr.mxu0 0.0
        %v2947 = vand.u32 %v2911, 4294901760
        %2948 = vmatpush1.msra.mxu0 %v2947
        %2949 = vmatprep.subr.mxu0 0.0
        %v2950 = vand.u32 %v2911, 4294901760
        %2951 = vmatpush1.msra.mxu0 %v2950
        %2952 = vmatprep.subr.mxu0 0.0
        %v2953 = vand.u32 %v2911, 4294901760
        %2954 = vmatpush1.msra.mxu0 %v2953
        %2955 = vmatprep.subr.mxu0 0.0
        %v2956 = vand.u32 %v2911, 4294901760
        %2957 = vmatpush1.msra.mxu0 %v2956
        %2958 = vmatprep.subr.mxu0 0.0
        %v2959 = vand.u32 %v2911, 4294901760
        %2960 = vmatpush1.msra.mxu0 %v2959
        %2961 = vmatprep.subr.mxu0 0.0
        %2962 = vmatpush1.msra.mxu0 0.0
        %2963 = vmatprep.subr.mxu0 0.0
        %2964 = vmatpush1.msra.mxu0 0.0
        %2965 = vmatprep.subr.mxu0 0.0
        %2966 = vmatpush1.msra.mxu0 0.0
        %2967 = vmatprep.subr.mxu0 0.0
        %2968 = vmatpush1.msra.mxu0 0.0
        %2969 = vmatprep.subr.mxu0 0.0
        %2970 = vmatpush1.msra.mxu0 0.0
        %2971 = vmatprep.subr.mxu0 0.0
        %2972 = vmatpush1.msra.mxu0 0.0
        %2973 = vmatprep.subr.mxu0 0.0
        %2974 = vmatpush1.msra.mxu0 0.0
        %2975 = vmatprep.subr.mxu0 0.0
        %2976 = vmatpush1.msra.mxu0 0.0
        %2977 = vmatprep.subr.mxu0 0.0
        %2978 = vmatpush1.msra.mxu0 0.0
        %2979 = vmatprep.subr.mxu0 0.0
        %2980 = vmatpush1.msra.mxu0 0.0
        %2981 = vmatprep.subr.mxu0 0.0
        %2982 = vmatpush1.msra.mxu0 0.0
        %2983 = vmatprep.subr.mxu0 0.0
        %2984 = vmatpush1.msra.mxu0 0.0
        %2985 = vmatprep.subr.mxu0 0.0
        %2986 = vmatpush1.msra.mxu0 0.0
        %2987 = vmatprep.subr.mxu0 0.0
        %2988 = vmatpush1.msra.mxu0 0.0
        %2989 = vmatprep.subr.mxu0 0.0
        %2990 = vmatpush1.msra.mxu0 0.0
        %2991 = vmatprep.subr.mxu0 0.0
        %2992 = vmatpush1.msra.mxu0 0.0
        %2993 = vmatprep.mubr.f32.mxu0 0.0
        %v2994 = vand.u32 %v2912, 4294901760
        %v2995 = vsub.f32 %v2912, %v2994
        %v2996 = vand.u32 %v2995, 4294901760
        %v2997 = vsub.f32 %v2995, %v2996
        %v2998 = vand.u32 %v2997, 4294901760
        %2999 = vmatmul.mubr.f32.gmra.mrb[0].mxu0 %v2998
        %v3000 = vpop.f32.mrb[0].mxu0
        %v3001 = vadd.f32 0.0, %v3000
        %v3002 = vpop.f32.mrb[0].mxu0
        %3003 = vdwg.mxu0
        %3004 = vmatprep.subr.mxu0 0.0
        %v3005 = vand.u32 %v2911, 4294901760
        %v3006 = vsub.f32 %v2911, %v3005
        %v3007 = vand.u32 %v3006, 4294901760
        %v3008 = vsub.f32 %v3006, %v3007
        %v3009 = vand.u32 %v3008, 4294901760
        %3010 = vmatpush1.msra.mxu0 %v3009
        %3011 = vmatprep.subr.mxu0 0.0
        %v3012 = vand.u32 %v2911, 4294901760
        %v3013 = vsub.f32 %v2911, %v3012
        %v3014 = vand.u32 %v3013, 4294901760
        %v3015 = vsub.f32 %v3013, %v3014
        %v3016 = vand.u32 %v3015, 4294901760
        %3017 = vmatpush1.msra.mxu0 %v3016
        %3018 = vmatprep.subr.mxu0 0.0
        %v3019 = vand.u32 %v2911, 4294901760
        %v3020 = vsub.f32 %v2911, %v3019
        %v3021 = vand.u32 %v3020, 4294901760
        %v3022 = vsub.f32 %v3020, %v3021
        %v3023 = vand.u32 %v3022, 4294901760
        %3024 = vmatpush1.msra.mxu0 %v3023
        %3025 = vmatprep.subr.mxu0 0.0
        %v3026 = vand.u32 %v2911, 4294901760
        %v3027 = vsub.f32 %v2911, %v3026
        %v3028 = vand.u32 %v3027, 4294901760
        %v3029 = vsub.f32 %v3027, %v3028
        %v3030 = vand.u32 %v3029, 4294901760
        %3031 = vmatpush1.msra.mxu0 %v3030
        %3032 = vmatprep.subr.mxu0 0.0
        %v3033 = vand.u32 %v2911, 4294901760
        %v3034 = vsub.f32 %v2911, %v3033
        %v3035 = vand.u32 %v3034, 4294901760
        %v3036 = vsub.f32 %v3034, %v3035
        %v3037 = vand.u32 %v3036, 4294901760
        %3038 = vmatpush1.msra.mxu0 %v3037
        %3039 = vmatprep.subr.mxu0 0.0
        %v3040 = vand.u32 %v2911, 4294901760
        %v3041 = vsub.f32 %v2911, %v3040
        %v3042 = vand.u32 %v3041, 4294901760
        %v3043 = vsub.f32 %v3041, %v3042
        %v3044 = vand.u32 %v3043, 4294901760
        %3045 = vmatpush1.msra.mxu0 %v3044
        %3046 = vmatprep.subr.mxu0 0.0
        %v3047 = vand.u32 %v2911, 4294901760
        %v3048 = vsub.f32 %v2911, %v3047
        %v3049 = vand.u32 %v3048, 4294901760
        %v3050 = vsub.f32 %v3048, %v3049
        %v3051 = vand.u32 %v3050, 4294901760
        %3052 = vmatpush1.msra.mxu0 %v3051
        %3053 = vmatprep.subr.mxu0 0.0
        %v3054 = vand.u32 %v2911, 4294901760
        %v3055 = vsub.f32 %v2911, %v3054
        %v3056 = vand.u32 %v3055, 4294901760
        %v3057 = vsub.f32 %v3055, %v3056
        %v3058 = vand.u32 %v3057, 4294901760
        %3059 = vmatpush1.msra.mxu0 %v3058
        %3060 = vmatprep.subr.mxu0 0.0
        %v3061 = vand.u32 %v2911, 4294901760
        %v3062 = vsub.f32 %v2911, %v3061
        %v3063 = vand.u32 %v3062, 4294901760
        %v3064 = vsub.f32 %v3062, %v3063
        %v3065 = vand.u32 %v3064, 4294901760
        %3066 = vmatpush1.msra.mxu0 %v3065
        %3067 = vmatprep.subr.mxu0 0.0
        %v3068 = vand.u32 %v2911, 4294901760
        %v3069 = vsub.f32 %v2911, %v3068
        %v3070 = vand.u32 %v3069, 4294901760
        %v3071 = vsub.f32 %v3069, %v3070
        %v3072 = vand.u32 %v3071, 4294901760
        %3073 = vmatpush1.msra.mxu0 %v3072
        %3074 = vmatprep.subr.mxu0 0.0
        %v3075 = vand.u32 %v2911, 4294901760
        %v3076 = vsub.f32 %v2911, %v3075
        %v3077 = vand.u32 %v3076, 4294901760
        %v3078 = vsub.f32 %v3076, %v3077
        %v3079 = vand.u32 %v3078, 4294901760
        %3080 = vmatpush1.msra.mxu0 %v3079
        %3081 = vmatprep.subr.mxu0 0.0
        %v3082 = vand.u32 %v2911, 4294901760
        %v3083 = vsub.f32 %v2911, %v3082
        %v3084 = vand.u32 %v3083, 4294901760
        %v3085 = vsub.f32 %v3083, %v3084
        %v3086 = vand.u32 %v3085, 4294901760
        %3087 = vmatpush1.msra.mxu0 %v3086
        %3088 = vmatprep.subr.mxu0 0.0
        %v3089 = vand.u32 %v2911, 4294901760
        %v3090 = vsub.f32 %v2911, %v3089
        %v3091 = vand.u32 %v3090, 4294901760
        %v3092 = vsub.f32 %v3090, %v3091
        %v3093 = vand.u32 %v3092, 4294901760
        %3094 = vmatpush1.msra.mxu0 %v3093
        %3095 = vmatprep.subr.mxu0 0.0
        %v3096 = vand.u32 %v2911, 4294901760
        %v3097 = vsub.f32 %v2911, %v3096
        %v3098 = vand.u32 %v3097, 4294901760
        %v3099 = vsub.f32 %v3097, %v3098
        %v3100 = vand.u32 %v3099, 4294901760
        %3101 = vmatpush1.msra.mxu0 %v3100
        %3102 = vmatprep.subr.mxu0 0.0
        %v3103 = vand.u32 %v2911, 4294901760
        %v3104 = vsub.f32 %v2911, %v3103
        %v3105 = vand.u32 %v3104, 4294901760
        %v3106 = vsub.f32 %v3104, %v3105
        %v3107 = vand.u32 %v3106, 4294901760
        %3108 = vmatpush1.msra.mxu0 %v3107
        %3109 = vmatprep.subr.mxu0 0.0
        %v3110 = vand.u32 %v2911, 4294901760
        %v3111 = vsub.f32 %v2911, %v3110
        %v3112 = vand.u32 %v3111, 4294901760
        %v3113 = vsub.f32 %v3111, %v3112
        %v3114 = vand.u32 %v3113, 4294901760
        %3115 = vmatpush1.msra.mxu0 %v3114
        %3116 = vmatprep.subr.mxu0 0.0
        %3117 = vmatpush1.msra.mxu0 0.0
        %3118 = vmatprep.subr.mxu0 0.0
        %3119 = vmatpush1.msra.mxu0 0.0
        %3120 = vmatprep.subr.mxu0 0.0
        %3121 = vmatpush1.msra.mxu0 0.0
        %3122 = vmatprep.subr.mxu0 0.0
        %3123 = vmatpush1.msra.mxu0 0.0
        %3124 = vmatprep.subr.mxu0 0.0
        %3125 = vmatpush1.msra.mxu0 0.0
        %3126 = vmatprep.subr.mxu0 0.0
        %3127 = vmatpush1.msra.mxu0 0.0
        %3128 = vmatprep.subr.mxu0 0.0
        %3129 = vmatpush1.msra.mxu0 0.0
        %3130 = vmatprep.subr.mxu0 0.0
        %3131 = vmatpush1.msra.mxu0 0.0
        %3132 = vmatprep.subr.mxu0 0.0
        %3133 = vmatpush1.msra.mxu0 0.0
        %3134 = vmatprep.subr.mxu0 0.0
        %3135 = vmatpush1.msra.mxu0 0.0
        %3136 = vmatprep.subr.mxu0 0.0
        %3137 = vmatpush1.msra.mxu0 0.0
        %3138 = vmatprep.subr.mxu0 0.0
        %3139 = vmatpush1.msra.mxu0 0.0
        %3140 = vmatprep.subr.mxu0 0.0
        %3141 = vmatpush1.msra.mxu0 0.0
        %3142 = vmatprep.subr.mxu0 0.0
        %3143 = vmatpush1.msra.mxu0 0.0
        %3144 = vmatprep.subr.mxu0 0.0
        %3145 = vmatpush1.msra.mxu0 0.0
        %3146 = vmatprep.subr.mxu0 0.0
        %3147 = vmatpush1.msra.mxu0 0.0
        %3148 = vmatprep.mubr.f32.mxu0 0.0
        %v3149 = vand.u32 %v2912, 4294901760
        %3150 = vmatmul.mubr.f32.gmra.mrb[0].mxu0 %v3149
        %v3151 = vpop.f32.mrb[0].mxu0
        %v3152 = vadd.f32 %v3001, %v3151
        %v3153 = vpop.f32.mrb[0].mxu0
        %3154 = vdwg.mxu0
        %3155 = vmatprep.subr.mxu0 0.0
        %v3156 = vand.u32 %v2911, 4294901760
        %v3157 = vsub.f32 %v2911, %v3156
        %3158 = vmatpush1.msra.mxu0 %v3157
        %3159 = vmatprep.subr.mxu0 0.0
        %v3160 = vand.u32 %v2911, 4294901760
        %v3161 = vsub.f32 %v2911, %v3160
        %3162 = vmatpush1.msra.mxu0 %v3161
        %3163 = vmatprep.subr.mxu0 0.0
        %v3164 = vand.u32 %v2911, 4294901760
        %v3165 = vsub.f32 %v2911, %v3164
        %3166 = vmatpush1.msra.mxu0 %v3165
        %3167 = vmatprep.subr.mxu0 0.0
        %v3168 = vand.u32 %v2911, 4294901760
        %v3169 = vsub.f32 %v2911, %v3168
        %3170 = vmatpush1.msra.mxu0 %v3169
        %3171 = vmatprep.subr.mxu0 0.0
        %v3172 = vand.u32 %v2911, 4294901760
        %v3173 = vsub.f32 %v2911, %v3172
        %3174 = vmatpush1.msra.mxu0 %v3173
        %3175 = vmatprep.subr.mxu0 0.0
        %v3176 = vand.u32 %v2911, 4294901760
        %v3177 = vsub.f32 %v2911, %v3176
        %3178 = vmatpush1.msra.mxu0 %v3177
        %3179 = vmatprep.subr.mxu0 0.0
        %v3180 = vand.u32 %v2911, 4294901760
        %v3181 = vsub.f32 %v2911, %v3180
        %3182 = vmatpush1.msra.mxu0 %v3181
        %3183 = vmatprep.subr.mxu0 0.0
        %v3184 = vand.u32 %v2911, 4294901760
        %v3185 = vsub.f32 %v2911, %v3184
        %3186 = vmatpush1.msra.mxu0 %v3185
        %3187 = vmatprep.subr.mxu0 0.0
        %v3188 = vand.u32 %v2911, 4294901760
        %v3189 = vsub.f32 %v2911, %v3188
        %3190 = vmatpush1.msra.mxu0 %v3189
        %3191 = vmatprep.subr.mxu0 0.0
        %v3192 = vand.u32 %v2911, 4294901760
        %v3193 = vsub.f32 %v2911, %v3192
        %3194 = vmatpush1.msra.mxu0 %v3193
        %3195 = vmatprep.subr.mxu0 0.0
        %v3196 = vand.u32 %v2911, 4294901760
        %v3197 = vsub.f32 %v2911, %v3196
        %3198 = vmatpush1.msra.mxu0 %v3197
        %3199 = vmatprep.subr.mxu0 0.0
        %v3200 = vand.u32 %v2911, 4294901760
        %v3201 = vsub.f32 %v2911, %v3200
        %3202 = vmatpush1.msra.mxu0 %v3201
        %3203 = vmatprep.subr.mxu0 0.0
        %v3204 = vand.u32 %v2911, 4294901760
        %v3205 = vsub.f32 %v2911, %v3204
        %3206 = vmatpush1.msra.mxu0 %v3205
        %3207 = vmatprep.subr.mxu0 0.0
        %v3208 = vand.u32 %v2911, 4294901760
        %v3209 = vsub.f32 %v2911, %v3208
        %3210 = vmatpush1.msra.mxu0 %v3209
        %3211 = vmatprep.subr.mxu0 0.0
        %v3212 = vand.u32 %v2911, 4294901760
        %v3213 = vsub.f32 %v2911, %v3212
        %3214 = vmatpush1.msra.mxu0 %v3213
        %3215 = vmatprep.subr.mxu0 0.0
        %v3216 = vand.u32 %v2911, 4294901760
        %v3217 = vsub.f32 %v2911, %v3216
        %3218 = vmatpush1.msra.mxu0 %v3217
        %3219 = vmatprep.subr.mxu0 0.0
        %3220 = vmatpush1.msra.mxu0 0.0
        %3221 = vmatprep.subr.mxu0 0.0
        %3222 = vmatpush1.msra.mxu0 0.0
        %3223 = vmatprep.subr.mxu0 0.0
        %3224 = vmatpush1.msra.mxu0 0.0
        %3225 = vmatprep.subr.mxu0 0.0
        %3226 = vmatpush1.msra.mxu0 0.0
        %3227 = vmatprep.subr.mxu0 0.0
        %3228 = vmatpush1.msra.mxu0 0.0
        %3229 = vmatprep.subr.mxu0 0.0
        %3230 = vmatpush1.msra.mxu0 0.0
        %3231 = vmatprep.subr.mxu0 0.0
        %3232 = vmatpush1.msra.mxu0 0.0
        %3233 = vmatprep.subr.mxu0 0.0
        %3234 = vmatpush1.msra.mxu0 0.0
        %3235 = vmatprep.subr.mxu0 0.0
        %3236 = vmatpush1.msra.mxu0 0.0
        %3237 = vmatprep.subr.mxu0 0.0
        %3238 = vmatpush1.msra.mxu0 0.0
        %3239 = vmatprep.subr.mxu0 0.0
        %3240 = vmatpush1.msra.mxu0 0.0
        %3241 = vmatprep.subr.mxu0 0.0
        %3242 = vmatpush1.msra.mxu0 0.0
        %3243 = vmatprep.subr.mxu0 0.0
        %3244 = vmatpush1.msra.mxu0 0.0
        %3245 = vmatprep.subr.mxu0 0.0
        %3246 = vmatpush1.msra.mxu0 0.0
        %3247 = vmatprep.subr.mxu0 0.0
        %3248 = vmatpush1.msra.mxu0 0.0
        %3249 = vmatprep.subr.mxu0 0.0
        %3250 = vmatpush1.msra.mxu0 0.0
        %3251 = vmatprep.mubr.f32.mxu0 0.0
        %v3252 = vand.u32 %v2912, 4294901760
        %v3253 = vsub.f32 %v2912, %v3252
        %3254 = vmatmul.mubr.f32.gmra.mrb[0].mxu0 %v3253
        %v3255 = vpop.f32.mrb[0].mxu0
        %v3256 = vadd.f32 %v3152, %v3255
        %v3257 = vpop.f32.mrb[0].mxu0
        %3258 = vdwg.mxu0
        %3259 = vmatprep.subr.mxu0 0.0
        %v3260 = vand.u32 %v2911, 4294901760
        %3261 = vmatpush1.msra.mxu0 %v3260
        %3262 = vmatprep.subr.mxu0 0.0
        %v3263 = vand.u32 %v2911, 4294901760
        %3264 = vmatpush1.msra.mxu0 %v3263
        %3265 = vmatprep.subr.mxu0 0.0
        %v3266 = vand.u32 %v2911, 4294901760
        %3267 = vmatpush1.msra.mxu0 %v3266
        %3268 = vmatprep.subr.mxu0 0.0
        %v3269 = vand.u32 %v2911, 4294901760
        %3270 = vmatpush1.msra.mxu0 %v3269
        %3271 = vmatprep.subr.mxu0 0.0
        %v3272 = vand.u32 %v2911, 4294901760
        %3273 = vmatpush1.msra.mxu0 %v3272
        %3274 = vmatprep.subr.mxu0 0.0
        %v3275 = vand.u32 %v2911, 4294901760
        %3276 = vmatpush1.msra.mxu0 %v3275
        %3277 = vmatprep.subr.mxu0 0.0
        %v3278 = vand.u32 %v2911, 4294901760
        %3279 = vmatpush1.msra.mxu0 %v3278
        %3280 = vmatprep.subr.mxu0 0.0
        %v3281 = vand.u32 %v2911, 4294901760
        %3282 = vmatpush1.msra.mxu0 %v3281
        %3283 = vmatprep.subr.mxu0 0.0
        %v3284 = vand.u32 %v2911, 4294901760
        %3285 = vmatpush1.msra.mxu0 %v3284
        %3286 = vmatprep.subr.mxu0 0.0
        %v3287 = vand.u32 %v2911, 4294901760
        %3288 = vmatpush1.msra.mxu0 %v3287
        %3289 = vmatprep.subr.mxu0 0.0
        %v3290 = vand.u32 %v2911, 4294901760
        %3291 = vmatpush1.msra.mxu0 %v3290
        %3292 = vmatprep.subr.mxu0 0.0
        %v3293 = vand.u32 %v2911, 4294901760
        %3294 = vmatpush1.msra.mxu0 %v3293
        %3295 = vmatprep.subr.mxu0 0.0
        %v3296 = vand.u32 %v2911, 4294901760
        %3297 = vmatpush1.msra.mxu0 %v3296
        %3298 = vmatprep.subr.mxu0 0.0
        %v3299 = vand.u32 %v2911, 4294901760
        %3300 = vmatpush1.msra.mxu0 %v3299
        %3301 = vmatprep.subr.mxu0 0.0
        %v3302 = vand.u32 %v2911, 4294901760
        %3303 = vmatpush1.msra.mxu0 %v3302
        %3304 = vmatprep.subr.mxu0 0.0
        %v3305 = vand.u32 %v2911, 4294901760
        %3306 = vmatpush1.msra.mxu0 %v3305
        %3307 = vmatprep.subr.mxu0 0.0
        %3308 = vmatpush1.msra.mxu0 0.0
        %3309 = vmatprep.subr.mxu0 0.0
        %3310 = vmatpush1.msra.mxu0 0.0
        %3311 = vmatprep.subr.mxu0 0.0
        %3312 = vmatpush1.msra.mxu0 0.0
        %3313 = vmatprep.subr.mxu0 0.0
        %3314 = vmatpush1.msra.mxu0 0.0
        %3315 = vmatprep.subr.mxu0 0.0
        %3316 = vmatpush1.msra.mxu0 0.0
        %3317 = vmatprep.subr.mxu0 0.0
        %3318 = vmatpush1.msra.mxu0 0.0
        %3319 = vmatprep.subr.mxu0 0.0
        %3320 = vmatpush1.msra.mxu0 0.0
        %3321 = vmatprep.subr.mxu0 0.0
        %3322 = vmatpush1.msra.mxu0 0.0
        %3323 = vmatprep.subr.mxu0 0.0
        %3324 = vmatpush1.msra.mxu0 0.0
        %3325 = vmatprep.subr.mxu0 0.0
        %3326 = vmatpush1.msra.mxu0 0.0
        %3327 = vmatprep.subr.mxu0 0.0
        %3328 = vmatpush1.msra.mxu0 0.0
        %3329 = vmatprep.subr.mxu0 0.0
        %3330 = vmatpush1.msra.mxu0 0.0
        %3331 = vmatprep.subr.mxu0 0.0
        %3332 = vmatpush1.msra.mxu0 0.0
        %3333 = vmatprep.subr.mxu0 0.0
        %3334 = vmatpush1.msra.mxu0 0.0
        %3335 = vmatprep.subr.mxu0 0.0
        %3336 = vmatpush1.msra.mxu0 0.0
        %3337 = vmatprep.subr.mxu0 0.0
        %3338 = vmatpush1.msra.mxu0 0.0
        %3339 = vmatprep.mubr.f32.mxu0 0.0
        %v3340 = vand.u32 %v2912, 4294901760
        %v3341 = vsub.f32 %v2912, %v3340
        %v3342 = vand.u32 %v3341, 4294901760
        %3343 = vmatmul.mubr.f32.gmra.mrb[0].mxu0 %v3342
        %v3344 = vpop.f32.mrb[0].mxu0
        %v3345 = vadd.f32 %v3256, %v3344
        %v3346 = vpop.f32.mrb[0].mxu0
        %3347 = vdwg.mxu0
        %3348 = vmatprep.subr.mxu0 0.0
        %v3349 = vand.u32 %v2911, 4294901760
        %v3350 = vsub.f32 %v2911, %v3349
        %v3351 = vand.u32 %v3350, 4294901760
        %3352 = vmatpush1.msra.mxu0 %v3351
        %3353 = vmatprep.subr.mxu0 0.0
        %v3354 = vand.u32 %v2911, 4294901760
        %v3355 = vsub.f32 %v2911, %v3354
        %v3356 = vand.u32 %v3355, 4294901760
        %3357 = vmatpush1.msra.mxu0 %v3356
        %3358 = vmatprep.subr.mxu0 0.0
        %v3359 = vand.u32 %v2911, 4294901760
        %v3360 = vsub.f32 %v2911, %v3359
        %v3361 = vand.u32 %v3360, 4294901760
        %3362 = vmatpush1.msra.mxu0 %v3361
        %3363 = vmatprep.subr.mxu0 0.0
        %v3364 = vand.u32 %v2911, 4294901760
        %v3365 = vsub.f32 %v2911, %v3364
        %v3366 = vand.u32 %v3365, 4294901760
        %3367 = vmatpush1.msra.mxu0 %v3366
        %3368 = vmatprep.subr.mxu0 0.0
        %v3369 = vand.u32 %v2911, 4294901760
        %v3370 = vsub.f32 %v2911, %v3369
        %v3371 = vand.u32 %v3370, 4294901760
        %3372 = vmatpush1.msra.mxu0 %v3371
        %3373 = vmatprep.subr.mxu0 0.0
        %v3374 = vand.u32 %v2911, 4294901760
        %v3375 = vsub.f32 %v2911, %v3374
        %v3376 = vand.u32 %v3375, 4294901760
        %3377 = vmatpush1.msra.mxu0 %v3376
        %3378 = vmatprep.subr.mxu0 0.0
        %v3379 = vand.u32 %v2911, 4294901760
        %v3380 = vsub.f32 %v2911, %v3379
        %v3381 = vand.u32 %v3380, 4294901760
        %3382 = vmatpush1.msra.mxu0 %v3381
        %3383 = vmatprep.subr.mxu0 0.0
        %v3384 = vand.u32 %v2911, 4294901760
        %v3385 = vsub.f32 %v2911, %v3384
        %v3386 = vand.u32 %v3385, 4294901760
        %3387 = vmatpush1.msra.mxu0 %v3386
        %3388 = vmatprep.subr.mxu0 0.0
        %v3389 = vand.u32 %v2911, 4294901760
        %v3390 = vsub.f32 %v2911, %v3389
        %v3391 = vand.u32 %v3390, 4294901760
        %3392 = vmatpush1.msra.mxu0 %v3391
        %3393 = vmatprep.subr.mxu0 0.0
        %v3394 = vand.u32 %v2911, 4294901760
        %v3395 = vsub.f32 %v2911, %v3394
        %v3396 = vand.u32 %v3395, 4294901760
        %3397 = vmatpush1.msra.mxu0 %v3396
        %3398 = vmatprep.subr.mxu0 0.0
        %v3399 = vand.u32 %v2911, 4294901760
        %v3400 = vsub.f32 %v2911, %v3399
        %v3401 = vand.u32 %v3400, 4294901760
        %3402 = vmatpush1.msra.mxu0 %v3401
        %3403 = vmatprep.subr.mxu0 0.0
        %v3404 = vand.u32 %v2911, 4294901760
        %v3405 = vsub.f32 %v2911, %v3404
        %v3406 = vand.u32 %v3405, 4294901760
        %3407 = vmatpush1.msra.mxu0 %v3406
        %3408 = vmatprep.subr.mxu0 0.0
        %v3409 = vand.u32 %v2911, 4294901760
        %v3410 = vsub.f32 %v2911, %v3409
        %v3411 = vand.u32 %v3410, 4294901760
        %3412 = vmatpush1.msra.mxu0 %v3411
        %3413 = vmatprep.subr.mxu0 0.0
        %v3414 = vand.u32 %v2911, 4294901760
        %v3415 = vsub.f32 %v2911, %v3414
        %v3416 = vand.u32 %v3415, 4294901760
        %3417 = vmatpush1.msra.mxu0 %v3416
        %3418 = vmatprep.subr.mxu0 0.0
        %v3419 = vand.u32 %v2911, 4294901760
        %v3420 = vsub.f32 %v2911, %v3419
        %v3421 = vand.u32 %v3420, 4294901760
        %3422 = vmatpush1.msra.mxu0 %v3421
        %3423 = vmatprep.subr.mxu0 0.0
        %v3424 = vand.u32 %v2911, 4294901760
        %v3425 = vsub.f32 %v2911, %v3424
        %v3426 = vand.u32 %v3425, 4294901760
        %3427 = vmatpush1.msra.mxu0 %v3426
        %3428 = vmatprep.subr.mxu0 0.0
        %3429 = vmatpush1.msra.mxu0 0.0
        %3430 = vmatprep.subr.mxu0 0.0
        %3431 = vmatpush1.msra.mxu0 0.0
        %3432 = vmatprep.subr.mxu0 0.0
        %3433 = vmatpush1.msra.mxu0 0.0
        %3434 = vmatprep.subr.mxu0 0.0
        %3435 = vmatpush1.msra.mxu0 0.0
        %3436 = vmatprep.subr.mxu0 0.0
        %3437 = vmatpush1.msra.mxu0 0.0
        %3438 = vmatprep.subr.mxu0 0.0
        %3439 = vmatpush1.msra.mxu0 0.0
        %3440 = vmatprep.subr.mxu0 0.0
        %3441 = vmatpush1.msra.mxu0 0.0
        %3442 = vmatprep.subr.mxu0 0.0
        %3443 = vmatpush1.msra.mxu0 0.0
        %3444 = vmatprep.subr.mxu0 0.0
        %3445 = vmatpush1.msra.mxu0 0.0
        %3446 = vmatprep.subr.mxu0 0.0
        %3447 = vmatpush1.msra.mxu0 0.0
        %3448 = vmatprep.subr.mxu0 0.0
        %3449 = vmatpush1.msra.mxu0 0.0
        %3450 = vmatprep.subr.mxu0 0.0
        %3451 = vmatpush1.msra.mxu0 0.0
        %3452 = vmatprep.subr.mxu0 0.0
        %3453 = vmatpush1.msra.mxu0 0.0
        %3454 = vmatprep.subr.mxu0 0.0
        %3455 = vmatpush1.msra.mxu0 0.0
        %3456 = vmatprep.subr.mxu0 0.0
        %3457 = vmatpush1.msra.mxu0 0.0
        %3458 = vmatprep.subr.mxu0 0.0
        %3459 = vmatpush1.msra.mxu0 0.0
        %3460 = vmatprep.mubr.f32.mxu0 0.0
        %v3461 = vand.u32 %v2912, 4294901760
        %3462 = vmatmul.mubr.f32.gmra.mrb[0].mxu0 %v3461
        %v3463 = vpop.f32.mrb[0].mxu0
        %v3464 = vadd.f32 %v3345, %v3463
        %v3465 = vpop.f32.mrb[0].mxu0
        %3466 = vdwg.mxu0
        %3467 = vmatprep.subr.mxu0 0.0
        %v3468 = vand.u32 %v2911, 4294901760
        %3469 = vmatpush1.msra.mxu0 %v3468
        %3470 = vmatprep.subr.mxu0 0.0
        %v3471 = vand.u32 %v2911, 4294901760
        %3472 = vmatpush1.msra.mxu0 %v3471
        %3473 = vmatprep.subr.mxu0 0.0
        %v3474 = vand.u32 %v2911, 4294901760
        %3475 = vmatpush1.msra.mxu0 %v3474
        %3476 = vmatprep.subr.mxu0 0.0
        %v3477 = vand.u32 %v2911, 4294901760
        %3478 = vmatpush1.msra.mxu0 %v3477
        %3479 = vmatprep.subr.mxu0 0.0
        %v3480 = vand.u32 %v2911, 4294901760
        %3481 = vmatpush1.msra.mxu0 %v3480
        %3482 = vmatprep.subr.mxu0 0.0
        %v3483 = vand.u32 %v2911, 4294901760
        %3484 = vmatpush1.msra.mxu0 %v3483
        %3485 = vmatprep.subr.mxu0 0.0
        %v3486 = vand.u32 %v2911, 4294901760
        %3487 = vmatpush1.msra.mxu0 %v3486
        %3488 = vmatprep.subr.mxu0 0.0
        %v3489 = vand.u32 %v2911, 4294901760
        %3490 = vmatpush1.msra.mxu0 %v3489
        %3491 = vmatprep.subr.mxu0 0.0
        %v3492 = vand.u32 %v2911, 4294901760
        %3493 = vmatpush1.msra.mxu0 %v3492
        %3494 = vmatprep.subr.mxu0 0.0
        %v3495 = vand.u32 %v2911, 4294901760
        %3496 = vmatpush1.msra.mxu0 %v3495
        %3497 = vmatprep.subr.mxu0 0.0
        %v3498 = vand.u32 %v2911, 4294901760
        %3499 = vmatpush1.msra.mxu0 %v3498
        %3500 = vmatprep.subr.mxu0 0.0
        %v3501 = vand.u32 %v2911, 4294901760
        %3502 = vmatpush1.msra.mxu0 %v3501
        %3503 = vmatprep.subr.mxu0 0.0
        %v3504 = vand.u32 %v2911, 4294901760
        %3505 = vmatpush1.msra.mxu0 %v3504
        %3506 = vmatprep.subr.mxu0 0.0
        %v3507 = vand.u32 %v2911, 4294901760
        %3508 = vmatpush1.msra.mxu0 %v3507
        %3509 = vmatprep.subr.mxu0 0.0
        %v3510 = vand.u32 %v2911, 4294901760
        %3511 = vmatpush1.msra.mxu0 %v3510
        %3512 = vmatprep.subr.mxu0 0.0
        %v3513 = vand.u32 %v2911, 4294901760
        %3514 = vmatpush1.msra.mxu0 %v3513
        %3515 = vmatprep.subr.mxu0 0.0
        %3516 = vmatpush1.msra.mxu0 0.0
        %3517 = vmatprep.subr.mxu0 0.0
        %3518 = vmatpush1.msra.mxu0 0.0
        %3519 = vmatprep.subr.mxu0 0.0
        %3520 = vmatpush1.msra.mxu0 0.0
        %3521 = vmatprep.subr.mxu0 0.0
        %3522 = vmatpush1.msra.mxu0 0.0
        %3523 = vmatprep.subr.mxu0 0.0
        %3524 = vmatpush1.msra.mxu0 0.0
        %3525 = vmatprep.subr.mxu0 0.0
        %3526 = vmatpush1.msra.mxu0 0.0
        %3527 = vmatprep.subr.mxu0 0.0
        %3528 = vmatpush1.msra.mxu0 0.0
        %3529 = vmatprep.subr.mxu0 0.0
        %3530 = vmatpush1.msra.mxu0 0.0
        %3531 = vmatprep.subr.mxu0 0.0
        %3532 = vmatpush1.msra.mxu0 0.0
        %3533 = vmatprep.subr.mxu0 0.0
        %3534 = vmatpush1.msra.mxu0 0.0
        %3535 = vmatprep.subr.mxu0 0.0
        %3536 = vmatpush1.msra.mxu0 0.0
        %3537 = vmatprep.subr.mxu0 0.0
        %3538 = vmatpush1.msra.mxu0 0.0
        %3539 = vmatprep.subr.mxu0 0.0
        %3540 = vmatpush1.msra.mxu0 0.0
        %3541 = vmatprep.subr.mxu0 0.0
        %3542 = vmatpush1.msra.mxu0 0.0
        %3543 = vmatprep.subr.mxu0 0.0
        %3544 = vmatpush1.msra.mxu0 0.0
        %3545 = vmatprep.subr.mxu0 0.0
        %3546 = vmatpush1.msra.mxu0 0.0
        %3547 = vmatprep.mubr.f32.mxu0 0.0
        %v3548 = vand.u32 %v2912, 4294901760
        %3549 = vmatmul.mubr.f32.gmra.mrb[0].mxu0 %v3548
        %v3550 = vpop.f32.mrb[0].mxu0
        %v3551 = vadd.f32 %v3464, %v3550
        %v3552 = vpop.f32.mrb[0].mxu0
        %3553 = vdwg.mxu0
        %v3554 = vadd.f32 %v2908, %v3551
        %vm3555 = vcmp.eq.s32.totalorder %v326, 5
        %v3556 = vsel %vm3555, 1, 0
        %v3557 = vcvt.s32.f32 %v3556
        %v3558 = vmul.f32 %v323, %v323
        %3559 = vmatprep.subr.mxu0 0.0
        %v3560 = vand.u32 %v3557, 4294901760
        %3561 = vmatpush1.msra.mxu0 %v3560
        %3562 = vmatprep.subr.mxu0 0.0
        %v3563 = vand.u32 %v3557, 4294901760
        %3564 = vmatpush1.msra.mxu0 %v3563
        %3565 = vmatprep.subr.mxu0 0.0
        %v3566 = vand.u32 %v3557, 4294901760
        %3567 = vmatpush1.msra.mxu0 %v3566
        %3568 = vmatprep.subr.mxu0 0.0
        %v3569 = vand.u32 %v3557, 4294901760
        %3570 = vmatpush1.msra.mxu0 %v3569
        %3571 = vmatprep.subr.mxu0 0.0
        %v3572 = vand.u32 %v3557, 4294901760
        %3573 = vmatpush1.msra.mxu0 %v3572
        %3574 = vmatprep.subr.mxu0 0.0
        %v3575 = vand.u32 %v3557, 4294901760
        %3576 = vmatpush1.msra.mxu0 %v3575
        %3577 = vmatprep.subr.mxu0 0.0
        %v3578 = vand.u32 %v3557, 4294901760
        %3579 = vmatpush1.msra.mxu0 %v3578
        %3580 = vmatprep.subr.mxu0 0.0
        %v3581 = vand.u32 %v3557, 4294901760
        %3582 = vmatpush1.msra.mxu0 %v3581
        %3583 = vmatprep.subr.mxu0 0.0
        %v3584 = vand.u32 %v3557, 4294901760
        %3585 = vmatpush1.msra.mxu0 %v3584
        %3586 = vmatprep.subr.mxu0 0.0
        %v3587 = vand.u32 %v3557, 4294901760
        %3588 = vmatpush1.msra.mxu0 %v3587
        %3589 = vmatprep.subr.mxu0 0.0
        %v3590 = vand.u32 %v3557, 4294901760
        %3591 = vmatpush1.msra.mxu0 %v3590
        %3592 = vmatprep.subr.mxu0 0.0
        %v3593 = vand.u32 %v3557, 4294901760
        %3594 = vmatpush1.msra.mxu0 %v3593
        %3595 = vmatprep.subr.mxu0 0.0
        %v3596 = vand.u32 %v3557, 4294901760
        %3597 = vmatpush1.msra.mxu0 %v3596
        %3598 = vmatprep.subr.mxu0 0.0
        %v3599 = vand.u32 %v3557, 4294901760
        %3600 = vmatpush1.msra.mxu0 %v3599
        %3601 = vmatprep.subr.mxu0 0.0
        %v3602 = vand.u32 %v3557, 4294901760
        %3603 = vmatpush1.msra.mxu0 %v3602
        %3604 = vmatprep.subr.mxu0 0.0
        %v3605 = vand.u32 %v3557, 4294901760
        %3606 = vmatpush1.msra.mxu0 %v3605
        %3607 = vmatprep.subr.mxu0 0.0
        %3608 = vmatpush1.msra.mxu0 0.0
        %3609 = vmatprep.subr.mxu0 0.0
        %3610 = vmatpush1.msra.mxu0 0.0
        %3611 = vmatprep.subr.mxu0 0.0
        %3612 = vmatpush1.msra.mxu0 0.0
        %3613 = vmatprep.subr.mxu0 0.0
        %3614 = vmatpush1.msra.mxu0 0.0
        %3615 = vmatprep.subr.mxu0 0.0
        %3616 = vmatpush1.msra.mxu0 0.0
        %3617 = vmatprep.subr.mxu0 0.0
        %3618 = vmatpush1.msra.mxu0 0.0
        %3619 = vmatprep.subr.mxu0 0.0
        %3620 = vmatpush1.msra.mxu0 0.0
        %3621 = vmatprep.subr.mxu0 0.0
        %3622 = vmatpush1.msra.mxu0 0.0
        %3623 = vmatprep.subr.mxu0 0.0
        %3624 = vmatpush1.msra.mxu0 0.0
        %3625 = vmatprep.subr.mxu0 0.0
        %3626 = vmatpush1.msra.mxu0 0.0
        %3627 = vmatprep.subr.mxu0 0.0
        %3628 = vmatpush1.msra.mxu0 0.0
        %3629 = vmatprep.subr.mxu0 0.0
        %3630 = vmatpush1.msra.mxu0 0.0
        %3631 = vmatprep.subr.mxu0 0.0
        %3632 = vmatpush1.msra.mxu0 0.0
        %3633 = vmatprep.subr.mxu0 0.0
        %3634 = vmatpush1.msra.mxu0 0.0
        %3635 = vmatprep.subr.mxu0 0.0
        %3636 = vmatpush1.msra.mxu0 0.0
        %3637 = vmatprep.subr.mxu0 0.0
        %3638 = vmatpush1.msra.mxu0 0.0
        %3639 = vmatprep.mubr.f32.mxu0 0.0
        %v3640 = vand.u32 %v3558, 4294901760
        %v3641 = vsub.f32 %v3558, %v3640
        %v3642 = vand.u32 %v3641, 4294901760
        %v3643 = vsub.f32 %v3641, %v3642
        %v3644 = vand.u32 %v3643, 4294901760
        %3645 = vmatmul.mubr.f32.gmra.mrb[0].mxu0 %v3644
        %v3646 = vpop.f32.mrb[0].mxu0
        %v3647 = vadd.f32 0.0, %v3646
        %v3648 = vpop.f32.mrb[0].mxu0
        %3649 = vdwg.mxu0
        %3650 = vmatprep.subr.mxu0 0.0
        %v3651 = vand.u32 %v3557, 4294901760
        %v3652 = vsub.f32 %v3557, %v3651
        %v3653 = vand.u32 %v3652, 4294901760
        %v3654 = vsub.f32 %v3652, %v3653
        %v3655 = vand.u32 %v3654, 4294901760
        %3656 = vmatpush1.msra.mxu0 %v3655
        %3657 = vmatprep.subr.mxu0 0.0
        %v3658 = vand.u32 %v3557, 4294901760
        %v3659 = vsub.f32 %v3557, %v3658
        %v3660 = vand.u32 %v3659, 4294901760
        %v3661 = vsub.f32 %v3659, %v3660
        %v3662 = vand.u32 %v3661, 4294901760
        %3663 = vmatpush1.msra.mxu0 %v3662
        %3664 = vmatprep.subr.mxu0 0.0
        %v3665 = vand.u32 %v3557, 4294901760
        %v3666 = vsub.f32 %v3557, %v3665
        %v3667 = vand.u32 %v3666, 4294901760
        %v3668 = vsub.f32 %v3666, %v3667
        %v3669 = vand.u32 %v3668, 4294901760
        %3670 = vmatpush1.msra.mxu0 %v3669
        %3671 = vmatprep.subr.mxu0 0.0
        %v3672 = vand.u32 %v3557, 4294901760
        %v3673 = vsub.f32 %v3557, %v3672
        %v3674 = vand.u32 %v3673, 4294901760
        %v3675 = vsub.f32 %v3673, %v3674
        %v3676 = vand.u32 %v3675, 4294901760
        %3677 = vmatpush1.msra.mxu0 %v3676
        %3678 = vmatprep.subr.mxu0 0.0
        %v3679 = vand.u32 %v3557, 4294901760
        %v3680 = vsub.f32 %v3557, %v3679
        %v3681 = vand.u32 %v3680, 4294901760
        %v3682 = vsub.f32 %v3680, %v3681
        %v3683 = vand.u32 %v3682, 4294901760
        %3684 = vmatpush1.msra.mxu0 %v3683
        %3685 = vmatprep.subr.mxu0 0.0
        %v3686 = vand.u32 %v3557, 4294901760
        %v3687 = vsub.f32 %v3557, %v3686
        %v3688 = vand.u32 %v3687, 4294901760
        %v3689 = vsub.f32 %v3687, %v3688
        %v3690 = vand.u32 %v3689, 4294901760
        %3691 = vmatpush1.msra.mxu0 %v3690
        %3692 = vmatprep.subr.mxu0 0.0
        %v3693 = vand.u32 %v3557, 4294901760
        %v3694 = vsub.f32 %v3557, %v3693
        %v3695 = vand.u32 %v3694, 4294901760
        %v3696 = vsub.f32 %v3694, %v3695
        %v3697 = vand.u32 %v3696, 4294901760
        %3698 = vmatpush1.msra.mxu0 %v3697
        %3699 = vmatprep.subr.mxu0 0.0
        %v3700 = vand.u32 %v3557, 4294901760
        %v3701 = vsub.f32 %v3557, %v3700
        %v3702 = vand.u32 %v3701, 4294901760
        %v3703 = vsub.f32 %v3701, %v3702
        %v3704 = vand.u32 %v3703, 4294901760
        %3705 = vmatpush1.msra.mxu0 %v3704
        %3706 = vmatprep.subr.mxu0 0.0
        %v3707 = vand.u32 %v3557, 4294901760
        %v3708 = vsub.f32 %v3557, %v3707
        %v3709 = vand.u32 %v3708, 4294901760
        %v3710 = vsub.f32 %v3708, %v3709
        %v3711 = vand.u32 %v3710, 4294901760
        %3712 = vmatpush1.msra.mxu0 %v3711
        %3713 = vmatprep.subr.mxu0 0.0
        %v3714 = vand.u32 %v3557, 4294901760
        %v3715 = vsub.f32 %v3557, %v3714
        %v3716 = vand.u32 %v3715, 4294901760
        %v3717 = vsub.f32 %v3715, %v3716
        %v3718 = vand.u32 %v3717, 4294901760
        %3719 = vmatpush1.msra.mxu0 %v3718
        %3720 = vmatprep.subr.mxu0 0.0
        %v3721 = vand.u32 %v3557, 4294901760
        %v3722 = vsub.f32 %v3557, %v3721
        %v3723 = vand.u32 %v3722, 4294901760
        %v3724 = vsub.f32 %v3722, %v3723
        %v3725 = vand.u32 %v3724, 4294901760
        %3726 = vmatpush1.msra.mxu0 %v3725
        %3727 = vmatprep.subr.mxu0 0.0
        %v3728 = vand.u32 %v3557, 4294901760
        %v3729 = vsub.f32 %v3557, %v3728
        %v3730 = vand.u32 %v3729, 4294901760
        %v3731 = vsub.f32 %v3729, %v3730
        %v3732 = vand.u32 %v3731, 4294901760
        %3733 = vmatpush1.msra.mxu0 %v3732
        %3734 = vmatprep.subr.mxu0 0.0
        %v3735 = vand.u32 %v3557, 4294901760
        %v3736 = vsub.f32 %v3557, %v3735
        %v3737 = vand.u32 %v3736, 4294901760
        %v3738 = vsub.f32 %v3736, %v3737
        %v3739 = vand.u32 %v3738, 4294901760
        %3740 = vmatpush1.msra.mxu0 %v3739
        %3741 = vmatprep.subr.mxu0 0.0
        %v3742 = vand.u32 %v3557, 4294901760
        %v3743 = vsub.f32 %v3557, %v3742
        %v3744 = vand.u32 %v3743, 4294901760
        %v3745 = vsub.f32 %v3743, %v3744
        %v3746 = vand.u32 %v3745, 4294901760
        %3747 = vmatpush1.msra.mxu0 %v3746
        %3748 = vmatprep.subr.mxu0 0.0
        %v3749 = vand.u32 %v3557, 4294901760
        %v3750 = vsub.f32 %v3557, %v3749
        %v3751 = vand.u32 %v3750, 4294901760
        %v3752 = vsub.f32 %v3750, %v3751
        %v3753 = vand.u32 %v3752, 4294901760
        %3754 = vmatpush1.msra.mxu0 %v3753
        %3755 = vmatprep.subr.mxu0 0.0
        %v3756 = vand.u32 %v3557, 4294901760
        %v3757 = vsub.f32 %v3557, %v3756
        %v3758 = vand.u32 %v3757, 4294901760
        %v3759 = vsub.f32 %v3757, %v3758
        %v3760 = vand.u32 %v3759, 4294901760
        %3761 = vmatpush1.msra.mxu0 %v3760
        %3762 = vmatprep.subr.mxu0 0.0
        %3763 = vmatpush1.msra.mxu0 0.0
        %3764 = vmatprep.subr.mxu0 0.0
        %3765 = vmatpush1.msra.mxu0 0.0
        %3766 = vmatprep.subr.mxu0 0.0
        %3767 = vmatpush1.msra.mxu0 0.0
        %3768 = vmatprep.subr.mxu0 0.0
        %3769 = vmatpush1.msra.mxu0 0.0
        %3770 = vmatprep.subr.mxu0 0.0
        %3771 = vmatpush1.msra.mxu0 0.0
        %3772 = vmatprep.subr.mxu0 0.0
        %3773 = vmatpush1.msra.mxu0 0.0
        %3774 = vmatprep.subr.mxu0 0.0
        %3775 = vmatpush1.msra.mxu0 0.0
        %3776 = vmatprep.subr.mxu0 0.0
        %3777 = vmatpush1.msra.mxu0 0.0
        %3778 = vmatprep.subr.mxu0 0.0
        %3779 = vmatpush1.msra.mxu0 0.0
        %3780 = vmatprep.subr.mxu0 0.0
        %3781 = vmatpush1.msra.mxu0 0.0
        %3782 = vmatprep.subr.mxu0 0.0
        %3783 = vmatpush1.msra.mxu0 0.0
        %3784 = vmatprep.subr.mxu0 0.0
        %3785 = vmatpush1.msra.mxu0 0.0
        %3786 = vmatprep.subr.mxu0 0.0
        %3787 = vmatpush1.msra.mxu0 0.0
        %3788 = vmatprep.subr.mxu0 0.0
        %3789 = vmatpush1.msra.mxu0 0.0
        %3790 = vmatprep.subr.mxu0 0.0
        %3791 = vmatpush1.msra.mxu0 0.0
        %3792 = vmatprep.subr.mxu0 0.0
        %3793 = vmatpush1.msra.mxu0 0.0
        %3794 = vmatprep.mubr.f32.mxu0 0.0
        %v3795 = vand.u32 %v3558, 4294901760
        %3796 = vmatmul.mubr.f32.gmra.mrb[0].mxu0 %v3795
        %v3797 = vpop.f32.mrb[0].mxu0
        %v3798 = vadd.f32 %v3647, %v3797
        %v3799 = vpop.f32.mrb[0].mxu0
        %3800 = vdwg.mxu0
        %3801 = vmatprep.subr.mxu0 0.0
        %v3802 = vand.u32 %v3557, 4294901760
        %v3803 = vsub.f32 %v3557, %v3802
        %3804 = vmatpush1.msra.mxu0 %v3803
        %3805 = vmatprep.subr.mxu0 0.0
        %v3806 = vand.u32 %v3557, 4294901760
        %v3807 = vsub.f32 %v3557, %v3806
        %3808 = vmatpush1.msra.mxu0 %v3807
        %3809 = vmatprep.subr.mxu0 0.0
        %v3810 = vand.u32 %v3557, 4294901760
        %v3811 = vsub.f32 %v3557, %v3810
        %3812 = vmatpush1.msra.mxu0 %v3811
        %3813 = vmatprep.subr.mxu0 0.0
        %v3814 = vand.u32 %v3557, 4294901760
        %v3815 = vsub.f32 %v3557, %v3814
        %3816 = vmatpush1.msra.mxu0 %v3815
        %3817 = vmatprep.subr.mxu0 0.0
        %v3818 = vand.u32 %v3557, 4294901760
        %v3819 = vsub.f32 %v3557, %v3818
        %3820 = vmatpush1.msra.mxu0 %v3819
        %3821 = vmatprep.subr.mxu0 0.0
        %v3822 = vand.u32 %v3557, 4294901760
        %v3823 = vsub.f32 %v3557, %v3822
        %3824 = vmatpush1.msra.mxu0 %v3823
        %3825 = vmatprep.subr.mxu0 0.0
        %v3826 = vand.u32 %v3557, 4294901760
        %v3827 = vsub.f32 %v3557, %v3826
        %3828 = vmatpush1.msra.mxu0 %v3827
        %3829 = vmatprep.subr.mxu0 0.0
        %v3830 = vand.u32 %v3557, 4294901760
        %v3831 = vsub.f32 %v3557, %v3830
        %3832 = vmatpush1.msra.mxu0 %v3831
        %3833 = vmatprep.subr.mxu0 0.0
        %v3834 = vand.u32 %v3557, 4294901760
        %v3835 = vsub.f32 %v3557, %v3834
        %3836 = vmatpush1.msra.mxu0 %v3835
        %3837 = vmatprep.subr.mxu0 0.0
        %v3838 = vand.u32 %v3557, 4294901760
        %v3839 = vsub.f32 %v3557, %v3838
        %3840 = vmatpush1.msra.mxu0 %v3839
        %3841 = vmatprep.subr.mxu0 0.0
        %v3842 = vand.u32 %v3557, 4294901760
        %v3843 = vsub.f32 %v3557, %v3842
        %3844 = vmatpush1.msra.mxu0 %v3843
        %3845 = vmatprep.subr.mxu0 0.0
        %v3846 = vand.u32 %v3557, 4294901760
        %v3847 = vsub.f32 %v3557, %v3846
        %3848 = vmatpush1.msra.mxu0 %v3847
        %3849 = vmatprep.subr.mxu0 0.0
        %v3850 = vand.u32 %v3557, 4294901760
        %v3851 = vsub.f32 %v3557, %v3850
        %3852 = vmatpush1.msra.mxu0 %v3851
        %3853 = vmatprep.subr.mxu0 0.0
        %v3854 = vand.u32 %v3557, 4294901760
        %v3855 = vsub.f32 %v3557, %v3854
        %3856 = vmatpush1.msra.mxu0 %v3855
        %3857 = vmatprep.subr.mxu0 0.0
        %v3858 = vand.u32 %v3557, 4294901760
        %v3859 = vsub.f32 %v3557, %v3858
        %3860 = vmatpush1.msra.mxu0 %v3859
        %3861 = vmatprep.subr.mxu0 0.0
        %v3862 = vand.u32 %v3557, 4294901760
        %v3863 = vsub.f32 %v3557, %v3862
        %3864 = vmatpush1.msra.mxu0 %v3863
        %3865 = vmatprep.subr.mxu0 0.0
        %3866 = vmatpush1.msra.mxu0 0.0
        %3867 = vmatprep.subr.mxu0 0.0
        %3868 = vmatpush1.msra.mxu0 0.0
        %3869 = vmatprep.subr.mxu0 0.0
        %3870 = vmatpush1.msra.mxu0 0.0
        %3871 = vmatprep.subr.mxu0 0.0
        %3872 = vmatpush1.msra.mxu0 0.0
        %3873 = vmatprep.subr.mxu0 0.0
        %3874 = vmatpush1.msra.mxu0 0.0
        %3875 = vmatprep.subr.mxu0 0.0
        %3876 = vmatpush1.msra.mxu0 0.0
        %3877 = vmatprep.subr.mxu0 0.0
        %3878 = vmatpush1.msra.mxu0 0.0
        %3879 = vmatprep.subr.mxu0 0.0
        %3880 = vmatpush1.msra.mxu0 0.0
        %3881 = vmatprep.subr.mxu0 0.0
        %3882 = vmatpush1.msra.mxu0 0.0
        %3883 = vmatprep.subr.mxu0 0.0
        %3884 = vmatpush1.msra.mxu0 0.0
        %3885 = vmatprep.subr.mxu0 0.0
        %3886 = vmatpush1.msra.mxu0 0.0
        %3887 = vmatprep.subr.mxu0 0.0
        %3888 = vmatpush1.msra.mxu0 0.0
        %3889 = vmatprep.subr.mxu0 0.0
        %3890 = vmatpush1.msra.mxu0 0.0
        %3891 = vmatprep.subr.mxu0 0.0
        %3892 = vmatpush1.msra.mxu0 0.0
        %3893 = vmatprep.subr.mxu0 0.0
        %3894 = vmatpush1.msra.mxu0 0.0
        %3895 = vmatprep.subr.mxu0 0.0
        %3896 = vmatpush1.msra.mxu0 0.0
        %3897 = vmatprep.mubr.f32.mxu0 0.0
        %v3898 = vand.u32 %v3558, 4294901760
        %v3899 = vsub.f32 %v3558, %v3898
        %3900 = vmatmul.mubr.f32.gmra.mrb[0].mxu0 %v3899
        %v3901 = vpop.f32.mrb[0].mxu0
        %v3902 = vadd.f32 %v3798, %v3901
        %v3903 = vpop.f32.mrb[0].mxu0
        %3904 = vdwg.mxu0
        %3905 = vmatprep.subr.mxu0 0.0
        %v3906 = vand.u32 %v3557, 4294901760
        %3907 = vmatpush1.msra.mxu0 %v3906
        %3908 = vmatprep.subr.mxu0 0.0
        %v3909 = vand.u32 %v3557, 4294901760
        %3910 = vmatpush1.msra.mxu0 %v3909
        %3911 = vmatprep.subr.mxu0 0.0
        %v3912 = vand.u32 %v3557, 4294901760
        %3913 = vmatpush1.msra.mxu0 %v3912
        %3914 = vmatprep.subr.mxu0 0.0
        %v3915 = vand.u32 %v3557, 4294901760
        %3916 = vmatpush1.msra.mxu0 %v3915
        %3917 = vmatprep.subr.mxu0 0.0
        %v3918 = vand.u32 %v3557, 4294901760
        %3919 = vmatpush1.msra.mxu0 %v3918
        %3920 = vmatprep.subr.mxu0 0.0
        %v3921 = vand.u32 %v3557, 4294901760
        %3922 = vmatpush1.msra.mxu0 %v3921
        %3923 = vmatprep.subr.mxu0 0.0
        %v3924 = vand.u32 %v3557, 4294901760
        %3925 = vmatpush1.msra.mxu0 %v3924
        %3926 = vmatprep.subr.mxu0 0.0
        %v3927 = vand.u32 %v3557, 4294901760
        %3928 = vmatpush1.msra.mxu0 %v3927
        %3929 = vmatprep.subr.mxu0 0.0
        %v3930 = vand.u32 %v3557, 4294901760
        %3931 = vmatpush1.msra.mxu0 %v3930
        %3932 = vmatprep.subr.mxu0 0.0
        %v3933 = vand.u32 %v3557, 4294901760
        %3934 = vmatpush1.msra.mxu0 %v3933
        %3935 = vmatprep.subr.mxu0 0.0
        %v3936 = vand.u32 %v3557, 4294901760
        %3937 = vmatpush1.msra.mxu0 %v3936
        %3938 = vmatprep.subr.mxu0 0.0
        %v3939 = vand.u32 %v3557, 4294901760
        %3940 = vmatpush1.msra.mxu0 %v3939
        %3941 = vmatprep.subr.mxu0 0.0
        %v3942 = vand.u32 %v3557, 4294901760
        %3943 = vmatpush1.msra.mxu0 %v3942
        %3944 = vmatprep.subr.mxu0 0.0
        %v3945 = vand.u32 %v3557, 4294901760
        %3946 = vmatpush1.msra.mxu0 %v3945
        %3947 = vmatprep.subr.mxu0 0.0
        %v3948 = vand.u32 %v3557, 4294901760
        %3949 = vmatpush1.msra.mxu0 %v3948
        %3950 = vmatprep.subr.mxu0 0.0
        %v3951 = vand.u32 %v3557, 4294901760
        %3952 = vmatpush1.msra.mxu0 %v3951
        %3953 = vmatprep.subr.mxu0 0.0
        %3954 = vmatpush1.msra.mxu0 0.0
        %3955 = vmatprep.subr.mxu0 0.0
        %3956 = vmatpush1.msra.mxu0 0.0
        %3957 = vmatprep.subr.mxu0 0.0
        %3958 = vmatpush1.msra.mxu0 0.0
        %3959 = vmatprep.subr.mxu0 0.0
        %3960 = vmatpush1.msra.mxu0 0.0
        %3961 = vmatprep.subr.mxu0 0.0
        %3962 = vmatpush1.msra.mxu0 0.0
        %3963 = vmatprep.subr.mxu0 0.0
        %3964 = vmatpush1.msra.mxu0 0.0
        %3965 = vmatprep.subr.mxu0 0.0
        %3966 = vmatpush1.msra.mxu0 0.0
        %3967 = vmatprep.subr.mxu0 0.0
        %3968 = vmatpush1.msra.mxu0 0.0
        %3969 = vmatprep.subr.mxu0 0.0
        %3970 = vmatpush1.msra.mxu0 0.0
        %3971 = vmatprep.subr.mxu0 0.0
        %3972 = vmatpush1.msra.mxu0 0.0
        %3973 = vmatprep.subr.mxu0 0.0
        %3974 = vmatpush1.msra.mxu0 0.0
        %3975 = vmatprep.subr.mxu0 0.0
        %3976 = vmatpush1.msra.mxu0 0.0
        %3977 = vmatprep.subr.mxu0 0.0
        %3978 = vmatpush1.msra.mxu0 0.0
        %3979 = vmatprep.subr.mxu0 0.0
        %3980 = vmatpush1.msra.mxu0 0.0
        %3981 = vmatprep.subr.mxu0 0.0
        %3982 = vmatpush1.msra.mxu0 0.0
        %3983 = vmatprep.subr.mxu0 0.0
        %3984 = vmatpush1.msra.mxu0 0.0
        %3985 = vmatprep.mubr.f32.mxu0 0.0
        %v3986 = vand.u32 %v3558, 4294901760
        %v3987 = vsub.f32 %v3558, %v3986
        %v3988 = vand.u32 %v3987, 4294901760
        %3989 = vmatmul.mubr.f32.gmra.mrb[0].mxu0 %v3988
        %v3990 = vpop.f32.mrb[0].mxu0
        %v3991 = vadd.f32 %v3902, %v3990
        %v3992 = vpop.f32.mrb[0].mxu0
        %3993 = vdwg.mxu0
        %3994 = vmatprep.subr.mxu0 0.0
        %v3995 = vand.u32 %v3557, 4294901760
        %v3996 = vsub.f32 %v3557, %v3995
        %v3997 = vand.u32 %v3996, 4294901760
        %3998 = vmatpush1.msra.mxu0 %v3997
        %3999 = vmatprep.subr.mxu0 0.0
        %v4000 = vand.u32 %v3557, 4294901760
        %v4001 = vsub.f32 %v3557, %v4000
        %v4002 = vand.u32 %v4001, 4294901760
        %4003 = vmatpush1.msra.mxu0 %v4002
        %4004 = vmatprep.subr.mxu0 0.0
        %v4005 = vand.u32 %v3557, 4294901760
        %v4006 = vsub.f32 %v3557, %v4005
        %v4007 = vand.u32 %v4006, 4294901760
        %4008 = vmatpush1.msra.mxu0 %v4007
        %4009 = vmatprep.subr.mxu0 0.0
        %v4010 = vand.u32 %v3557, 4294901760
        %v4011 = vsub.f32 %v3557, %v4010
        %v4012 = vand.u32 %v4011, 4294901760
        %4013 = vmatpush1.msra.mxu0 %v4012
        %4014 = vmatprep.subr.mxu0 0.0
        %v4015 = vand.u32 %v3557, 4294901760
        %v4016 = vsub.f32 %v3557, %v4015
        %v4017 = vand.u32 %v4016, 4294901760
        %4018 = vmatpush1.msra.mxu0 %v4017
        %4019 = vmatprep.subr.mxu0 0.0
        %v4020 = vand.u32 %v3557, 4294901760
        %v4021 = vsub.f32 %v3557, %v4020
        %v4022 = vand.u32 %v4021, 4294901760
        %4023 = vmatpush1.msra.mxu0 %v4022
        %4024 = vmatprep.subr.mxu0 0.0
        %v4025 = vand.u32 %v3557, 4294901760
        %v4026 = vsub.f32 %v3557, %v4025
        %v4027 = vand.u32 %v4026, 4294901760
        %4028 = vmatpush1.msra.mxu0 %v4027
        %4029 = vmatprep.subr.mxu0 0.0
        %v4030 = vand.u32 %v3557, 4294901760
        %v4031 = vsub.f32 %v3557, %v4030
        %v4032 = vand.u32 %v4031, 4294901760
        %4033 = vmatpush1.msra.mxu0 %v4032
        %4034 = vmatprep.subr.mxu0 0.0
        %v4035 = vand.u32 %v3557, 4294901760
        %v4036 = vsub.f32 %v3557, %v4035
        %v4037 = vand.u32 %v4036, 4294901760
        %4038 = vmatpush1.msra.mxu0 %v4037
        %4039 = vmatprep.subr.mxu0 0.0
        %v4040 = vand.u32 %v3557, 4294901760
        %v4041 = vsub.f32 %v3557, %v4040
        %v4042 = vand.u32 %v4041, 4294901760
        %4043 = vmatpush1.msra.mxu0 %v4042
        %4044 = vmatprep.subr.mxu0 0.0
        %v4045 = vand.u32 %v3557, 4294901760
        %v4046 = vsub.f32 %v3557, %v4045
        %v4047 = vand.u32 %v4046, 4294901760
        %4048 = vmatpush1.msra.mxu0 %v4047
        %4049 = vmatprep.subr.mxu0 0.0
        %v4050 = vand.u32 %v3557, 4294901760
        %v4051 = vsub.f32 %v3557, %v4050
        %v4052 = vand.u32 %v4051, 4294901760
        %4053 = vmatpush1.msra.mxu0 %v4052
        %4054 = vmatprep.subr.mxu0 0.0
        %v4055 = vand.u32 %v3557, 4294901760
        %v4056 = vsub.f32 %v3557, %v4055
        %v4057 = vand.u32 %v4056, 4294901760
        %4058 = vmatpush1.msra.mxu0 %v4057
        %4059 = vmatprep.subr.mxu0 0.0
        %v4060 = vand.u32 %v3557, 4294901760
        %v4061 = vsub.f32 %v3557, %v4060
        %v4062 = vand.u32 %v4061, 4294901760
        %4063 = vmatpush1.msra.mxu0 %v4062
        %4064 = vmatprep.subr.mxu0 0.0
        %v4065 = vand.u32 %v3557, 4294901760
        %v4066 = vsub.f32 %v3557, %v4065
        %v4067 = vand.u32 %v4066, 4294901760
        %4068 = vmatpush1.msra.mxu0 %v4067
        %4069 = vmatprep.subr.mxu0 0.0
        %v4070 = vand.u32 %v3557, 4294901760
        %v4071 = vsub.f32 %v3557, %v4070
        %v4072 = vand.u32 %v4071, 4294901760
        %4073 = vmatpush1.msra.mxu0 %v4072
        %4074 = vmatprep.subr.mxu0 0.0
        %4075 = vmatpush1.msra.mxu0 0.0
        %4076 = vmatprep.subr.mxu0 0.0
        %4077 = vmatpush1.msra.mxu0 0.0
        %4078 = vmatprep.subr.mxu0 0.0
        %4079 = vmatpush1.msra.mxu0 0.0
        %4080 = vmatprep.subr.mxu0 0.0
        %4081 = vmatpush1.msra.mxu0 0.0
        %4082 = vmatprep.subr.mxu0 0.0
        %4083 = vmatpush1.msra.mxu0 0.0
        %4084 = vmatprep.subr.mxu0 0.0
        %4085 = vmatpush1.msra.mxu0 0.0
        %4086 = vmatprep.subr.mxu0 0.0
        %4087 = vmatpush1.msra.mxu0 0.0
        %4088 = vmatprep.subr.mxu0 0.0
        %4089 = vmatpush1.msra.mxu0 0.0
        %4090 = vmatprep.subr.mxu0 0.0
        %4091 = vmatpush1.msra.mxu0 0.0
        %4092 = vmatprep.subr.mxu0 0.0
        %4093 = vmatpush1.msra.mxu0 0.0
        %4094 = vmatprep.subr.mxu0 0.0
        %4095 = vmatpush1.msra.mxu0 0.0
        %4096 = vmatprep.subr.mxu0 0.0
        %4097 = vmatpush1.msra.mxu0 0.0
        %4098 = vmatprep.subr.mxu0 0.0
        %4099 = vmatpush1.msra.mxu0 0.0
        %4100 = vmatprep.subr.mxu0 0.0
        %4101 = vmatpush1.msra.mxu0 0.0
        %4102 = vmatprep.subr.mxu0 0.0
        %4103 = vmatpush1.msra.mxu0 0.0
        %4104 = vmatprep.subr.mxu0 0.0
        %4105 = vmatpush1.msra.mxu0 0.0
        %4106 = vmatprep.mubr.f32.mxu0 0.0
        %v4107 = vand.u32 %v3558, 4294901760
        %4108 = vmatmul.mubr.f32.gmra.mrb[0].mxu0 %v4107
        %v4109 = vpop.f32.mrb[0].mxu0
        %v4110 = vadd.f32 %v3991, %v4109
        %v4111 = vpop.f32.mrb[0].mxu0
        %4112 = vdwg.mxu0
        %4113 = vmatprep.subr.mxu0 0.0
        %v4114 = vand.u32 %v3557, 4294901760
        %4115 = vmatpush1.msra.mxu0 %v4114
        %4116 = vmatprep.subr.mxu0 0.0
        %v4117 = vand.u32 %v3557, 4294901760
        %4118 = vmatpush1.msra.mxu0 %v4117
        %4119 = vmatprep.subr.mxu0 0.0
        %v4120 = vand.u32 %v3557, 4294901760
        %4121 = vmatpush1.msra.mxu0 %v4120
        %4122 = vmatprep.subr.mxu0 0.0
        %v4123 = vand.u32 %v3557, 4294901760
        %4124 = vmatpush1.msra.mxu0 %v4123
        %4125 = vmatprep.subr.mxu0 0.0
        %v4126 = vand.u32 %v3557, 4294901760
        %4127 = vmatpush1.msra.mxu0 %v4126
        %4128 = vmatprep.subr.mxu0 0.0
        %v4129 = vand.u32 %v3557, 4294901760
        %4130 = vmatpush1.msra.mxu0 %v4129
        %4131 = vmatprep.subr.mxu0 0.0
        %v4132 = vand.u32 %v3557, 4294901760
        %4133 = vmatpush1.msra.mxu0 %v4132
        %4134 = vmatprep.subr.mxu0 0.0
        %v4135 = vand.u32 %v3557, 4294901760
        %4136 = vmatpush1.msra.mxu0 %v4135
        %4137 = vmatprep.subr.mxu0 0.0
        %v4138 = vand.u32 %v3557, 4294901760
        %4139 = vmatpush1.msra.mxu0 %v4138
        %4140 = vmatprep.subr.mxu0 0.0
        %v4141 = vand.u32 %v3557, 4294901760
        %4142 = vmatpush1.msra.mxu0 %v4141
        %4143 = vmatprep.subr.mxu0 0.0
        %v4144 = vand.u32 %v3557, 4294901760
        %4145 = vmatpush1.msra.mxu0 %v4144
        %4146 = vmatprep.subr.mxu0 0.0
        %v4147 = vand.u32 %v3557, 4294901760
        %4148 = vmatpush1.msra.mxu0 %v4147
        %4149 = vmatprep.subr.mxu0 0.0
        %v4150 = vand.u32 %v3557, 4294901760
        %4151 = vmatpush1.msra.mxu0 %v4150
        %4152 = vmatprep.subr.mxu0 0.0
        %v4153 = vand.u32 %v3557, 4294901760
        %4154 = vmatpush1.msra.mxu0 %v4153
        %4155 = vmatprep.subr.mxu0 0.0
        %v4156 = vand.u32 %v3557, 4294901760
        %4157 = vmatpush1.msra.mxu0 %v4156
        %4158 = vmatprep.subr.mxu0 0.0
        %v4159 = vand.u32 %v3557, 4294901760
        %4160 = vmatpush1.msra.mxu0 %v4159
        %4161 = vmatprep.subr.mxu0 0.0
        %4162 = vmatpush1.msra.mxu0 0.0
        %4163 = vmatprep.subr.mxu0 0.0
        %4164 = vmatpush1.msra.mxu0 0.0
        %4165 = vmatprep.subr.mxu0 0.0
        %4166 = vmatpush1.msra.mxu0 0.0
        %4167 = vmatprep.subr.mxu0 0.0
        %4168 = vmatpush1.msra.mxu0 0.0
        %4169 = vmatprep.subr.mxu0 0.0
        %4170 = vmatpush1.msra.mxu0 0.0
        %4171 = vmatprep.subr.mxu0 0.0
        %4172 = vmatpush1.msra.mxu0 0.0
        %4173 = vmatprep.subr.mxu0 0.0
        %4174 = vmatpush1.msra.mxu0 0.0
        %4175 = vmatprep.subr.mxu0 0.0
        %4176 = vmatpush1.msra.mxu0 0.0
        %4177 = vmatprep.subr.mxu0 0.0
        %4178 = vmatpush1.msra.mxu0 0.0
        %4179 = vmatprep.subr.mxu0 0.0
        %4180 = vmatpush1.msra.mxu0 0.0
        %4181 = vmatprep.subr.mxu0 0.0
        %4182 = vmatpush1.msra.mxu0 0.0
        %4183 = vmatprep.subr.mxu0 0.0
        %4184 = vmatpush1.msra.mxu0 0.0
        %4185 = vmatprep.subr.mxu0 0.0
        %4186 = vmatpush1.msra.mxu0 0.0
        %4187 = vmatprep.subr.mxu0 0.0
        %4188 = vmatpush1.msra.mxu0 0.0
        %4189 = vmatprep.subr.mxu0 0.0
        %4190 = vmatpush1.msra.mxu0 0.0
        %4191 = vmatprep.subr.mxu0 0.0
        %4192 = vmatpush1.msra.mxu0 0.0
        %4193 = vmatprep.mubr.f32.mxu0 0.0
        %v4194 = vand.u32 %v3558, 4294901760
        %4195 = vmatmul.mubr.f32.gmra.mrb[0].mxu0 %v4194
        %v4196 = vpop.f32.mrb[0].mxu0
        %v4197 = vadd.f32 %v4110, %v4196
        %v4198 = vpop.f32.mrb[0].mxu0
        %4199 = vdwg.mxu0
        %v4200 = vadd.f32 %v3554, %v4197
        %vm4201 = vcmp.eq.s32.totalorder %v326, 6
        %v4202 = vsel %vm4201, 1, 0
        %v4203 = vcvt.s32.f32 %v4202
        %v4204 = vmul.f32 %v324, %v324
        %4205 = vmatprep.subr.mxu0 0.0
        %v4206 = vand.u32 %v4203, 4294901760
        %4207 = vmatpush1.msra.mxu0 %v4206
        %4208 = vmatprep.subr.mxu0 0.0
        %v4209 = vand.u32 %v4203, 4294901760
        %4210 = vmatpush1.msra.mxu0 %v4209
        %4211 = vmatprep.subr.mxu0 0.0
        %v4212 = vand.u32 %v4203, 4294901760
        %4213 = vmatpush1.msra.mxu0 %v4212
        %4214 = vmatprep.subr.mxu0 0.0
        %v4215 = vand.u32 %v4203, 4294901760
        %4216 = vmatpush1.msra.mxu0 %v4215
        %4217 = vmatprep.subr.mxu0 0.0
        %v4218 = vand.u32 %v4203, 4294901760
        %4219 = vmatpush1.msra.mxu0 %v4218
        %4220 = vmatprep.subr.mxu0 0.0
        %v4221 = vand.u32 %v4203, 4294901760
        %4222 = vmatpush1.msra.mxu0 %v4221
        %4223 = vmatprep.subr.mxu0 0.0
        %v4224 = vand.u32 %v4203, 4294901760
        %4225 = vmatpush1.msra.mxu0 %v4224
        %4226 = vmatprep.subr.mxu0 0.0
        %v4227 = vand.u32 %v4203, 4294901760
        %4228 = vmatpush1.msra.mxu0 %v4227
        %4229 = vmatprep.subr.mxu0 0.0
        %v4230 = vand.u32 %v4203, 4294901760
        %4231 = vmatpush1.msra.mxu0 %v4230
        %4232 = vmatprep.subr.mxu0 0.0
        %v4233 = vand.u32 %v4203, 4294901760
        %4234 = vmatpush1.msra.mxu0 %v4233
        %4235 = vmatprep.subr.mxu0 0.0
        %v4236 = vand.u32 %v4203, 4294901760
        %4237 = vmatpush1.msra.mxu0 %v4236
        %4238 = vmatprep.subr.mxu0 0.0
        %v4239 = vand.u32 %v4203, 4294901760
        %4240 = vmatpush1.msra.mxu0 %v4239
        %4241 = vmatprep.subr.mxu0 0.0
        %v4242 = vand.u32 %v4203, 4294901760
        %4243 = vmatpush1.msra.mxu0 %v4242
        %4244 = vmatprep.subr.mxu0 0.0
        %v4245 = vand.u32 %v4203, 4294901760
        %4246 = vmatpush1.msra.mxu0 %v4245
        %4247 = vmatprep.subr.mxu0 0.0
        %v4248 = vand.u32 %v4203, 4294901760
        %4249 = vmatpush1.msra.mxu0 %v4248
        %4250 = vmatprep.subr.mxu0 0.0
        %v4251 = vand.u32 %v4203, 4294901760
        %4252 = vmatpush1.msra.mxu0 %v4251
        %4253 = vmatprep.subr.mxu0 0.0
        %4254 = vmatpush1.msra.mxu0 0.0
        %4255 = vmatprep.subr.mxu0 0.0
        %4256 = vmatpush1.msra.mxu0 0.0
        %4257 = vmatprep.subr.mxu0 0.0
        %4258 = vmatpush1.msra.mxu0 0.0
        %4259 = vmatprep.subr.mxu0 0.0
        %4260 = vmatpush1.msra.mxu0 0.0
        %4261 = vmatprep.subr.mxu0 0.0
        %4262 = vmatpush1.msra.mxu0 0.0
        %4263 = vmatprep.subr.mxu0 0.0
        %4264 = vmatpush1.msra.mxu0 0.0
        %4265 = vmatprep.subr.mxu0 0.0
        %4266 = vmatpush1.msra.mxu0 0.0
        %4267 = vmatprep.subr.mxu0 0.0
        %4268 = vmatpush1.msra.mxu0 0.0
        %4269 = vmatprep.subr.mxu0 0.0
        %4270 = vmatpush1.msra.mxu0 0.0
        %4271 = vmatprep.subr.mxu0 0.0
        %4272 = vmatpush1.msra.mxu0 0.0
        %4273 = vmatprep.subr.mxu0 0.0
        %4274 = vmatpush1.msra.mxu0 0.0
        %4275 = vmatprep.subr.mxu0 0.0
        %4276 = vmatpush1.msra.mxu0 0.0
        %4277 = vmatprep.subr.mxu0 0.0
        %4278 = vmatpush1.msra.mxu0 0.0
        %4279 = vmatprep.subr.mxu0 0.0
        %4280 = vmatpush1.msra.mxu0 0.0
        %4281 = vmatprep.subr.mxu0 0.0
        %4282 = vmatpush1.msra.mxu0 0.0
        %4283 = vmatprep.subr.mxu0 0.0
        %4284 = vmatpush1.msra.mxu0 0.0
        %4285 = vmatprep.mubr.f32.mxu0 0.0
        %v4286 = vand.u32 %v4204, 4294901760
        %v4287 = vsub.f32 %v4204, %v4286
        %v4288 = vand.u32 %v4287, 4294901760
        %v4289 = vsub.f32 %v4287, %v4288
        %v4290 = vand.u32 %v4289, 4294901760
        %4291 = vmatmul.mubr.f32.gmra.mrb[0].mxu0 %v4290
        %v4292 = vpop.f32.mrb[0].mxu0
        %v4293 = vadd.f32 0.0, %v4292
        %v4294 = vpop.f32.mrb[0].mxu0
        %4295 = vdwg.mxu0
        %4296 = vmatprep.subr.mxu0 0.0
        %v4297 = vand.u32 %v4203, 4294901760
        %v4298 = vsub.f32 %v4203, %v4297
        %v4299 = vand.u32 %v4298, 4294901760
        %v4300 = vsub.f32 %v4298, %v4299
        %v4301 = vand.u32 %v4300, 4294901760
        %4302 = vmatpush1.msra.mxu0 %v4301
        %4303 = vmatprep.subr.mxu0 0.0
        %v4304 = vand.u32 %v4203, 4294901760
        %v4305 = vsub.f32 %v4203, %v4304
        %v4306 = vand.u32 %v4305, 4294901760
        %v4307 = vsub.f32 %v4305, %v4306
        %v4308 = vand.u32 %v4307, 4294901760
        %4309 = vmatpush1.msra.mxu0 %v4308
        %4310 = vmatprep.subr.mxu0 0.0
        %v4311 = vand.u32 %v4203, 4294901760
        %v4312 = vsub.f32 %v4203, %v4311
        %v4313 = vand.u32 %v4312, 4294901760
        %v4314 = vsub.f32 %v4312, %v4313
        %v4315 = vand.u32 %v4314, 4294901760
        %4316 = vmatpush1.msra.mxu0 %v4315
        %4317 = vmatprep.subr.mxu0 0.0
        %v4318 = vand.u32 %v4203, 4294901760
        %v4319 = vsub.f32 %v4203, %v4318
        %v4320 = vand.u32 %v4319, 4294901760
        %v4321 = vsub.f32 %v4319, %v4320
        %v4322 = vand.u32 %v4321, 4294901760
        %4323 = vmatpush1.msra.mxu0 %v4322
        %4324 = vmatprep.subr.mxu0 0.0
        %v4325 = vand.u32 %v4203, 4294901760
        %v4326 = vsub.f32 %v4203, %v4325
        %v4327 = vand.u32 %v4326, 4294901760
        %v4328 = vsub.f32 %v4326, %v4327
        %v4329 = vand.u32 %v4328, 4294901760
        %4330 = vmatpush1.msra.mxu0 %v4329
        %4331 = vmatprep.subr.mxu0 0.0
        %v4332 = vand.u32 %v4203, 4294901760
        %v4333 = vsub.f32 %v4203, %v4332
        %v4334 = vand.u32 %v4333, 4294901760
        %v4335 = vsub.f32 %v4333, %v4334
        %v4336 = vand.u32 %v4335, 4294901760
        %4337 = vmatpush1.msra.mxu0 %v4336
        %4338 = vmatprep.subr.mxu0 0.0
        %v4339 = vand.u32 %v4203, 4294901760
        %v4340 = vsub.f32 %v4203, %v4339
        %v4341 = vand.u32 %v4340, 4294901760
        %v4342 = vsub.f32 %v4340, %v4341
        %v4343 = vand.u32 %v4342, 4294901760
        %4344 = vmatpush1.msra.mxu0 %v4343
        %4345 = vmatprep.subr.mxu0 0.0
        %v4346 = vand.u32 %v4203, 4294901760
        %v4347 = vsub.f32 %v4203, %v4346
        %v4348 = vand.u32 %v4347, 4294901760
        %v4349 = vsub.f32 %v4347, %v4348
        %v4350 = vand.u32 %v4349, 4294901760
        %4351 = vmatpush1.msra.mxu0 %v4350
        %4352 = vmatprep.subr.mxu0 0.0
        %v4353 = vand.u32 %v4203, 4294901760
        %v4354 = vsub.f32 %v4203, %v4353
        %v4355 = vand.u32 %v4354, 4294901760
        %v4356 = vsub.f32 %v4354, %v4355
        %v4357 = vand.u32 %v4356, 4294901760
        %4358 = vmatpush1.msra.mxu0 %v4357
        %4359 = vmatprep.subr.mxu0 0.0
        %v4360 = vand.u32 %v4203, 4294901760
        %v4361 = vsub.f32 %v4203, %v4360
        %v4362 = vand.u32 %v4361, 4294901760
        %v4363 = vsub.f32 %v4361, %v4362
        %v4364 = vand.u32 %v4363, 4294901760
        %4365 = vmatpush1.msra.mxu0 %v4364
        %4366 = vmatprep.subr.mxu0 0.0
        %v4367 = vand.u32 %v4203, 4294901760
        %v4368 = vsub.f32 %v4203, %v4367
        %v4369 = vand.u32 %v4368, 4294901760
        %v4370 = vsub.f32 %v4368, %v4369
        %v4371 = vand.u32 %v4370, 4294901760
        %4372 = vmatpush1.msra.mxu0 %v4371
        %4373 = vmatprep.subr.mxu0 0.0
        %v4374 = vand.u32 %v4203, 4294901760
        %v4375 = vsub.f32 %v4203, %v4374
        %v4376 = vand.u32 %v4375, 4294901760
        %v4377 = vsub.f32 %v4375, %v4376
        %v4378 = vand.u32 %v4377, 4294901760
        %4379 = vmatpush1.msra.mxu0 %v4378
        %4380 = vmatprep.subr.mxu0 0.0
        %v4381 = vand.u32 %v4203, 4294901760
        %v4382 = vsub.f32 %v4203, %v4381
        %v4383 = vand.u32 %v4382, 4294901760
        %v4384 = vsub.f32 %v4382, %v4383
        %v4385 = vand.u32 %v4384, 4294901760
        %4386 = vmatpush1.msra.mxu0 %v4385
        %4387 = vmatprep.subr.mxu0 0.0
        %v4388 = vand.u32 %v4203, 4294901760
        %v4389 = vsub.f32 %v4203, %v4388
        %v4390 = vand.u32 %v4389, 4294901760
        %v4391 = vsub.f32 %v4389, %v4390
        %v4392 = vand.u32 %v4391, 4294901760
        %4393 = vmatpush1.msra.mxu0 %v4392
        %4394 = vmatprep.subr.mxu0 0.0
        %v4395 = vand.u32 %v4203, 4294901760
        %v4396 = vsub.f32 %v4203, %v4395
        %v4397 = vand.u32 %v4396, 4294901760
        %v4398 = vsub.f32 %v4396, %v4397
        %v4399 = vand.u32 %v4398, 4294901760
        %4400 = vmatpush1.msra.mxu0 %v4399
        %4401 = vmatprep.subr.mxu0 0.0
        %v4402 = vand.u32 %v4203, 4294901760
        %v4403 = vsub.f32 %v4203, %v4402
        %v4404 = vand.u32 %v4403, 4294901760
        %v4405 = vsub.f32 %v4403, %v4404
        %v4406 = vand.u32 %v4405, 4294901760
        %4407 = vmatpush1.msra.mxu0 %v4406
        %4408 = vmatprep.subr.mxu0 0.0
        %4409 = vmatpush1.msra.mxu0 0.0
        %4410 = vmatprep.subr.mxu0 0.0
        %4411 = vmatpush1.msra.mxu0 0.0
        %4412 = vmatprep.subr.mxu0 0.0
        %4413 = vmatpush1.msra.mxu0 0.0
        %4414 = vmatprep.subr.mxu0 0.0
        %4415 = vmatpush1.msra.mxu0 0.0
        %4416 = vmatprep.subr.mxu0 0.0
        %4417 = vmatpush1.msra.mxu0 0.0
        %4418 = vmatprep.subr.mxu0 0.0
        %4419 = vmatpush1.msra.mxu0 0.0
        %4420 = vmatprep.subr.mxu0 0.0
        %4421 = vmatpush1.msra.mxu0 0.0
        %4422 = vmatprep.subr.mxu0 0.0
        %4423 = vmatpush1.msra.mxu0 0.0
        %4424 = vmatprep.subr.mxu0 0.0
        %4425 = vmatpush1.msra.mxu0 0.0
        %4426 = vmatprep.subr.mxu0 0.0
        %4427 = vmatpush1.msra.mxu0 0.0
        %4428 = vmatprep.subr.mxu0 0.0
        %4429 = vmatpush1.msra.mxu0 0.0
        %4430 = vmatprep.subr.mxu0 0.0
        %4431 = vmatpush1.msra.mxu0 0.0
        %4432 = vmatprep.subr.mxu0 0.0
        %4433 = vmatpush1.msra.mxu0 0.0
        %4434 = vmatprep.subr.mxu0 0.0
        %4435 = vmatpush1.msra.mxu0 0.0
        %4436 = vmatprep.subr.mxu0 0.0
        %4437 = vmatpush1.msra.mxu0 0.0
        %4438 = vmatprep.subr.mxu0 0.0
        %4439 = vmatpush1.msra.mxu0 0.0
        %4440 = vmatprep.mubr.f32.mxu0 0.0
        %v4441 = vand.u32 %v4204, 4294901760
        %4442 = vmatmul.mubr.f32.gmra.mrb[0].mxu0 %v4441
        %v4443 = vpop.f32.mrb[0].mxu0
        %v4444 = vadd.f32 %v4293, %v4443
        %v4445 = vpop.f32.mrb[0].mxu0
        %4446 = vdwg.mxu0
        %4447 = vmatprep.subr.mxu0 0.0
        %v4448 = vand.u32 %v4203, 4294901760
        %v4449 = vsub.f32 %v4203, %v4448
        %4450 = vmatpush1.msra.mxu0 %v4449
        %4451 = vmatprep.subr.mxu0 0.0
        %v4452 = vand.u32 %v4203, 4294901760
        %v4453 = vsub.f32 %v4203, %v4452
        %4454 = vmatpush1.msra.mxu0 %v4453
        %4455 = vmatprep.subr.mxu0 0.0
        %v4456 = vand.u32 %v4203, 4294901760
        %v4457 = vsub.f32 %v4203, %v4456
        %4458 = vmatpush1.msra.mxu0 %v4457
        %4459 = vmatprep.subr.mxu0 0.0
        %v4460 = vand.u32 %v4203, 4294901760
        %v4461 = vsub.f32 %v4203, %v4460
        %4462 = vmatpush1.msra.mxu0 %v4461
        %4463 = vmatprep.subr.mxu0 0.0
        %v4464 = vand.u32 %v4203, 4294901760
        %v4465 = vsub.f32 %v4203, %v4464
        %4466 = vmatpush1.msra.mxu0 %v4465
        %4467 = vmatprep.subr.mxu0 0.0
        %v4468 = vand.u32 %v4203, 4294901760
        %v4469 = vsub.f32 %v4203, %v4468
        %4470 = vmatpush1.msra.mxu0 %v4469
        %4471 = vmatprep.subr.mxu0 0.0
        %v4472 = vand.u32 %v4203, 4294901760
        %v4473 = vsub.f32 %v4203, %v4472
        %4474 = vmatpush1.msra.mxu0 %v4473
        %4475 = vmatprep.subr.mxu0 0.0
        %v4476 = vand.u32 %v4203, 4294901760
        %v4477 = vsub.f32 %v4203, %v4476
        %4478 = vmatpush1.msra.mxu0 %v4477
        %4479 = vmatprep.subr.mxu0 0.0
        %v4480 = vand.u32 %v4203, 4294901760
        %v4481 = vsub.f32 %v4203, %v4480
        %4482 = vmatpush1.msra.mxu0 %v4481
        %4483 = vmatprep.subr.mxu0 0.0
        %v4484 = vand.u32 %v4203, 4294901760
        %v4485 = vsub.f32 %v4203, %v4484
        %4486 = vmatpush1.msra.mxu0 %v4485
        %4487 = vmatprep.subr.mxu0 0.0
        %v4488 = vand.u32 %v4203, 4294901760
        %v4489 = vsub.f32 %v4203, %v4488
        %4490 = vmatpush1.msra.mxu0 %v4489
        %4491 = vmatprep.subr.mxu0 0.0
        %v4492 = vand.u32 %v4203, 4294901760
        %v4493 = vsub.f32 %v4203, %v4492
        %4494 = vmatpush1.msra.mxu0 %v4493
        %4495 = vmatprep.subr.mxu0 0.0
        %v4496 = vand.u32 %v4203, 4294901760
        %v4497 = vsub.f32 %v4203, %v4496
        %4498 = vmatpush1.msra.mxu0 %v4497
        %4499 = vmatprep.subr.mxu0 0.0
        %v4500 = vand.u32 %v4203, 4294901760
        %v4501 = vsub.f32 %v4203, %v4500
        %4502 = vmatpush1.msra.mxu0 %v4501
        %4503 = vmatprep.subr.mxu0 0.0
        %v4504 = vand.u32 %v4203, 4294901760
        %v4505 = vsub.f32 %v4203, %v4504
        %4506 = vmatpush1.msra.mxu0 %v4505
        %4507 = vmatprep.subr.mxu0 0.0
        %v4508 = vand.u32 %v4203, 4294901760
        %v4509 = vsub.f32 %v4203, %v4508
        %4510 = vmatpush1.msra.mxu0 %v4509
        %4511 = vmatprep.subr.mxu0 0.0
        %4512 = vmatpush1.msra.mxu0 0.0
        %4513 = vmatprep.subr.mxu0 0.0
        %4514 = vmatpush1.msra.mxu0 0.0
        %4515 = vmatprep.subr.mxu0 0.0
        %4516 = vmatpush1.msra.mxu0 0.0
        %4517 = vmatprep.subr.mxu0 0.0
        %4518 = vmatpush1.msra.mxu0 0.0
        %4519 = vmatprep.subr.mxu0 0.0
        %4520 = vmatpush1.msra.mxu0 0.0
        %4521 = vmatprep.subr.mxu0 0.0
        %4522 = vmatpush1.msra.mxu0 0.0
        %4523 = vmatprep.subr.mxu0 0.0
        %4524 = vmatpush1.msra.mxu0 0.0
        %4525 = vmatprep.subr.mxu0 0.0
        %4526 = vmatpush1.msra.mxu0 0.0
        %4527 = vmatprep.subr.mxu0 0.0
        %4528 = vmatpush1.msra.mxu0 0.0
        %4529 = vmatprep.subr.mxu0 0.0
        %4530 = vmatpush1.msra.mxu0 0.0
        %4531 = vmatprep.subr.mxu0 0.0
        %4532 = vmatpush1.msra.mxu0 0.0
        %4533 = vmatprep.subr.mxu0 0.0
        %4534 = vmatpush1.msra.mxu0 0.0
        %4535 = vmatprep.subr.mxu0 0.0
        %4536 = vmatpush1.msra.mxu0 0.0
        %4537 = vmatprep.subr.mxu0 0.0
        %4538 = vmatpush1.msra.mxu0 0.0
        %4539 = vmatprep.subr.mxu0 0.0
        %4540 = vmatpush1.msra.mxu0 0.0
        %4541 = vmatprep.subr.mxu0 0.0
        %4542 = vmatpush1.msra.mxu0 0.0
        %4543 = vmatprep.mubr.f32.mxu0 0.0
        %v4544 = vand.u32 %v4204, 4294901760
        %v4545 = vsub.f32 %v4204, %v4544
        %4546 = vmatmul.mubr.f32.gmra.mrb[0].mxu0 %v4545
        %v4547 = vpop.f32.mrb[0].mxu0
        %v4548 = vadd.f32 %v4444, %v4547
        %v4549 = vpop.f32.mrb[0].mxu0
        %4550 = vdwg.mxu0
        %4551 = vmatprep.subr.mxu0 0.0
        %v4552 = vand.u32 %v4203, 4294901760
        %4553 = vmatpush1.msra.mxu0 %v4552
        %4554 = vmatprep.subr.mxu0 0.0
        %v4555 = vand.u32 %v4203, 4294901760
        %4556 = vmatpush1.msra.mxu0 %v4555
        %4557 = vmatprep.subr.mxu0 0.0
        %v4558 = vand.u32 %v4203, 4294901760
        %4559 = vmatpush1.msra.mxu0 %v4558
        %4560 = vmatprep.subr.mxu0 0.0
        %v4561 = vand.u32 %v4203, 4294901760
        %4562 = vmatpush1.msra.mxu0 %v4561
        %4563 = vmatprep.subr.mxu0 0.0
        %v4564 = vand.u32 %v4203, 4294901760
        %4565 = vmatpush1.msra.mxu0 %v4564
        %4566 = vmatprep.subr.mxu0 0.0
        %v4567 = vand.u32 %v4203, 4294901760
        %4568 = vmatpush1.msra.mxu0 %v4567
        %4569 = vmatprep.subr.mxu0 0.0
        %v4570 = vand.u32 %v4203, 4294901760
        %4571 = vmatpush1.msra.mxu0 %v4570
        %4572 = vmatprep.subr.mxu0 0.0
        %v4573 = vand.u32 %v4203, 4294901760
        %4574 = vmatpush1.msra.mxu0 %v4573
        %4575 = vmatprep.subr.mxu0 0.0
        %v4576 = vand.u32 %v4203, 4294901760
        %4577 = vmatpush1.msra.mxu0 %v4576
        %4578 = vmatprep.subr.mxu0 0.0
        %v4579 = vand.u32 %v4203, 4294901760
        %4580 = vmatpush1.msra.mxu0 %v4579
        %4581 = vmatprep.subr.mxu0 0.0
        %v4582 = vand.u32 %v4203, 4294901760
        %4583 = vmatpush1.msra.mxu0 %v4582
        %4584 = vmatprep.subr.mxu0 0.0
        %v4585 = vand.u32 %v4203, 4294901760
        %4586 = vmatpush1.msra.mxu0 %v4585
        %4587 = vmatprep.subr.mxu0 0.0
        %v4588 = vand.u32 %v4203, 4294901760
        %4589 = vmatpush1.msra.mxu0 %v4588
        %4590 = vmatprep.subr.mxu0 0.0
        %v4591 = vand.u32 %v4203, 4294901760
        %4592 = vmatpush1.msra.mxu0 %v4591
        %4593 = vmatprep.subr.mxu0 0.0
        %v4594 = vand.u32 %v4203, 4294901760
        %4595 = vmatpush1.msra.mxu0 %v4594
        %4596 = vmatprep.subr.mxu0 0.0
        %v4597 = vand.u32 %v4203, 4294901760
        %4598 = vmatpush1.msra.mxu0 %v4597
        %4599 = vmatprep.subr.mxu0 0.0
        %4600 = vmatpush1.msra.mxu0 0.0
        %4601 = vmatprep.subr.mxu0 0.0
        %4602 = vmatpush1.msra.mxu0 0.0
        %4603 = vmatprep.subr.mxu0 0.0
        %4604 = vmatpush1.msra.mxu0 0.0
        %4605 = vmatprep.subr.mxu0 0.0
        %4606 = vmatpush1.msra.mxu0 0.0
        %4607 = vmatprep.subr.mxu0 0.0
        %4608 = vmatpush1.msra.mxu0 0.0
        %4609 = vmatprep.subr.mxu0 0.0
        %4610 = vmatpush1.msra.mxu0 0.0
        %4611 = vmatprep.subr.mxu0 0.0
        %4612 = vmatpush1.msra.mxu0 0.0
        %4613 = vmatprep.subr.mxu0 0.0
        %4614 = vmatpush1.msra.mxu0 0.0
        %4615 = vmatprep.subr.mxu0 0.0
        %4616 = vmatpush1.msra.mxu0 0.0
        %4617 = vmatprep.subr.mxu0 0.0
        %4618 = vmatpush1.msra.mxu0 0.0
        %4619 = vmatprep.subr.mxu0 0.0
        %4620 = vmatpush1.msra.mxu0 0.0
        %4621 = vmatprep.subr.mxu0 0.0
        %4622 = vmatpush1.msra.mxu0 0.0
        %4623 = vmatprep.subr.mxu0 0.0
        %4624 = vmatpush1.msra.mxu0 0.0
        %4625 = vmatprep.subr.mxu0 0.0
        %4626 = vmatpush1.msra.mxu0 0.0
        %4627 = vmatprep.subr.mxu0 0.0
        %4628 = vmatpush1.msra.mxu0 0.0
        %4629 = vmatprep.subr.mxu0 0.0
        %4630 = vmatpush1.msra.mxu0 0.0
        %4631 = vmatprep.mubr.f32.mxu0 0.0
        %v4632 = vand.u32 %v4204, 4294901760
        %v4633 = vsub.f32 %v4204, %v4632
        %v4634 = vand.u32 %v4633, 4294901760
        %4635 = vmatmul.mubr.f32.gmra.mrb[0].mxu0 %v4634
        %v4636 = vpop.f32.mrb[0].mxu0
        %v4637 = vadd.f32 %v4548, %v4636
        %v4638 = vpop.f32.mrb[0].mxu0
        %4639 = vdwg.mxu0
        %4640 = vmatprep.subr.mxu0 0.0
        %v4641 = vand.u32 %v4203, 4294901760
        %v4642 = vsub.f32 %v4203, %v4641
        %v4643 = vand.u32 %v4642, 4294901760
        %4644 = vmatpush1.msra.mxu0 %v4643
        %4645 = vmatprep.subr.mxu0 0.0
        %v4646 = vand.u32 %v4203, 4294901760
        %v4647 = vsub.f32 %v4203, %v4646
        %v4648 = vand.u32 %v4647, 4294901760
        %4649 = vmatpush1.msra.mxu0 %v4648
        %4650 = vmatprep.subr.mxu0 0.0
        %v4651 = vand.u32 %v4203, 4294901760
        %v4652 = vsub.f32 %v4203, %v4651
        %v4653 = vand.u32 %v4652, 4294901760
        %4654 = vmatpush1.msra.mxu0 %v4653
        %4655 = vmatprep.subr.mxu0 0.0
        %v4656 = vand.u32 %v4203, 4294901760
        %v4657 = vsub.f32 %v4203, %v4656
        %v4658 = vand.u32 %v4657, 4294901760
        %4659 = vmatpush1.msra.mxu0 %v4658
        %4660 = vmatprep.subr.mxu0 0.0
        %v4661 = vand.u32 %v4203, 4294901760
        %v4662 = vsub.f32 %v4203, %v4661
        %v4663 = vand.u32 %v4662, 4294901760
        %4664 = vmatpush1.msra.mxu0 %v4663
        %4665 = vmatprep.subr.mxu0 0.0
        %v4666 = vand.u32 %v4203, 4294901760
        %v4667 = vsub.f32 %v4203, %v4666
        %v4668 = vand.u32 %v4667, 4294901760
        %4669 = vmatpush1.msra.mxu0 %v4668
        %4670 = vmatprep.subr.mxu0 0.0
        %v4671 = vand.u32 %v4203, 4294901760
        %v4672 = vsub.f32 %v4203, %v4671
        %v4673 = vand.u32 %v4672, 4294901760
        %4674 = vmatpush1.msra.mxu0 %v4673
        %4675 = vmatprep.subr.mxu0 0.0
        %v4676 = vand.u32 %v4203, 4294901760
        %v4677 = vsub.f32 %v4203, %v4676
        %v4678 = vand.u32 %v4677, 4294901760
        %4679 = vmatpush1.msra.mxu0 %v4678
        %4680 = vmatprep.subr.mxu0 0.0
        %v4681 = vand.u32 %v4203, 4294901760
        %v4682 = vsub.f32 %v4203, %v4681
        %v4683 = vand.u32 %v4682, 4294901760
        %4684 = vmatpush1.msra.mxu0 %v4683
        %4685 = vmatprep.subr.mxu0 0.0
        %v4686 = vand.u32 %v4203, 4294901760
        %v4687 = vsub.f32 %v4203, %v4686
        %v4688 = vand.u32 %v4687, 4294901760
        %4689 = vmatpush1.msra.mxu0 %v4688
        %4690 = vmatprep.subr.mxu0 0.0
        %v4691 = vand.u32 %v4203, 4294901760
        %v4692 = vsub.f32 %v4203, %v4691
        %v4693 = vand.u32 %v4692, 4294901760
        %4694 = vmatpush1.msra.mxu0 %v4693
        %4695 = vmatprep.subr.mxu0 0.0
        %v4696 = vand.u32 %v4203, 4294901760
        %v4697 = vsub.f32 %v4203, %v4696
        %v4698 = vand.u32 %v4697, 4294901760
        %4699 = vmatpush1.msra.mxu0 %v4698
        %4700 = vmatprep.subr.mxu0 0.0
        %v4701 = vand.u32 %v4203, 4294901760
        %v4702 = vsub.f32 %v4203, %v4701
        %v4703 = vand.u32 %v4702, 4294901760
        %4704 = vmatpush1.msra.mxu0 %v4703
        %4705 = vmatprep.subr.mxu0 0.0
        %v4706 = vand.u32 %v4203, 4294901760
        %v4707 = vsub.f32 %v4203, %v4706
        %v4708 = vand.u32 %v4707, 4294901760
        %4709 = vmatpush1.msra.mxu0 %v4708
        %4710 = vmatprep.subr.mxu0 0.0
        %v4711 = vand.u32 %v4203, 4294901760
        %v4712 = vsub.f32 %v4203, %v4711
        %v4713 = vand.u32 %v4712, 4294901760
        %4714 = vmatpush1.msra.mxu0 %v4713
        %4715 = vmatprep.subr.mxu0 0.0
        %v4716 = vand.u32 %v4203, 4294901760
        %v4717 = vsub.f32 %v4203, %v4716
        %v4718 = vand.u32 %v4717, 4294901760
        %4719 = vmatpush1.msra.mxu0 %v4718
        %4720 = vmatprep.subr.mxu0 0.0
        %4721 = vmatpush1.msra.mxu0 0.0
        %4722 = vmatprep.subr.mxu0 0.0
        %4723 = vmatpush1.msra.mxu0 0.0
        %4724 = vmatprep.subr.mxu0 0.0
        %4725 = vmatpush1.msra.mxu0 0.0
        %4726 = vmatprep.subr.mxu0 0.0
        %4727 = vmatpush1.msra.mxu0 0.0
        %4728 = vmatprep.subr.mxu0 0.0
        %4729 = vmatpush1.msra.mxu0 0.0
        %4730 = vmatprep.subr.mxu0 0.0
        %4731 = vmatpush1.msra.mxu0 0.0
        %4732 = vmatprep.subr.mxu0 0.0
        %4733 = vmatpush1.msra.mxu0 0.0
        %4734 = vmatprep.subr.mxu0 0.0
        %4735 = vmatpush1.msra.mxu0 0.0
        %4736 = vmatprep.subr.mxu0 0.0
        %4737 = vmatpush1.msra.mxu0 0.0
        %4738 = vmatprep.subr.mxu0 0.0
        %4739 = vmatpush1.msra.mxu0 0.0
        %4740 = vmatprep.subr.mxu0 0.0
        %4741 = vmatpush1.msra.mxu0 0.0
        %4742 = vmatprep.subr.mxu0 0.0
        %4743 = vmatpush1.msra.mxu0 0.0
        %4744 = vmatprep.subr.mxu0 0.0
        %4745 = vmatpush1.msra.mxu0 0.0
        %4746 = vmatprep.subr.mxu0 0.0
        %4747 = vmatpush1.msra.mxu0 0.0
        %4748 = vmatprep.subr.mxu0 0.0
        %4749 = vmatpush1.msra.mxu0 0.0
        %4750 = vmatprep.subr.mxu0 0.0
        %4751 = vmatpush1.msra.mxu0 0.0
        %4752 = vmatprep.mubr.f32.mxu0 0.0
        %v4753 = vand.u32 %v4204, 4294901760
        %4754 = vmatmul.mubr.f32.gmra.mrb[0].mxu0 %v4753
        %v4755 = vpop.f32.mrb[0].mxu0
        %v4756 = vadd.f32 %v4637, %v4755
        %v4757 = vpop.f32.mrb[0].mxu0
        %4758 = vdwg.mxu0
        %4759 = vmatprep.subr.mxu0 0.0
        %v4760 = vand.u32 %v4203, 4294901760
        %4761 = vmatpush1.msra.mxu0 %v4760
        %4762 = vmatprep.subr.mxu0 0.0
        %v4763 = vand.u32 %v4203, 4294901760
        %4764 = vmatpush1.msra.mxu0 %v4763
        %4765 = vmatprep.subr.mxu0 0.0
        %v4766 = vand.u32 %v4203, 4294901760
        %4767 = vmatpush1.msra.mxu0 %v4766
        %4768 = vmatprep.subr.mxu0 0.0
        %v4769 = vand.u32 %v4203, 4294901760
        %4770 = vmatpush1.msra.mxu0 %v4769
        %4771 = vmatprep.subr.mxu0 0.0
        %v4772 = vand.u32 %v4203, 4294901760
        %4773 = vmatpush1.msra.mxu0 %v4772
        %4774 = vmatprep.subr.mxu0 0.0
        %v4775 = vand.u32 %v4203, 4294901760
        %4776 = vmatpush1.msra.mxu0 %v4775
        %4777 = vmatprep.subr.mxu0 0.0
        %v4778 = vand.u32 %v4203, 4294901760
        %4779 = vmatpush1.msra.mxu0 %v4778
        %4780 = vmatprep.subr.mxu0 0.0
        %v4781 = vand.u32 %v4203, 4294901760
        %4782 = vmatpush1.msra.mxu0 %v4781
        %4783 = vmatprep.subr.mxu0 0.0
        %v4784 = vand.u32 %v4203, 4294901760
        %4785 = vmatpush1.msra.mxu0 %v4784
        %4786 = vmatprep.subr.mxu0 0.0
        %v4787 = vand.u32 %v4203, 4294901760
        %4788 = vmatpush1.msra.mxu0 %v4787
        %4789 = vmatprep.subr.mxu0 0.0
        %v4790 = vand.u32 %v4203, 4294901760
        %4791 = vmatpush1.msra.mxu0 %v4790
        %4792 = vmatprep.subr.mxu0 0.0
        %v4793 = vand.u32 %v4203, 4294901760
        %4794 = vmatpush1.msra.mxu0 %v4793
        %4795 = vmatprep.subr.mxu0 0.0
        %v4796 = vand.u32 %v4203, 4294901760
        %4797 = vmatpush1.msra.mxu0 %v4796
        %4798 = vmatprep.subr.mxu0 0.0
        %v4799 = vand.u32 %v4203, 4294901760
        %4800 = vmatpush1.msra.mxu0 %v4799
        %4801 = vmatprep.subr.mxu0 0.0
        %v4802 = vand.u32 %v4203, 4294901760
        %4803 = vmatpush1.msra.mxu0 %v4802
        %4804 = vmatprep.subr.mxu0 0.0
        %v4805 = vand.u32 %v4203, 4294901760
        %4806 = vmatpush1.msra.mxu0 %v4805
        %4807 = vmatprep.subr.mxu0 0.0
        %4808 = vmatpush1.msra.mxu0 0.0
        %4809 = vmatprep.subr.mxu0 0.0
        %4810 = vmatpush1.msra.mxu0 0.0
        %4811 = vmatprep.subr.mxu0 0.0
        %4812 = vmatpush1.msra.mxu0 0.0
        %4813 = vmatprep.subr.mxu0 0.0
        %4814 = vmatpush1.msra.mxu0 0.0
        %4815 = vmatprep.subr.mxu0 0.0
        %4816 = vmatpush1.msra.mxu0 0.0
        %4817 = vmatprep.subr.mxu0 0.0
        %4818 = vmatpush1.msra.mxu0 0.0
        %4819 = vmatprep.subr.mxu0 0.0
        %4820 = vmatpush1.msra.mxu0 0.0
        %4821 = vmatprep.subr.mxu0 0.0
        %4822 = vmatpush1.msra.mxu0 0.0
        %4823 = vmatprep.subr.mxu0 0.0
        %4824 = vmatpush1.msra.mxu0 0.0
        %4825 = vmatprep.subr.mxu0 0.0
        %4826 = vmatpush1.msra.mxu0 0.0
        %4827 = vmatprep.subr.mxu0 0.0
        %4828 = vmatpush1.msra.mxu0 0.0
        %4829 = vmatprep.subr.mxu0 0.0
        %4830 = vmatpush1.msra.mxu0 0.0
        %4831 = vmatprep.subr.mxu0 0.0
        %4832 = vmatpush1.msra.mxu0 0.0
        %4833 = vmatprep.subr.mxu0 0.0
        %4834 = vmatpush1.msra.mxu0 0.0
        %4835 = vmatprep.subr.mxu0 0.0
        %4836 = vmatpush1.msra.mxu0 0.0
        %4837 = vmatprep.subr.mxu0 0.0
        %4838 = vmatpush1.msra.mxu0 0.0
        %4839 = vmatprep.mubr.f32.mxu0 0.0
        %v4840 = vand.u32 %v4204, 4294901760
        %4841 = vmatmul.mubr.f32.gmra.mrb[0].mxu0 %v4840
        %v4842 = vpop.f32.mrb[0].mxu0
        %v4843 = vadd.f32 %v4756, %v4842
        %v4844 = vpop.f32.mrb[0].mxu0
        %4845 = vdwg.mxu0
        %v4846 = vadd.f32 %v4200, %v4843
        %v4847 = vrsqrt.pop %v4846
        %v4848 = vmul.f32 %v4846, %v4847
        %vm4849 = vcmp.eq.f32.partialorder %v4846, inf
        %v4850 = vsel %vm4849, %v4846, %v4848
        %vm4851 = vcmp.eq.f32.partialorder %v4846, 0.0
        %v4852 = vand.u32 %v4846, 2147483648
        %v4853 = vsel %vm4851, %v4852, %v4850
        %4855 = vset.pattern.permute.xlu0 3
        %4856 = vperm.xlu0 %4855, %v4853
        %v4857 = vpop.permute.xlu0 %4856
        %v4859 = vmul.f32 %v4857, %v4853
        %v4860 = vmax.f32 %v4859, 1e-08
        %4862 = vrot.lane.b32.xlu0 %v4860, 124
        %v4863 = vpop.permute.xlu0 %4862
        %v4865 = vrcp.pop %v4863
        %v4866 = vmul.f32 %v4846, %v4865
        %v4867 = vmul.f32 %v4866, 1.442695
        %v4868 = vpow.pop %v4867
        %4870 = vrot.lane.b32.xlu0 %v4868, 127
        %v4871 = vpop.permute.xlu0 %4870
        %v4873 = vadd.f32 %v4868, %v4871
        %4874 = vrot.lane.b32.xlu0 %v4868, 126
        %v4875 = vpop.permute.xlu0 %4874
        %v4877 = vadd.f32 %v4873, %v4875
        %v4878 = vadd.f32 %v4877, 1e-08
        %v4879 = vsub.f32 0.0, %v4846
        %v4880 = vlog2.pop %v4878
        %v4881 = vmul.f32 %v4880, 0.6931472
        %v4882 = vsub.f32 %v4866, %v4881
        %v4883 = vmul.f32 %v4879, %v4882
        %s4884 = smul.u32 %s24, 8
        %v4885 = vlaneseq
        %v4886 = vshrl.u32 %v4885, 7
        %v4887 = vstv %s4884
        %v4888 = vadd.s32 %v4887, %v4886
        %vm4889 = vcmp.lt.s32.totalorder %v4888, 16
        %v4890 = vsel %vm4889, %v4883, 0.0
        %vm4891 = vcmask 7168
        %4892 = vst.msk [vmem:[%s320] sm:$0xff] %vm4891, %v4890
        %p4893 = scmp.lt.s32.totalorder %s24, 1
        %s4894 = scalar_select %p4893, %s24, 1
        %s4895 = smul.addr %s4894, 8
        %s4896 = scalar_lea.vmem %s4, %s4895
        // Predicated region
        $region53: #{_infonce_impl.1} parent=35 // pred_check
          %p4897 = pneg %p146
        $region54: #{_infonce_impl.1} parent=35 // pred_check_branch
          %4899 = sbr.rel (%p4897) target = $region56
        $region55: #{_infonce_impl.1} parent=35 // pred_region
          _
        $region56: #{_infonce_impl.1} parent=35 // pred_fallthru
          _
      $region36: #{_infonce_impl.1} parent=5 // pred_fallthru
        _
      %p4900 = scmp.le.s32.totalorder 2, %s19
      // Predicated region
      $region57: #{_infonce_impl.1} parent=5 // pred_check
        %p4901 = pneg %p4900
      $region58: #{_infonce_impl.1} parent=5 // pred_check_branch
        %4903 = sbr.rel (%p4901) target = $region60
      $region59: #{_infonce_impl.1} parent=5 // pred_region
        %s4904 = ssub.s32 %s19, 2
        // Predicated region
        $region61: #{_infonce_impl.1} parent=59 // pred_check
          %p4905 = pneg %p152
        $region62: #{_infonce_impl.1} parent=59 // pred_check_branch
          %4907 = sbr.rel (%p4905) target = $region64
        $region63: #{_infonce_impl.1} parent=59 // pred_region
          %p4908 = scmp.lt.s32.totalorder %s25, 1
          %s4909 = scalar_select %p4908, %s25, 1
          %s4910 = smul.addr %s4909, 8
          %s4911 = scalar_lea.vmem %s4, %s4910
        $region64: #{_infonce_impl.1} parent=59 // pred_fallthru
          _
      $region60: #{_infonce_impl.1} parent=5 // pred_fallthru
        _
    $region6: #{_infonce_impl.1} parent=1 // loop_footer
      %s23 = sadd.s32 1, %s19
    $region7: #{_infonce_impl.1} parent=1 // loop_footer_branch
      %18 = sbr.rel target = $region3
    $region8: #{_infonce_impl.1} parent=1 // loop_exit
      _
    %4912 = vsyncpa [#allocation3], 1
    %s4913 = scalar_lea.sflag [#allocation3], 1
    %4914 = vsyncpa %s4913, 1
    %4915 = vsyncpa [#allocation5], 1
    %s4916 = scalar_lea.sflag [#allocation5], 1
    %4917 = vsyncpa %s4916, 1
    %4918 = vsyncpa [#allocation8], 1
    %s4919 = scalar_lea.sflag [#allocation8], 1
    %4920 = vsyncpa %s4919, 1

// kernel: _infonce_impl.1
$region0: #{_infonce_impl.1}
  #allocation0 [shape = 'u32[]', space=smem, size = 0x4, offset = 0x4, fixed_abs, tag = 'smem constant byte address 0x4 - core index']
  #allocation1 [shape = 'u32[144,128]{1,0:T(1,128)}', space=vmem, size = 0x12000, scoped, tag = 'internal scratch']
  %s0 = inlined_call_operand.hbm [shape: f32[64,128], index: 0, kind: input, shape index: {}]
  %s1 = inlined_call_operand.hbm [shape: f32[64,128], index: 1, kind: input, shape index: {}]
  %s2 = inlined_call_operand.hbm [shape: f32[64,128], index: 2, kind: input, shape index: {}]
  %s3 = inlined_call_operand.hbm [shape: f32[64,128], index: 3, kind: input, shape index: {}]
  %s4 = inlined_call_operand.vmem [shape: f32[64,1], index: 4, kind: output, shape index: {}]
  %s5 = sld [smem:[#allocation0]]
  $region65: #{_infonce_impl.1} parent=0
    _
  %s7 = ssub.s32 1, %s5
  %s8 = scalar_select 0, %s7, %s5
  $region1: #{_infonce_impl.1} parent=0
    #allocation2 [shape = 'u8[32768]{0}', space=vmem, size = 0x8000, scoped, tag = 'input window, operand 0']
    #allocation3 [shape = 's32[2]{0}', space=sflag, size = 0x8, scoped, tag = 'scoped memory for _infonce_impl.1']
    #allocation4 [shape = 'u8[32768]{0}', space=vmem, size = 0x8000, scoped, tag = 'input window, operand 1']
    #allocation5 [shape = 's32[2]{0}', space=sflag, size = 0x8, scoped, tag = 'scoped memory for _infonce_impl.1']
    #allocation6 [shape = 'u8[32768]{0}', space=vmem, size = 0x8000, scoped, tag = 'input window, operand 2']
    #allocation7 [shape = 'u8[32768]{0}', space=vmem, size = 0x8000, scoped, tag = 'input window, operand 3']
    #allocation8 [shape = 's32[2]{0}', space=sflag, size = 0x8, scoped, tag = 'scoped memory for _infonce_impl.1']
    %9 = vsyncpa [#allocation3], 0
    %s10 = scalar_lea.sflag [#allocation3], 1
    %11 = vsyncpa %s10, 0
    %12 = vsyncpa [#allocation5], 0
    %s13 = scalar_lea.sflag [#allocation5], 1
    %14 = vsyncpa %s13, 0
    %15 = vsyncpa [#allocation8], 0
    %s16 = scalar_lea.sflag [#allocation8], 1
    %17 = vsyncpa %s16, 0
    loop: start=0, step=1, limit=4
    $region2: #{_infonce_impl.1} parent=1 // loop_pre_header
      _
    $region3: #{_infonce_impl.1} parent=1 // loop_header
      %s19 = sphi 0, %s23
      %p20 = scmp.ge.s32.totalorder %s19, 4
      %s29 = sphi 0, %s31
      %s32 = sphi 0, %s29
      %s33 = sphi 0, %s32
      %s49 = sphi 0, %s33
      %s55 = sphi 0, %s57
      %s58 = sphi 0, %s55
      %s59 = sphi 0, %s58
      %s75 = sphi 0, %s59
      %s81 = sphi 0, %s83
      %s84 = sphi 0, %s81
      %s85 = sphi 0, %s84
      %s101 = sphi 0, %s85
      %s107 = sphi 0, %s109
      %s110 = sphi 0, %s107
      %s111 = sphi 0, %s110
      %s127 = sphi 0, %s111
      %s133 = sphi 0, %s135
      %s136 = sphi 0, %s133
      %s137 = sphi 0, %s136
      %s153 = sphi 0, %s137
    $region4: #{_infonce_impl.1} parent=1 // loop_header_branch
      %22 = sbr.rel (%p20) target = $region8
    $region5: #{_infonce_impl.1} parent=1 // loop_body
      %s24 = ssub.s32 %s19, 1
      %s25 = ssub.s32 %s19, 2
      %s26 = sadd.s32 %s19, 1
      %s27 = ssub.s32 %s19, %s26
      %p28 = scmp.eq.s32.totalorder %s27, 0
      %s30 = sadd.s32 %s29, 1
      %s31 = scalar_select %p28, %s29, %s30
      %p34 = pneg %p28
      %p35 = scmp.eq.s32.totalorder %s19, 1
      %p36 = por %p34, %p35
      %p37 = scmp.ne.s32.totalorder %s29, %s32
      %p38 = scmp.eq.s32.totalorder %s19, 0
      %p39 = por %p37, %p38
      %p40 = scmp.ne.s32.totalorder %s29, %s32
      %p41 = scmp.eq.s32.totalorder %s24, 1
      %p42 = por %p40, %p41
      %p43 = scmp.ne.s32.totalorder %s32, %s33
      %p44 = scmp.eq.s32.totalorder %s24, 0
      %p45 = por %p43, %p44
      %p46 = scmp.ne.s32.totalorder %s32, %s33
      %p47 = scmp.eq.s32.totalorder %s25, 1
      %p48 = por %p46, %p47
      %p50 = scmp.ne.s32.totalorder %s33, %s49
      %p51 = scmp.eq.s32.totalorder %s25, 0
      %p52 = por %p50, %p51
      %s53 = ssub.s32 %s19, %s26
      %p54 = scmp.eq.s32.totalorder %s53, 0
      %s56 = sadd.s32 %s55, 1
      %s57 = scalar_select %p54, %s55, %s56
      %p60 = pneg %p54
      %p61 = scmp.eq.s32.totalorder %s19, 1
      %p62 = por %p60, %p61
      %p63 = scmp.ne.s32.totalorder %s55, %s58
      %p64 = scmp.eq.s32.totalorder %s19, 0
      %p65 = por %p63, %p64
      %p66 = scmp.ne.s32.totalorder %s55, %s58
      %p67 = scmp.eq.s32.totalorder %s24, 1
      %p68 = por %p66, %p67
      %p69 = scmp.ne.s32.totalorder %s58, %s59
      %p70 = scmp.eq.s32.totalorder %s24, 0
      %p71 = por %p69, %p70
      %p72 = scmp.ne.s32.totalorder %s58, %s59
      %p73 = scmp.eq.s32.totalorder %s25, 1
      %p74 = por %p72, %p73
      %p76 = scmp.ne.s32.totalorder %s59, %s75
      %p77 = scmp.eq.s32.totalorder %s25, 0
      %p78 = por %p76, %p77
      %s79 = ssub.s32 %s19, %s26
      %p80 = scmp.eq.s32.totalorder %s79, 0
      %s82 = sadd.s32 %s81, 1
      %s83 = scalar_select %p80, %s81, %s82
      %p86 = pneg %p80
      %p87 = scmp.eq.s32.totalorder %s19, 1
      %p88 = por %p86, %p87
      %p89 = scmp.ne.s32.totalorder %s81, %s84
      %p90 = scmp.eq.s32.totalorder %s19, 0
      %p91 = por %p89, %p90
      %p92 = scmp.ne.s32.totalorder %s81, %s84
      %p93 = scmp.eq.s32.totalorder %s24, 1
      %p94 = por %p92, %p93
      %p95 = scmp.ne.s32.totalorder %s84, %s85
      %p96 = scmp.eq.s32.totalorder %s24, 0
      %p97 = por %p95, %p96
      %p98 = scmp.ne.s32.totalorder %s84, %s85
      %p99 = scmp.eq.s32.totalorder %s25, 1
      %p100 = por %p98, %p99
      %p102 = scmp.ne.s32.totalorder %s85, %s101
      %p103 = scmp.eq.s32.totalorder %s25, 0
      %p104 = por %p102, %p103
      %s105 = ssub.s32 %s19, %s26
      %p106 = scmp.eq.s32.totalorder %s105, 0
      %s108 = sadd.s32 %s107, 1
      %s109 = scalar_select %p106, %s107, %s108
      %p112 = pneg %p106
      %p113 = scmp.eq.s32.totalorder %s19, 1
      %p114 = por %p112, %p113
      %p115 = scmp.ne.s32.totalorder %s107, %s110
      %p116 = scmp.eq.s32.totalorder %s19, 0
      %p117 = por %p115, %p116
      %p118 = scmp.ne.s32.totalorder %s107, %s110
      %p119 = scmp.eq.s32.totalorder %s24, 1
      %p120 = por %p118, %p119
      %p121 = scmp.ne.s32.totalorder %s110, %s111
      %p122 = scmp.eq.s32.totalorder %s24, 0
      %p123 = por %p121, %p122
      %p124 = scmp.ne.s32.totalorder %s110, %s111
      %p125 = scmp.eq.s32.totalorder %s25, 1
      %p126 = por %p124, %p125
      %p128 = scmp.ne.s32.totalorder %s111, %s127
      %p129 = scmp.eq.s32.totalorder %s25, 0
      %p130 = por %p128, %p129
      %s131 = ssub.s32 %s19, %s26
      %p132 = scmp.eq.s32.totalorder %s131, 0
      %s134 = sadd.s32 %s133, 1
      %s135 = scalar_select %p132, %s133, %s134
      %p138 = pneg %p132
      %p139 = scmp.eq.s32.totalorder %s19, 1
      %p140 = por %p138, %p139
      %p141 = scmp.ne.s32.totalorder %s133, %s136
      %p142 = scmp.eq.s32.totalorder %s19, 0
      %p143 = por %p141, %p142
      %p144 = scmp.ne.s32.totalorder %s133, %s136
      %p145 = scmp.eq.s32.totalorder %s24, 1
      %p146 = por %p144, %p145
      %p147 = scmp.ne.s32.totalorder %s136, %s137
      %p148 = scmp.eq.s32.totalorder %s24, 0
      %p149 = por %p147, %p148
      %p150 = scmp.ne.s32.totalorder %s136, %s137
      %p151 = scmp.eq.s32.totalorder %s25, 1
      %p152 = por %p150, %p151
      %p154 = scmp.ne.s32.totalorder %s137, %s153
      %p155 = scmp.eq.s32.totalorder %s25, 0
      %p156 = por %p154, %p155
      %p157 = scmp.le.s32.totalorder 1, %s19
      %p158 = scmp.lt.s32.totalorder %s19, 3
      %p159 = pnand %p157, %p158
      %p160 = pneg %p159
      // Predicated region
      $region9: #{_infonce_impl.1} parent=5 // pred_check
        _
      $region10: #{_infonce_impl.1} parent=5 // pred_check_branch
        %162 = sbr.rel (%p159) target = $region12
      $region11: #{_infonce_impl.1} parent=5 // pred_region
        %s163 = ssub.s32 %s19, 1
      $region12: #{_infonce_impl.1} parent=5 // pred_fallthru
        _
      %p164 = scmp.lt.s32.totalorder %s19, 2
      // Predicated region
      $region13: #{_infonce_impl.1} parent=5 // pred_check
        %p165 = pneg %p164
      $region14: #{_infonce_impl.1} parent=5 // pred_check_branch
        %167 = sbr.rel (%p165) target = $region16
      $region15: #{_infonce_impl.1} parent=5 // pred_region
        // Predicated region
        $region17: #{_infonce_impl.1} parent=15 // pred_check
          %p168 = pneg %p39
        $region18: #{_infonce_impl.1} parent=15 // pred_check_branch
          %170 = sbr.rel (%p168) target = $region20
        $region19: #{_infonce_impl.1} parent=15 // pred_region
          %s171 = sand.u32 %s29, 1
          %s172 = scalar_lea.sflag [#allocation3], %s171
          %s173 = sand.u32 %s29, 1
          %s174 = smul.addr %s173, 32
          %s175 = scalar_lea.vmem [#allocation2], %s174
          %s176 = smul.u32 4, %s19
          %s178 = ssub.s32 512, 512
          %179 = vsyncadd %s172, %s178
          %s180 = smul.addr %s176, 128
          %s181 = scalar_lea.hbm %s0, %s180
          %s182 = sshll.u32 %s175, 4
          %s183 = int_to_ptr.vmem [resolvable:$true] %s182
          %188 = dma.hbm_to_vmem [thread:$0]  %s181, 512, %s183, %s172, 128, 128, 8
        $region20: #{_infonce_impl.1} parent=15 // pred_fallthru
          _
        // Predicated region
        $region21: #{_infonce_impl.1} parent=15 // pred_check
          %p189 = pneg %p65
        $region22: #{_infonce_impl.1} parent=15 // pred_check_branch
          %191 = sbr.rel (%p189) target = $region24
        $region23: #{_infonce_impl.1} parent=15 // pred_region
          %s192 = sand.u32 %s19, 1
          %s193 = scalar_lea.sflag [#allocation5], %s192
          %s194 = sand.u32 %s55, 1
          %s195 = smul.addr %s194, 32
          %s196 = scalar_lea.vmem [#allocation4], %s195
          %s197 = smul.u32 4, %s19
          %s199 = ssub.s32 512, 512
          %200 = vsyncadd %s193, %s199
          %s201 = smul.addr %s197, 128
          %s202 = scalar_lea.hbm %s1, %s201
          %s203 = sshll.u32 %s196, 4
          %s204 = int_to_ptr.vmem [resolvable:$true] %s203
          %209 = dma.hbm_to_vmem [thread:$0]  %s202, 512, %s204, %s193, 128, 128, 8
        $region24: #{_infonce_impl.1} parent=15 // pred_fallthru
          _
        // Predicated region
        $region25: #{_infonce_impl.1} parent=15 // pred_check
          %p210 = pneg %p91
        $region26: #{_infonce_impl.1} parent=15 // pred_check_branch
          %212 = sbr.rel (%p210) target = $region28
        $region27: #{_infonce_impl.1} parent=15 // pred_region
          %s213 = sand.u32 %s19, 1
          %s214 = scalar_lea.sflag [#allocation5], %s213
          %s215 = sand.u32 %s81, 1
          %s216 = smul.addr %s215, 32
          %s217 = scalar_lea.vmem [#allocation6], %s216
          %s218 = smul.u32 4, %s19
          %s220 = ssub.s32 512, 512
          %221 = vsyncadd %s214, %s220
          %s222 = smul.addr %s218, 128
          %s223 = scalar_lea.hbm %s2, %s222
          %s224 = sshll.u32 %s217, 4
          %s225 = int_to_ptr.vmem [resolvable:$true] %s224
          %230 = dma.hbm_to_vmem [thread:$0]  %s223, 512, %s225, %s214, 128, 128, 8
        $region28: #{_infonce_impl.1} parent=15 // pred_fallthru
          _
        // Predicated region
        $region29: #{_infonce_impl.1} parent=15 // pred_check
          %p231 = pneg %p117
        $region30: #{_infonce_impl.1} parent=15 // pred_check_branch
          %233 = sbr.rel (%p231) target = $region32
        $region31: #{_infonce_impl.1} parent=15 // pred_region
          %s234 = sand.u32 %s107, 1
          %s235 = scalar_lea.sflag [#allocation8], %s234
          %s236 = sand.u32 %s107, 1
          %s237 = smul.addr %s236, 32
          %s238 = scalar_lea.vmem [#allocation7], %s237
          %s239 = smul.u32 4, %s19
          %s241 = ssub.s32 512, 512
          %242 = vsyncadd %s235, %s241
          %s243 = smul.addr %s239, 128
          %s244 = scalar_lea.hbm %s3, %s243
          %s245 = sshll.u32 %s238, 4
          %s246 = int_to_ptr.vmem [resolvable:$true] %s245
          %251 = dma.hbm_to_vmem [thread:$0]  %s244, 512, %s246, %s235, 128, 128, 8
        $region32: #{_infonce_impl.1} parent=15 // pred_fallthru
          _
      $region16: #{_infonce_impl.1} parent=5 // pred_fallthru
        _
      %p252 = scmp.le.s32.totalorder 1, %s19
      %p253 = scmp.lt.s32.totalorder %s19, 3
      %p254 = pnand %p252, %p253
      %p255 = pneg %p254
      // Predicated region
      $region33: #{_infonce_impl.1} parent=5 // pred_check
        _
      $region34: #{_infonce_impl.1} parent=5 // pred_check_branch
        %257 = sbr.rel (%p254) target = $region36
      $region35: #{_infonce_impl.1} parent=5 // pred_region
        %s258 = ssub.s32 %s19, 1
        %s259 = sand.u32 %s32, 1
        %s260 = scalar_lea.sflag [#allocation3], %s259
        %s261 = sand.u32 %s32, 1
        %s262 = smul.addr %s261, 32
        %s263 = scalar_lea.vmem [#allocation2], %s262
        // Predicated region
        $region37: #{_infonce_impl.1} parent=35 // pred_check
          %p264 = pneg %p45
        $region38: #{_infonce_impl.1} parent=35 // pred_check_branch
          %266 = sbr.rel (%p264) target = $region40
        $region39: #{_infonce_impl.1} parent=35 // pred_region
          %267 = dma.done %s260, 512
        $region40: #{_infonce_impl.1} parent=35 // pred_fallthru
          _
        %s268 = sand.u32 %s24, 1
        %s269 = scalar_lea.sflag [#allocation5], %s268
        %s270 = sand.u32 %s58, 1
        %s271 = smul.addr %s270, 32
        %s272 = scalar_lea.vmem [#allocation4], %s271
        // Predicated region
        $region41: #{_infonce_impl.1} parent=35 // pred_check
          %p273 = pneg %p71
        $region42: #{_infonce_impl.1} parent=35 // pred_check_branch
          %275 = sbr.rel (%p273) target = $region44
        $region43: #{_infonce_impl.1} parent=35 // pred_region
          %276 = dma.done %s269, 512
        $region44: #{_infonce_impl.1} parent=35 // pred_fallthru
          _
        %s277 = sand.u32 %s24, 1
        %s278 = scalar_lea.sflag [#allocation5], %s277
        %s279 = sand.u32 %s84, 1
        %s280 = smul.addr %s279, 32
        %s281 = scalar_lea.vmem [#allocation6], %s280
        // Predicated region
        $region45: #{_infonce_impl.1} parent=35 // pred_check
          %p282 = pneg %p97
        $region46: #{_infonce_impl.1} parent=35 // pred_check_branch
          %284 = sbr.rel (%p282) target = $region48
        $region47: #{_infonce_impl.1} parent=35 // pred_region
          %285 = dma.done %s278, 512
        $region48: #{_infonce_impl.1} parent=35 // pred_fallthru
          _
        %s286 = sand.u32 %s110, 1
        %s287 = scalar_lea.sflag [#allocation8], %s286
        %s288 = sand.u32 %s110, 1
        %s289 = smul.addr %s288, 32
        %s290 = scalar_lea.vmem [#allocation7], %s289
        // Predicated region
        $region49: #{_infonce_impl.1} parent=35 // pred_check
          %p291 = pneg %p123
        $region50: #{_infonce_impl.1} parent=35 // pred_check_branch
          %293 = sbr.rel (%p291) target = $region52
        $region51: #{_infonce_impl.1} parent=35 // pred_region
          %294 = dma.done %s287, 512
        $region52: #{_infonce_impl.1} parent=35 // pred_fallthru
          _
        %s295 = sand.u32 %s32, 1
        %s296 = scalar_lea.sflag [#allocation3], %s295
        %s297 = sand.u32 %s32, 1
        %s298 = smul.addr %s297, 32
        %s299 = scalar_lea.vmem [#allocation2], %s298
        %p300 = pneg %p45
        %p301 = pneg %p42
        %s302 = sand.u32 %s24, 1
        %s303 = scalar_lea.sflag [#allocation5], %s302
        %s304 = sand.u32 %s58, 1
        %s305 = smul.addr %s304, 32
        %s306 = scalar_lea.vmem [#allocation4], %s305
        %p307 = pneg %p71
        %p308 = pneg %p68
        %s309 = sand.u32 %s24, 1
        %s310 = scalar_lea.sflag [#allocation5], %s309
        %s311 = sand.u32 %s84, 1
        %s312 = smul.addr %s311, 32
        %s313 = scalar_lea.vmem [#allocation6], %s312
        %p314 = pneg %p97
        %p315 = pneg %p94
        %s316 = sand.u32 %s110, 1
        %s317 = scalar_lea.sflag [#allocation8], %s316
        %s318 = sand.u32 %s110, 1
        %s319 = smul.addr %s318, 32
        %s320 = scalar_lea.vmem [#allocation7], %s319
        %p321 = pneg %p123
        %p322 = pneg %p120
        %p323 = pneg %p149
        %p324 = pneg %p146
        %s325 = smul.u32 4, %s24
        %p326 = scmp.lt.s32.totalorder %s325, 7
        %s327 = scalar_select %p326, %s325, 7
        %s328 = smul.addr %s327, 8
        %s329 = scalar_lea.vmem %s4, %s328
        %s330 = smul.u32 4, %s24
        %s331 = smul.u32 4, %s24
        %s332 = smul.u32 4, %s24
        %s333 = smul.u32 4, %s24
        %s334 = smul.u32 4, %s24
        %p335 = scmp.lt.s32.totalorder %s334, 7
        %s336 = scalar_select %p335, %s334, 7
        %s337 = smul.addr %s336, 8
        %s338 = scalar_lea.vmem %s4, %s337
        %s339 = smul.u32 4, %s24
        %v340 = vld [vmem:[%s290] sm:$0xff]
        %v341 = vld [vmem:[%s290 + $0x8] sm:$0xff]
        %v342 = vld [vmem:[%s290 + $0x10] sm:$0xff]
        %v343 = vld [vmem:[%s290 + $0x18] sm:$0xff]
        %v344 = vld [vmem:[%s263] sm:$0xff]
        %v345 = vld [vmem:[%s263 + $0x8] sm:$0xff]
        %v346 = vld [vmem:[%s263 + $0x10] sm:$0xff]
        %v347 = vld [vmem:[%s263 + $0x18] sm:$0xff]
        %v348 = vld [vmem:[%s272] sm:$0xff]
        %v349 = vld [vmem:[%s272 + $0x8] sm:$0xff]
        %v350 = vld [vmem:[%s272 + $0x10] sm:$0xff]
        %v351 = vld [vmem:[%s272 + $0x18] sm:$0xff]
        %v352 = vld [vmem:[%s281] sm:$0xff]
        %v353 = vld [vmem:[%s281 + $0x8] sm:$0xff]
        %v354 = vld [vmem:[%s281 + $0x10] sm:$0xff]
        %v355 = vld [vmem:[%s281 + $0x18] sm:$0xff]
        %v356 = vmul.f32 %v340, %v344
        %v357 = vmul.f32 %v341, %v345
        %v358 = vmul.f32 %v342, %v346
        %v359 = vmul.f32 %v343, %v347
        %360 = vadd.xlane.f32.xlu0 %v356
        %v361 = vpop.xlane.xlu0 %360
        %362 = vadd.xlane.f32.xlu0 %v357
        %v363 = vpop.xlane.xlu0 %362
        %364 = vadd.xlane.f32.xlu0 %v358
        %v365 = vpop.xlane.xlu0 %364
        %366 = vadd.xlane.f32.xlu0 %v359
        %v367 = vpop.xlane.xlu0 %366
        %v368 = vmul.f32 %v340, %v348
        %v369 = vmul.f32 %v341, %v349
        %v370 = vmul.f32 %v342, %v350
        %v371 = vmul.f32 %v343, %v351
        %372 = vadd.xlane.f32.xlu0 %v368
        %v373 = vpop.xlane.xlu0 %372
        %374 = vadd.xlane.f32.xlu0 %v369
        %v375 = vpop.xlane.xlu0 %374
        %376 = vadd.xlane.f32.xlu0 %v370
        %v377 = vpop.xlane.xlu0 %376
        %378 = vadd.xlane.f32.xlu0 %v371
        %v379 = vpop.xlane.xlu0 %378
        %v380 = vmul.f32 %v340, %v352
        %v381 = vmul.f32 %v341, %v353
        %v382 = vmul.f32 %v342, %v354
        %v383 = vmul.f32 %v343, %v355
        %384 = vadd.xlane.f32.xlu0 %v380
        %v385 = vpop.xlane.xlu0 %384
        %386 = vadd.xlane.f32.xlu0 %v381
        %v387 = vpop.xlane.xlu0 %386
        %388 = vadd.xlane.f32.xlu0 %v382
        %v389 = vpop.xlane.xlu0 %388
        %390 = vadd.xlane.f32.xlu0 %v383
        %v391 = vpop.xlane.xlu0 %390
        %vm392 = vcmask 7168
        %v393 = vsel %vm392, %v361, %v373
        %v394 = vsel %vm392, %v363, %v375
        %v395 = vsel %vm392, %v365, %v377
        %v396 = vsel %vm392, %v367, %v379
        %vm397 = vcmask 15360
        %v398 = vsel %vm397, %v393, %v385
        %v399 = vsel %vm397, %v394, %v387
        %v400 = vsel %vm397, %v395, %v389
        %v401 = vsel %vm397, %v396, %v391
        %v402 = vmul.f32 %v340, %v340
        %v403 = vmul.f32 %v341, %v341
        %v404 = vmul.f32 %v342, %v342
        %v405 = vmul.f32 %v343, %v343
        %406 = vadd.xlane.f32.xlu0 %v402
        %v407 = vpop.xlane.xlu0 %406
        %408 = vadd.xlane.f32.xlu0 %v403
        %v409 = vpop.xlane.xlu0 %408
        %410 = vadd.xlane.f32.xlu0 %v404
        %v411 = vpop.xlane.xlu0 %410
        %412 = vadd.xlane.f32.xlu0 %v405
        %v413 = vpop.xlane.xlu0 %412
        %v414 = vmul.f32 %v344, %v344
        %v415 = vmul.f32 %v345, %v345
        %v416 = vmul.f32 %v346, %v346
        %v417 = vmul.f32 %v347, %v347
        %418 = vadd.xlane.f32.xlu0 %v414
        %v419 = vpop.xlane.xlu0 %418
        %420 = vadd.xlane.f32.xlu0 %v415
        %v421 = vpop.xlane.xlu0 %420
        %422 = vadd.xlane.f32.xlu0 %v416
        %v423 = vpop.xlane.xlu0 %422
        %424 = vadd.xlane.f32.xlu0 %v417
        %v425 = vpop.xlane.xlu0 %424
        %v426 = vmul.f32 %v348, %v348
        %v427 = vmul.f32 %v349, %v349
        %v428 = vmul.f32 %v350, %v350
        %v429 = vmul.f32 %v351, %v351
        %430 = vadd.xlane.f32.xlu0 %v426
        %v431 = vpop.xlane.xlu0 %430
        %432 = vadd.xlane.f32.xlu0 %v427
        %v433 = vpop.xlane.xlu0 %432
        %434 = vadd.xlane.f32.xlu0 %v428
        %v435 = vpop.xlane.xlu0 %434
        %436 = vadd.xlane.f32.xlu0 %v429
        %v437 = vpop.xlane.xlu0 %436
        %v438 = vmul.f32 %v352, %v352
        %v439 = vmul.f32 %v353, %v353
        %v440 = vmul.f32 %v354, %v354
        %v441 = vmul.f32 %v355, %v355
        %442 = vadd.xlane.f32.xlu0 %v438
        %v443 = vpop.xlane.xlu0 %442
        %444 = vadd.xlane.f32.xlu0 %v439
        %v445 = vpop.xlane.xlu0 %444
        %446 = vadd.xlane.f32.xlu0 %v440
        %v447 = vpop.xlane.xlu0 %446
        %448 = vadd.xlane.f32.xlu0 %v441
        %v449 = vpop.xlane.xlu0 %448
        %v450 = vsel %vm392, %v419, %v431
        %v451 = vsel %vm392, %v421, %v433
        %v452 = vsel %vm392, %v423, %v435
        %v453 = vsel %vm392, %v425, %v437
        %v454 = vsel %vm397, %v450, %v443
        %v455 = vsel %vm397, %v451, %v445
        %v456 = vsel %vm397, %v452, %v447
        %v457 = vsel %vm397, %v453, %v449
        %v458 = vrsqrt.pop %v407
        %v459 = vmul.f32 %v407, %v458
        %vm460 = vcmp.eq.f32.partialorder %v407, inf
        %v461 = vsel %vm460, %v407, %v459
        %vm462 = vcmp.eq.f32.partialorder %v407, 0.0
        %v463 = vand.u32 %v407, 2147483648
        %v464 = vsel %vm462, %v463, %v461
        %v465 = vrsqrt.pop %v409
        %v466 = vmul.f32 %v409, %v465
        %vm467 = vcmp.eq.f32.partialorder %v409, inf
        %v468 = vsel %vm467, %v409, %v466
        %vm469 = vcmp.eq.f32.partialorder %v409, 0.0
        %v470 = vand.u32 %v409, 2147483648
        %v471 = vsel %vm469, %v470, %v468
        %v472 = vrsqrt.pop %v411
        %v473 = vmul.f32 %v411, %v472
        %vm474 = vcmp.eq.f32.partialorder %v411, inf
        %v475 = vsel %vm474, %v411, %v473
        %vm476 = vcmp.eq.f32.partialorder %v411, 0.0
        %v477 = vand.u32 %v411, 2147483648
        %v478 = vsel %vm476, %v477, %v475
        %v479 = vrsqrt.pop %v413
        %v480 = vmul.f32 %v413, %v479
        %vm481 = vcmp.eq.f32.partialorder %v413, inf
        %v482 = vsel %vm481, %v413, %v480
        %vm483 = vcmp.eq.f32.partialorder %v413, 0.0
        %v484 = vand.u32 %v413, 2147483648
        %v485 = vsel %vm483, %v484, %v482
        %v486 = vrsqrt.pop %v454
        %v487 = vmul.f32 %v454, %v486
        %vm488 = vcmp.eq.f32.partialorder %v454, inf
        %v489 = vsel %vm488, %v454, %v487
        %vm490 = vcmp.eq.f32.partialorder %v454, 0.0
        %v491 = vand.u32 %v454, 2147483648
        %v492 = vsel %vm490, %v491, %v489
        %v493 = vrsqrt.pop %v455
        %v494 = vmul.f32 %v455, %v493
        %vm495 = vcmp.eq.f32.partialorder %v455, inf
        %v496 = vsel %vm495, %v455, %v494
        %vm497 = vcmp.eq.f32.partialorder %v455, 0.0
        %v498 = vand.u32 %v455, 2147483648
        %v499 = vsel %vm497, %v498, %v496
        %v500 = vrsqrt.pop %v456
        %v501 = vmul.f32 %v456, %v500
        %vm502 = vcmp.eq.f32.partialorder %v456, inf
        %v503 = vsel %vm502, %v456, %v501
        %vm504 = vcmp.eq.f32.partialorder %v456, 0.0
        %v505 = vand.u32 %v456, 2147483648
        %v506 = vsel %vm504, %v505, %v503
        %v507 = vrsqrt.pop %v457
        %v508 = vmul.f32 %v457, %v507
        %vm509 = vcmp.eq.f32.partialorder %v457, inf
        %v510 = vsel %vm509, %v457, %v508
        %vm511 = vcmp.eq.f32.partialorder %v457, 0.0
        %v512 = vand.u32 %v457, 2147483648
        %v513 = vsel %vm511, %v512, %v510
        %v514 = vmul.f32 %v464, %v492
        %v515 = vmul.f32 %v471, %v499
        %v516 = vmul.f32 %v478, %v506
        %v517 = vmul.f32 %v485, %v513
        %v518 = vmax.f32 %v514, 1e-08
        %v519 = vmax.f32 %v515, 1e-08
        %v520 = vmax.f32 %v516, 1e-08
        %v521 = vmax.f32 %v517, 1e-08
        %v522 = vrcp.pop %v518
        %v523 = vmul.f32 %v398, %v522
        %v524 = vrcp.pop %v519
        %v525 = vmul.f32 %v399, %v524
        %v526 = vrcp.pop %v520
        %v527 = vmul.f32 %v400, %v526
        %v528 = vrcp.pop %v521
        %v529 = vmul.f32 %v401, %v528
        %v530 = vmul.f32 %v523, 1.442695
        %v531 = vpow.pop %v530
        %v532 = vmul.f32 %v525, 1.442695
        %v533 = vpow.pop %v532
        %v534 = vmul.f32 %v527, 1.442695
        %v535 = vpow.pop %v534
        %v536 = vmul.f32 %v529, 1.442695
        %v537 = vpow.pop %v536
        %542 = vrot.lane.b32.xlu0 %v531, 127
        %v543 = vpop.permute.xlu0 %542
        %544 = vrot.lane.b32.xlu0 %v533, 127
        %v545 = vpop.permute.xlu0 %544
        %546 = vrot.lane.b32.xlu0 %v535, 127
        %v547 = vpop.permute.xlu0 %546
        %548 = vrot.lane.b32.xlu0 %v537, 127
        %v549 = vpop.permute.xlu0 %548
        %v554 = vadd.f32 %v531, %v543
        %v555 = vadd.f32 %v533, %v545
        %v556 = vadd.f32 %v535, %v547
        %v557 = vadd.f32 %v537, %v549
        %558 = vrot.lane.b32.xlu0 %v531, 126
        %v559 = vpop.permute.xlu0 %558
        %560 = vrot.lane.b32.xlu0 %v533, 126
        %v561 = vpop.permute.xlu0 %560
        %562 = vrot.lane.b32.xlu0 %v535, 126
        %v563 = vpop.permute.xlu0 %562
        %564 = vrot.lane.b32.xlu0 %v537, 126
        %v565 = vpop.permute.xlu0 %564
        %v570 = vadd.f32 %v554, %v559
        %v571 = vadd.f32 %v555, %v561
        %v572 = vadd.f32 %v556, %v563
        %v573 = vadd.f32 %v557, %v565
        %v574 = vadd.f32 %v570, 1e-08
        %v575 = vadd.f32 %v571, 1e-08
        %v576 = vadd.f32 %v572, 1e-08
        %v577 = vadd.f32 %v573, 1e-08
        %v578 = vsub.f32 0.0, %v398
        %v579 = vsub.f32 0.0, %v399
        %v580 = vsub.f32 0.0, %v400
        %v581 = vsub.f32 0.0, %v401
        %v582 = vlog2.pop %v574
        %v583 = vmul.f32 %v582, 0.6931472
        %v584 = vlog2.pop %v575
        %v585 = vmul.f32 %v584, 0.6931472
        %v586 = vlog2.pop %v576
        %v587 = vmul.f32 %v586, 0.6931472
        %v588 = vlog2.pop %v577
        %v589 = vmul.f32 %v588, 0.6931472
        %v590 = vsub.f32 %v523, %v583
        %v591 = vsub.f32 %v525, %v585
        %v592 = vsub.f32 %v527, %v587
        %v593 = vsub.f32 %v529, %v589
        %v594 = vmul.f32 %v578, %v590
        %v595 = vmul.f32 %v579, %v591
        %v596 = vmul.f32 %v580, %v592
        %v597 = vmul.f32 %v581, %v593
        %s598 = smul.u32 %s24, 32
        %v599 = vlaneseq
        %v600 = vshrl.u32 %v599, 7
        %v601 = vadd.s32 %v600, 8
        %v602 = vadd.s32 %v600, 16
        %v603 = vadd.s32 %v600, 24
        %v604 = vstv %s598
        %v605 = vadd.s32 %v604, %v600
        %v606 = vadd.s32 %v604, %v601
        %v607 = vadd.s32 %v604, %v602
        %v608 = vadd.s32 %v604, %v603
        %vm609 = vcmp.lt.s32.totalorder %v605, 64
        %vm610 = vcmp.lt.s32.totalorder %v606, 64
        %vm611 = vcmp.lt.s32.totalorder %v607, 64
        %vm612 = vcmp.lt.s32.totalorder %v608, 64
        %v613 = vsel %vm609, %v594, 0.0
        %v614 = vsel %vm610, %v595, 0.0
        %v615 = vsel %vm611, %v596, 0.0
        %v616 = vsel %vm612, %v597, 0.0
        %617 = vst.msk [vmem:[%s338] sm:$0xff] %vm392, %v613
        %618 = vst.msk [vmem:[%s338 + $0x8] sm:$0xff] %vm392, %v614
        %619 = vst.msk [vmem:[%s338 + $0x10] sm:$0xff] %vm392, %v615
        %620 = vst.msk [vmem:[%s338 + $0x18] sm:$0xff] %vm392, %v616
        %s621 = smul.u32 4, %s24
        %p622 = scmp.lt.s32.totalorder %s621, 7
        %s623 = scalar_select %p622, %s621, 7
        %s624 = smul.addr %s623, 8
        %s625 = scalar_lea.vmem %s4, %s624
        // Predicated region
        $region53: #{_infonce_impl.1} parent=35 // pred_check
          %p626 = pneg %p146
        $region54: #{_infonce_impl.1} parent=35 // pred_check_branch
          %628 = sbr.rel (%p626) target = $region56
        $region55: #{_infonce_impl.1} parent=35 // pred_region
          %s629 = smul.u32 4, %s24
        $region56: #{_infonce_impl.1} parent=35 // pred_fallthru
          _
      $region36: #{_infonce_impl.1} parent=5 // pred_fallthru
        _
      %p630 = scmp.le.s32.totalorder 2, %s19
      // Predicated region
      $region57: #{_infonce_impl.1} parent=5 // pred_check
        %p631 = pneg %p630
      $region58: #{_infonce_impl.1} parent=5 // pred_check_branch
        %633 = sbr.rel (%p631) target = $region60
      $region59: #{_infonce_impl.1} parent=5 // pred_region
        %s634 = ssub.s32 %s19, 2
        // Predicated region
        $region61: #{_infonce_impl.1} parent=59 // pred_check
          %p635 = pneg %p152
        $region62: #{_infonce_impl.1} parent=59 // pred_check_branch
          %637 = sbr.rel (%p635) target = $region64
        $region63: #{_infonce_impl.1} parent=59 // pred_region
          %s638 = smul.u32 4, %s25
          %p639 = scmp.lt.s32.totalorder %s638, 7
          %s640 = scalar_select %p639, %s638, 7
          %s641 = smul.addr %s640, 8
          %s642 = scalar_lea.vmem %s4, %s641
        $region64: #{_infonce_impl.1} parent=59 // pred_fallthru
          _
      $region60: #{_infonce_impl.1} parent=5 // pred_fallthru
        _
    $region6: #{_infonce_impl.1} parent=1 // loop_footer
      %s23 = sadd.s32 1, %s19
    $region7: #{_infonce_impl.1} parent=1 // loop_footer_branch
      %18 = sbr.rel target = $region3
    $region8: #{_infonce_impl.1} parent=1 // loop_exit
      _
    %643 = vsyncpa [#allocation3], 1
    %s644 = scalar_lea.sflag [#allocation3], 1
    %645 = vsyncpa %s644, 1
    %646 = vsyncpa [#allocation5], 1
    %s647 = scalar_lea.sflag [#allocation5], 1
    %648 = vsyncpa %s647, 1
    %649 = vsyncpa [#allocation8], 1
    %s650 = scalar_lea.sflag [#allocation8], 1
    %651 = vsyncpa %s650, 1

</llo_original>
